<compile_context>
chip_gen: v5e
topology: v5e:2x2
jax: 0.10.0
libtpu: 0.0.40
codegen_flags: <defaults>
</compile_context>

<pallas_src>
import functools

import jax
import jax.numpy as jnp
from jax.experimental import pallas as pl
from jax.experimental.pallas import tpu as pltpu


def _round_up(x, m):
    return (x + m - 1) // m * m


def _embed_kernel(x_ref, w1, b1, w2, b2, w3, b3, w4, b4, out_ref, acc_ref, *,
                  inv_s):
    s = pl.program_id(1)

    @pl.when(s == 0)
    def _():
        acc_ref[...] = jnp.zeros_like(acc_ref)

    # Partial sum over this sequence tile (f32 accumulation of bf16 inputs).
    acc_ref[...] += jnp.sum(x_ref[...].astype(jnp.float32), axis=1)

    @pl.when(s == pl.num_programs(1) - 1)
    def _():
        h = acc_ref[...] * inv_s  # mean over the full (unpadded) sequence

        def layer(h, w_ref, b_ref, relu):
            # bf16 x bf16 on the MXU, f32 accumulation, f32 bias add.
            y = jnp.dot(h.astype(w_ref.dtype), w_ref[...],
                        preferred_element_type=jnp.float32) + b_ref[...]
            return jnp.maximum(y, 0.0) if relu else y

        h = layer(h, w1, b1, True)
        h = layer(h, w2, b2, True)
        h = layer(h, w3, b3, True)
        h = layer(h, w4, b4, False)
        out_ref[...] = h.astype(out_ref.dtype)


@jax.jit
def simple_embedding_net(x, params):
    """x: [B, S, D_in] last_hidden_state (f32 or bf16); params: dict of W/b."""
    B, S, D_in = x.shape

    # Weights in bf16 (halves HBM weight traffic); biases stay f32 (tiny).
    w1 = params["w1"].astype(jnp.bfloat16)
    w2 = params["w2"].astype(jnp.bfloat16)
    w3 = params["w3"].astype(jnp.bfloat16)
    w4 = params["w4"].astype(jnp.bfloat16)
    b1 = params["b1"].astype(jnp.float32)
    b2 = params["b2"].astype(jnp.float32)
    b3 = params["b3"].astype(jnp.float32)
    b4 = params["b4"].astype(jnp.float32)
    D_out = w4.shape[1]
    x_bytes = x.dtype.itemsize

    # Batch tile (MXU M dim), padded to a sublane multiple.
    TB = min(128, _round_up(B, 8))
    B_pad = _round_up(B, TB)

    # Sequence tile: keep the x block around ~4 MiB so double-buffering fits
    # comfortably even in v7x's 64 MiB VMEM.
    max_ts = max(8, (4 * 1024 * 1024) // (TB * D_in * x_bytes))
    if S <= max_ts:
        TS, S_pad = S, S
    else:
        TS = max(8, (max_ts // 8) * 8)
        S_pad = _round_up(S, TS)

    if (B_pad, S_pad) != (B, S):
        # Zero padding is exact: padded rows/positions add 0 to the sum and
        # the mean still divides by the original S.
        x = jnp.pad(x, ((0, B_pad - B), (0, S_pad - S), (0, 0)))

    grid = (B_pad // TB, S_pad // TS)

    def resident(a):  # whole array, VMEM-resident across all grid steps
        return pl.BlockSpec(a.shape, lambda i, s: (0,) * a.ndim)

    H1, H2, H3 = w1.shape[1], w2.shape[1], w3.shape[1]
    flops = (2 * B_pad * (D_in * H1 + H1 * H2 + H2 * H3 + H3 * D_out)
             + B_pad * S_pad * D_in)
    bytes_accessed = (
        B_pad * S_pad * D_in * x_bytes
        + sum(int(w.size) * w.dtype.itemsize for w in (w1, w2, w3, w4))
        + sum(int(b.size) * b.dtype.itemsize for b in (b1, b2, b3, b4))
        + B_pad * D_out * 4)

    out = pl.pallas_call(
        functools.partial(_embed_kernel, inv_s=1.0 / S),
        out_shape=jax.ShapeDtypeStruct((B_pad, D_out), jnp.float32),
        grid_spec=pltpu.PrefetchScalarGridSpec(
            num_scalar_prefetch=0,
            grid=grid,
            in_specs=[
                pl.BlockSpec((TB, TS, D_in), lambda i, s: (i, s, 0)),
                resident(w1), resident(b1),
                resident(w2), resident(b2),
                resident(w3), resident(b3),
                resident(w4), resident(b4),
            ],
            out_specs=pl.BlockSpec((TB, D_out), lambda i, s: (i, 0)),
            scratch_shapes=[pltpu.VMEM((TB, D_in), jnp.float32)],
        ),
        compiler_params=pltpu.CompilerParams(
            dimension_semantics=("parallel", "arbitrary"),
            vmem_limit_bytes=32 * 1024 * 1024,
        ),
        cost_estimate=pl.CostEstimate(
            flops=int(flops),
            transcendentals=0,
            bytes_accessed=int(bytes_accessed),
        ),
    )(x, w1, b1, w2, b2, w3, b3, w4, b4)

    return out[:B]


def init_params(key, input_dim=768, embed_dim=768, num_hidden=512):
    """Deterministic synthetic init (shapes match nn.Linear layers of self.fc).

    Weights stored as [in_features, out_features] (W^T of nn.Linear.weight),
    biases as [1, out_features].
    """
    ks = jax.random.split(key, 8)

    def lin(kw, kb, fan_in, fan_out):
        bound = 1.0 / jnp.sqrt(fan_in)
        w = jax.random.uniform(kw, (fan_in, fan_out), jnp.float32, -bound, bound)
        b = jax.random.uniform(kb, (1, fan_out), jnp.float32, -bound, bound)
        return w, b

    w1, b1 = lin(ks[0], ks[1], input_dim, num_hidden)
    w2, b2 = lin(ks[2], ks[3], num_hidden, num_hidden)
    w3, b3 = lin(ks[4], ks[5], num_hidden, num_hidden)
    w4, b4 = lin(ks[6], ks[7], num_hidden, embed_dim)
    return dict(w1=w1, b1=b1, w2=w2, b2=b2, w3=w3, b3=b3, w4=w4, b4=b4)


def reference(x, p):
    """Pure-JAX reference with the same bf16 weight/activation quantization."""
    f32, bf16 = jnp.float32, jnp.bfloat16
    h = jnp.sum(x.astype(f32), axis=1) * (1.0 / x.shape[1])

    def layer(h, w, b, relu):
        y = (h.astype(bf16).astype(f32) @ w.astype(bf16).astype(f32)
             ) + b.astype(f32)
        return jnp.maximum(y, 0.0) if relu else y

    h = layer(h, p["w1"], p["b1"], True)
    h = layer(h, p["w2"], p["b2"], True)
    h = layer(h, p["w3"], p["b3"], True)
    return layer(h, p["w4"], p["b4"], False)


if __name__ == "__main__":
    B, S = 2, 8                       # batch, sequence length
    input_dim, embed_dim, num_hidden = 768, 768, 512

    key = jax.random.PRNGKey(0)
    kx, kp = jax.random.split(key)
    # Synthetic `last_hidden_state` from the frozen lm, kept in bf16 as BERT
    # activations typically are (halves the x DMA).
    x = jax.random.normal(kx, (B, S, input_dim), dtype=jnp.float32)
    x = x.astype(jnp.bfloat16)
    params = init_params(kp, input_dim, embed_dim, num_hidden)

    out = simple_embedding_net(x, params)
    out = jax.block_until_ready(out)

    ref = reference(x, params)
    assert out.shape == (B, embed_dim), out.shape
    err = jnp.max(jnp.abs(out - ref))
    assert jnp.allclose(out, ref, atol=1e-3, rtol=1e-3), f"mismatch, max|d|={err}"

    print("KERNEL_OK")
</pallas_src>

<mosaic_0001>
module attributes {stable_mosaic.version = 11 : i64} {
  func.func @_embed_kernel(%arg0: i32, %arg1: i32, %arg2: memref<8x8x768xbf16, #tpu.memory_space<vmem>>, %arg3: memref<768x512xbf16, #tpu.memory_space<vmem>>, %arg4: memref<1x512xf32, #tpu.memory_space<vmem>>, %arg5: memref<512x512xbf16, #tpu.memory_space<vmem>>, %arg6: memref<1x512xf32, #tpu.memory_space<vmem>>, %arg7: memref<512x512xbf16, #tpu.memory_space<vmem>>, %arg8: memref<1x512xf32, #tpu.memory_space<vmem>>, %arg9: memref<512x768xbf16, #tpu.memory_space<vmem>>, %arg10: memref<1x768xf32, #tpu.memory_space<vmem>>, %arg11: memref<8x768xf32, #tpu.memory_space<vmem>>, %arg12: memref<8x768xf32, #tpu.memory_space<vmem>>) attributes {dimension_semantics = [#tpu.dimension_semantics<parallel>, #tpu.dimension_semantics<arbitrary>], iteration_bounds = array<i64: 1, 1>, scalar_prefetch = 0 : i64, scratch_operands = 1 : i64, tpu.core_type = #tpu.core_type<tc>, window_params = [{transform_indices = @transform_0, window_bounds = array<i64: 8, 8, 768>}, {pipeline_mode = #tpu.pipeline_mode<synchronous>, transform_indices = @transform_1, window_bounds = array<i64: 768, 512>}, {pipeline_mode = #tpu.pipeline_mode<synchronous>, transform_indices = @transform_2, window_bounds = array<i64: 1, 512>}, {pipeline_mode = #tpu.pipeline_mode<synchronous>, transform_indices = @transform_3, window_bounds = array<i64: 512, 512>}, {pipeline_mode = #tpu.pipeline_mode<synchronous>, transform_indices = @transform_4, window_bounds = array<i64: 1, 512>}, {pipeline_mode = #tpu.pipeline_mode<synchronous>, transform_indices = @transform_5, window_bounds = array<i64: 512, 512>}, {pipeline_mode = #tpu.pipeline_mode<synchronous>, transform_indices = @transform_6, window_bounds = array<i64: 1, 512>}, {pipeline_mode = #tpu.pipeline_mode<synchronous>, transform_indices = @transform_7, window_bounds = array<i64: 512, 768>}, {pipeline_mode = #tpu.pipeline_mode<synchronous>, transform_indices = @transform_8, window_bounds = array<i64: 1, 768>}, {transform_indices = @transform_9, window_bounds = array<i64: 8, 768>}]} {
    %c0_i32 = arith.constant 0 : i32
    %0 = arith.cmpi eq, %arg1, %c0_i32 : i32
    %1 = arith.extui %0 : i1 to i32
    %c0_i32_0 = arith.constant 0 : i32
    %2 = arith.cmpi ne, %1, %c0_i32_0 : i32
    scf.if %2 {
      %cst_9 = arith.constant 0.000000e+00 : f32
      %12 = vector.broadcast %cst_9 : f32 to vector<8x768xf32>
      %c0_10 = arith.constant 0 : index
      %c0_11 = arith.constant 0 : index
      %13 = vector.load %arg12[%c0_10, %c0_11] : memref<8x768xf32, #tpu.memory_space<vmem>>, vector<8x768xf32>
      tpu.vector_store %arg12[%c0_10, %c0_11], %12 {strides = array<i32>} : memref<8x768xf32, #tpu.memory_space<vmem>>, vector<8x768xf32>,
    } else {
    }
    %c0 = arith.constant 0 : index
    %c0_1 = arith.constant 0 : index
    %3 = vector.load %arg12[%c0, %c0_1] : memref<8x768xf32, #tpu.memory_space<vmem>>, vector<8x768xf32>
    %c0_2 = arith.constant 0 : index
    %c0_3 = arith.constant 0 : index
    %c0_4 = arith.constant 0 : index
    %4 = vector.load %arg2[%c0_2, %c0_3, %c0_4] : memref<8x8x768xbf16, #tpu.memory_space<vmem>>, vector<8x8x768xbf16>
    %5 = arith.extf %4 : vector<8x8x768xbf16> to vector<8x8x768xf32>
    %cst = arith.constant dense<0.000000e+00> : vector<8x768xf32>
    %6 = vector.multi_reduction <add>, %5, %cst [1] : vector<8x8x768xf32> to vector<8x768xf32>
    %7 = arith.addf %3, %6 : vector<8x768xf32>
    %c0_5 = arith.constant 0 : index
    %c0_6 = arith.constant 0 : index
    %8 = vector.load %arg12[%c0_5, %c0_6] : memref<8x768xf32, #tpu.memory_space<vmem>>, vector<8x768xf32>
    tpu.vector_store %arg12[%c0_5, %c0_6], %7 {strides = array<i32>} : memref<8x768xf32, #tpu.memory_space<vmem>>, vector<8x768xf32>,
    %c0_i32_7 = arith.constant 0 : i32
    %9 = arith.cmpi eq, %arg1, %c0_i32_7 : i32
    %10 = arith.extui %9 : i1 to i32
    %c0_i32_8 = arith.constant 0 : i32
    %11 = arith.cmpi ne, %10, %c0_i32_8 : i32
    scf.if %11 {
      %c0_9 = arith.constant 0 : index
      %c0_10 = arith.constant 0 : index
      %12 = vector.load %arg12[%c0_9, %c0_10] : memref<8x768xf32, #tpu.memory_space<vmem>>, vector<8x768xf32>
      %cst_11 = arith.constant 1.250000e-01 : f32
      %13 = vector.broadcast %cst_11 : f32 to vector<8x768xf32>
      %14 = arith.mulf %12, %13 : vector<8x768xf32>
      %15 = arith.truncf %14 : vector<8x768xf32> to vector<8x768xbf16>
      %c0_12 = arith.constant 0 : index
      %c0_13 = arith.constant 0 : index
      %16 = vector.load %arg3[%c0_12, %c0_13] : memref<768x512xbf16, #tpu.memory_space<vmem>>, vector<768x512xbf16>
      %cst_14 = arith.constant dense<0.000000e+00> : vector<8x512xf32>
      %17 = tpu.matmul %15, %16, %cst_14 {dimension_numbers = #tpu.dot_dimension_numbers<[1], [0], [0], [1], [0, 0, 1, 1], [], []>} : vector<8x768xbf16>, vector<768x512xbf16>, vector<8x512xf32> -> vector<8x512xf32>
      %c0_15 = arith.constant 0 : index
      %c0_16 = arith.constant 0 : index
      %18 = vector.load %arg4[%c0_15, %c0_16] : memref<1x512xf32, #tpu.memory_space<vmem>>, vector<1x512xf32>
      %19 = vector.broadcast %18 : vector<1x512xf32> to vector<8x512xf32>
      %20 = arith.addf %17, %19 : vector<8x512xf32>
      %cst_17 = arith.constant 0.000000e+00 : f32
      %21 = vector.broadcast %cst_17 : f32 to vector<8x512xf32>
      %22 = arith.maximumf %20, %21 : vector<8x512xf32>
      %23 = arith.truncf %22 : vector<8x512xf32> to vector<8x512xbf16>
      %c0_18 = arith.constant 0 : index
      %c0_19 = arith.constant 0 : index
      %24 = vector.load %arg5[%c0_18, %c0_19] : memref<512x512xbf16, #tpu.memory_space<vmem>>, vector<512x512xbf16>
      %cst_20 = arith.constant dense<0.000000e+00> : vector<8x512xf32>
      %25 = tpu.matmul %23, %24, %cst_20 {dimension_numbers = #tpu.dot_dimension_numbers<[1], [0], [0], [1], [0, 0, 1, 1], [], []>} : vector<8x512xbf16>, vector<512x512xbf16>, vector<8x512xf32> -> vector<8x512xf32>
      %c0_21 = arith.constant 0 : index
      %c0_22 = arith.constant 0 : index
      %26 = vector.load %arg6[%c0_21, %c0_22] : memref<1x512xf32, #tpu.memory_space<vmem>>, vector<1x512xf32>
      %27 = vector.broadcast %26 : vector<1x512xf32> to vector<8x512xf32>
      %28 = arith.addf %25, %27 : vector<8x512xf32>
      %cst_23 = arith.constant 0.000000e+00 : f32
      %29 = vector.broadcast %cst_23 : f32 to vector<8x512xf32>
      %30 = arith.maximumf %28, %29 : vector<8x512xf32>
      %31 = arith.truncf %30 : vector<8x512xf32> to vector<8x512xbf16>
      %c0_24 = arith.constant 0 : index
      %c0_25 = arith.constant 0 : index
      %32 = vector.load %arg7[%c0_24, %c0_25] : memref<512x512xbf16, #tpu.memory_space<vmem>>, vector<512x512xbf16>
      %cst_26 = arith.constant dense<0.000000e+00> : vector<8x512xf32>
      %33 = tpu.matmul %31, %32, %cst_26 {dimension_numbers = #tpu.dot_dimension_numbers<[1], [0], [0], [1], [0, 0, 1, 1], [], []>} : vector<8x512xbf16>, vector<512x512xbf16>, vector<8x512xf32> -> vector<8x512xf32>
      %c0_27 = arith.constant 0 : index
      %c0_28 = arith.constant 0 : index
      %34 = vector.load %arg8[%c0_27, %c0_28] : memref<1x512xf32, #tpu.memory_space<vmem>>, vector<1x512xf32>
      %35 = vector.broadcast %34 : vector<1x512xf32> to vector<8x512xf32>
      %36 = arith.addf %33, %35 : vector<8x512xf32>
      %cst_29 = arith.constant 0.000000e+00 : f32
      %37 = vector.broadcast %cst_29 : f32 to vector<8x512xf32>
      %38 = arith.maximumf %36, %37 : vector<8x512xf32>
      %39 = arith.truncf %38 : vector<8x512xf32> to vector<8x512xbf16>
      %c0_30 = arith.constant 0 : index
      %c0_31 = arith.constant 0 : index
      %40 = vector.load %arg9[%c0_30, %c0_31] : memref<512x768xbf16, #tpu.memory_space<vmem>>, vector<512x768xbf16>
      %cst_32 = arith.constant dense<0.000000e+00> : vector<8x768xf32>
      %41 = tpu.matmul %39, %40, %cst_32 {dimension_numbers = #tpu.dot_dimension_numbers<[1], [0], [0], [1], [0, 0, 1, 1], [], []>} : vector<8x512xbf16>, vector<512x768xbf16>, vector<8x768xf32> -> vector<8x768xf32>
      %c0_33 = arith.constant 0 : index
      %c0_34 = arith.constant 0 : index
      %42 = vector.load %arg10[%c0_33, %c0_34] : memref<1x768xf32, #tpu.memory_space<vmem>>, vector<1x768xf32>
      %43 = vector.broadcast %42 : vector<1x768xf32> to vector<8x768xf32>
      %44 = arith.addf %41, %43 : vector<8x768xf32>
      %c0_35 = arith.constant 0 : index
      %c0_36 = arith.constant 0 : index
      %45 = vector.load %arg11[%c0_35, %c0_36] : memref<8x768xf32, #tpu.memory_space<vmem>>, vector<8x768xf32>
      tpu.vector_store %arg11[%c0_35, %c0_36], %44 {strides = array<i32>} : memref<8x768xf32, #tpu.memory_space<vmem>>, vector<8x768xf32>,
    } else {
    }
    return
  }
  func.func @transform_0(%arg0: i32, %arg1: i32) -> (i32, i32, i32) {
    %c0_i32 = arith.constant 0 : i32
    %c0_i32_0 = arith.constant 0 : i32
    return %arg0, %arg1, %c0_i32 : i32, i32, i32
  }
  func.func @transform_1(%arg0: i32, %arg1: i32) -> (i32, i32) {
    %c0_i32 = arith.constant 0 : i32
    %c0_i32_0 = arith.constant 0 : i32
    %c0_i32_1 = arith.constant 0 : i32
    return %c0_i32, %c0_i32_0 : i32, i32
  }
  func.func @transform_2(%arg0: i32, %arg1: i32) -> (i32, i32) {
    %c0_i32 = arith.constant 0 : i32
    %c0_i32_0 = arith.constant 0 : i32
    %c0_i32_1 = arith.constant 0 : i32
    return %c0_i32, %c0_i32_0 : i32, i32
  }
  func.func @transform_3(%arg0: i32, %arg1: i32) -> (i32, i32) {
    %c0_i32 = arith.constant 0 : i32
    %c0_i32_0 = arith.constant 0 : i32
    %c0_i32_1 = arith.constant 0 : i32
    return %c0_i32, %c0_i32_0 : i32, i32
  }
  func.func @transform_4(%arg0: i32, %arg1: i32) -> (i32, i32) {
    %c0_i32 = arith.constant 0 : i32
    %c0_i32_0 = arith.constant 0 : i32
    %c0_i32_1 = arith.constant 0 : i32
    return %c0_i32, %c0_i32_0 : i32, i32
  }
  func.func @transform_5(%arg0: i32, %arg1: i32) -> (i32, i32) {
    %c0_i32 = arith.constant 0 : i32
    %c0_i32_0 = arith.constant 0 : i32
    %c0_i32_1 = arith.constant 0 : i32
    return %c0_i32, %c0_i32_0 : i32, i32
  }
  func.func @transform_6(%arg0: i32, %arg1: i32) -> (i32, i32) {
    %c0_i32 = arith.constant 0 : i32
    %c0_i32_0 = arith.constant 0 : i32
    %c0_i32_1 = arith.constant 0 : i32
    return %c0_i32, %c0_i32_0 : i32, i32
  }
  func.func @transform_7(%arg0: i32, %arg1: i32) -> (i32, i32) {
    %c0_i32 = arith.constant 0 : i32
    %c0_i32_0 = arith.constant 0 : i32
    %c0_i32_1 = arith.constant 0 : i32
    return %c0_i32, %c0_i32_0 : i32, i32
  }
  func.func @transform_8(%arg0: i32, %arg1: i32) -> (i32, i32) {
    %c0_i32 = arith.constant 0 : i32
    %c0_i32_0 = arith.constant 0 : i32
    %c0_i32_1 = arith.constant 0 : i32
    return %c0_i32, %c0_i32_0 : i32, i32
  }
  func.func @transform_9(%arg0: i32, %arg1: i32) -> (i32, i32) {
    %c0_i32 = arith.constant 0 : i32
    %c0_i32_0 = arith.constant 0 : i32
    return %arg0, %c0_i32 : i32, i32
  }
}

</mosaic_0001>

<llo_original>
// kernel: simple_embedding_net.1
$region0: #{simple_embedding_net.1}
  #allocation0 [shape = 'u32[]', space=smem, size = 0x4, offset = 0x4, fixed_abs, tag = 'smem constant byte address 0x4 - core index']
  #allocation1 [shape = 'u32[72,128]{1,0:T(1,128)}', space=vmem, size = 0x9000, scoped, tag = 'internal scratch']
  #allocation2 [shape = 'f32[8,768]{1,0:T(8,128)}', space=vmem, size = 0x6000, scoped, tag = 'scratch operand']
  %s0 = inlined_call_operand.vmem [shape: bf16[8,8,768], index: 0, kind: input, shape index: {}]
  %s1 = inlined_call_operand.vmem [shape: bf16[768,512], index: 1, kind: input, shape index: {}]
  %s2 = inlined_call_operand.vmem [shape: f32[1,512], index: 2, kind: input, shape index: {}]
  %s3 = inlined_call_operand.vmem [shape: bf16[512,512], index: 3, kind: input, shape index: {}]
  %s4 = inlined_call_operand.vmem [shape: f32[1,512], index: 4, kind: input, shape index: {}]
  %s5 = inlined_call_operand.vmem [shape: bf16[512,512], index: 5, kind: input, shape index: {}]
  %s6 = inlined_call_operand.vmem [shape: f32[1,512], index: 6, kind: input, shape index: {}]
  %s7 = inlined_call_operand.vmem [shape: bf16[512,768], index: 7, kind: input, shape index: {}]
  %s8 = inlined_call_operand.vmem [shape: f32[1,768], index: 8, kind: input, shape index: {}]
  %s9 = inlined_call_operand.vmem [shape: f32[8,768], index: 9, kind: output, shape index: {}]
  %s10 = sld [smem:[#allocation0]]
  $region54: #{simple_embedding_net.1} parent=0
    _
  %s12 = ssub.s32 1, %s10
  %s13 = scalar_select 0, %s12, %s10
  // Predicated region
  $region2: #{simple_embedding_net.1} parent=0 // pred_check
    _
  $region3: #{simple_embedding_net.1} parent=0 // pred_check_branch
    %15 = sbr.rel (0) target = $region5
  $region4: #{simple_embedding_net.1} parent=0 // pred_region
    _
  $region5: #{simple_embedding_net.1} parent=0 // pred_fallthru
    _
  // Predicated region
  $region6: #{simple_embedding_net.1} parent=0 // pred_check
    _
  $region7: #{simple_embedding_net.1} parent=0 // pred_check_branch
    %17 = sbr.rel (0) target = $region9
  $region8: #{simple_embedding_net.1} parent=0 // pred_region
    _
  $region9: #{simple_embedding_net.1} parent=0 // pred_fallthru
    _
  // Predicated region
  $region10: #{simple_embedding_net.1} parent=0 // pred_check
    _
  $region11: #{simple_embedding_net.1} parent=0 // pred_check_branch
    %19 = sbr.rel (0) target = $region13
  $region12: #{simple_embedding_net.1} parent=0 // pred_region
    _
  $region13: #{simple_embedding_net.1} parent=0 // pred_fallthru
    _
  // Predicated region
  $region14: #{simple_embedding_net.1} parent=0 // pred_check
    _
  $region15: #{simple_embedding_net.1} parent=0 // pred_check_branch
    %21 = sbr.rel (0) target = $region17
  $region16: #{simple_embedding_net.1} parent=0 // pred_region
    _
  $region17: #{simple_embedding_net.1} parent=0 // pred_fallthru
    _
  // Predicated region
  $region18: #{simple_embedding_net.1} parent=0 // pred_check
    _
  $region19: #{simple_embedding_net.1} parent=0 // pred_check_branch
    %23 = sbr.rel (0) target = $region21
  $region20: #{simple_embedding_net.1} parent=0 // pred_region
    _
  $region21: #{simple_embedding_net.1} parent=0 // pred_fallthru
    _
  // Predicated region
  $region22: #{simple_embedding_net.1} parent=0 // pred_check
    _
  $region23: #{simple_embedding_net.1} parent=0 // pred_check_branch
    %25 = sbr.rel (0) target = $region25
  $region24: #{simple_embedding_net.1} parent=0 // pred_region
    _
  $region25: #{simple_embedding_net.1} parent=0 // pred_fallthru
    _
  // Predicated region
  $region26: #{simple_embedding_net.1} parent=0 // pred_check
    _
  $region27: #{simple_embedding_net.1} parent=0 // pred_check_branch
    %27 = sbr.rel (0) target = $region29
  $region28: #{simple_embedding_net.1} parent=0 // pred_region
    _
  $region29: #{simple_embedding_net.1} parent=0 // pred_fallthru
    _
  // Predicated region
  $region30: #{simple_embedding_net.1} parent=0 // pred_check
    _
  $region31: #{simple_embedding_net.1} parent=0 // pred_check_branch
    %29 = sbr.rel (0) target = $region33
  $region32: #{simple_embedding_net.1} parent=0 // pred_region
    _
  $region33: #{simple_embedding_net.1} parent=0 // pred_fallthru
    _
  // Predicated region
  $region34: #{simple_embedding_net.1} parent=0 // pred_check
    _
  $region35: #{simple_embedding_net.1} parent=0 // pred_check_branch
    %31 = sbr.rel (0) target = $region37
  $region36: #{simple_embedding_net.1} parent=0 // pred_region
    _
  $region37: #{simple_embedding_net.1} parent=0 // pred_fallthru
    _
  %p32 = scmp.eq.s32.totalorder 0, 0
  // Predicated region
  $region38: #{simple_embedding_net.1} parent=0 // pred_check
    %p33 = pneg %p32
  $region39: #{simple_embedding_net.1} parent=0 // pred_check_branch
    %35 = sbr.rel (%p33) target = $region41
  $region40: #{simple_embedding_net.1} parent=0 // pred_region
    %36 = vst [vmem:[#allocation2] sm:$0xff] 0.0
    %37 = vst [vmem:[#allocation2 + $0x8] sm:$0xff] 0.0
    %38 = vst [vmem:[#allocation2 + $0x10] sm:$0xff] 0.0
    %39 = vst [vmem:[#allocation2 + $0x18] sm:$0xff] 0.0
    %40 = vst [vmem:[#allocation2 + $0x20] sm:$0xff] 0.0
    %41 = vst [vmem:[#allocation2 + $0x28] sm:$0xff] 0.0
  $region41: #{simple_embedding_net.1} parent=0 // pred_fallthru
    _
  %v42 = vld [vmem:[#allocation2] sm:$0xff]
  %v43 = vld [vmem:[#allocation2 + $0x8] sm:$0xff]
  %v44 = vld [vmem:[#allocation2 + $0x10] sm:$0xff]
  %v45 = vld [vmem:[#allocation2 + $0x18] sm:$0xff]
  %v46 = vld [vmem:[#allocation2 + $0x20] sm:$0xff]
  %v47 = vld [vmem:[#allocation2 + $0x28] sm:$0xff]
  %v48 = vld [vmem:[%s0] sm:$0xff]
  %v49 = vld [vmem:[%s0 + $0x8] sm:$0xff]
  %v50 = vld [vmem:[%s0 + $0x10] sm:$0xff]
  %v51 = vld [vmem:[%s0 + $0x18] sm:$0xff]
  %v52 = vld [vmem:[%s0 + $0x20] sm:$0xff]
  %v53 = vld [vmem:[%s0 + $0x28] sm:$0xff]
  %v54 = vld [vmem:[%s0 + $0x30] sm:$0xff]
  %v55 = vld [vmem:[%s0 + $0x38] sm:$0xff]
  %v56 = vld [vmem:[%s0 + $0x40] sm:$0xff]
  %v57 = vld [vmem:[%s0 + $0x48] sm:$0xff]
  %v58 = vld [vmem:[%s0 + $0x50] sm:$0xff]
  %v59 = vld [vmem:[%s0 + $0x58] sm:$0xff]
  %v60 = vld [vmem:[%s0 + $0x60] sm:$0xff]
  %v61 = vld [vmem:[%s0 + $0x68] sm:$0xff]
  %v62 = vld [vmem:[%s0 + $0x70] sm:$0xff]
  %v63 = vld [vmem:[%s0 + $0x78] sm:$0xff]
  %v64 = vld [vmem:[%s0 + $0x80] sm:$0xff]
  %v65 = vld [vmem:[%s0 + $0x88] sm:$0xff]
  %v66 = vld [vmem:[%s0 + $0x90] sm:$0xff]
  %v67 = vld [vmem:[%s0 + $0x98] sm:$0xff]
  %v68 = vld [vmem:[%s0 + $0xa0] sm:$0xff]
  %v69 = vld [vmem:[%s0 + $0xa8] sm:$0xff]
  %v70 = vld [vmem:[%s0 + $0xb0] sm:$0xff]
  %v71 = vld [vmem:[%s0 + $0xb8] sm:$0xff]
  %v72 = vunpack.c.l.bf16 %v48
  %v73 = vunpack.c.h.bf16 %v48
  %v74 = vunpack.c.l.bf16 %v49
  %v75 = vunpack.c.h.bf16 %v49
  %v76 = vunpack.c.l.bf16 %v50
  %v77 = vunpack.c.h.bf16 %v50
  %v78 = vunpack.c.l.bf16 %v51
  %v79 = vunpack.c.h.bf16 %v51
  %v80 = vunpack.c.l.bf16 %v52
  %v81 = vunpack.c.h.bf16 %v52
  %v82 = vunpack.c.l.bf16 %v53
  %v83 = vunpack.c.h.bf16 %v53
  %v84 = vunpack.c.l.bf16 %v54
  %v85 = vunpack.c.h.bf16 %v54
  %v86 = vunpack.c.l.bf16 %v55
  %v87 = vunpack.c.h.bf16 %v55
  %v88 = vunpack.c.l.bf16 %v56
  %v89 = vunpack.c.h.bf16 %v56
  %v90 = vunpack.c.l.bf16 %v57
  %v91 = vunpack.c.h.bf16 %v57
  %v92 = vunpack.c.l.bf16 %v58
  %v93 = vunpack.c.h.bf16 %v58
  %v94 = vunpack.c.l.bf16 %v59
  %v95 = vunpack.c.h.bf16 %v59
  %v96 = vunpack.c.l.bf16 %v60
  %v97 = vunpack.c.h.bf16 %v60
  %v98 = vunpack.c.l.bf16 %v61
  %v99 = vunpack.c.h.bf16 %v61
  %v100 = vunpack.c.l.bf16 %v62
  %v101 = vunpack.c.h.bf16 %v62
  %v102 = vunpack.c.l.bf16 %v63
  %v103 = vunpack.c.h.bf16 %v63
  %v104 = vunpack.c.l.bf16 %v64
  %v105 = vunpack.c.h.bf16 %v64
  %v106 = vunpack.c.l.bf16 %v65
  %v107 = vunpack.c.h.bf16 %v65
  %v108 = vunpack.c.l.bf16 %v66
  %v109 = vunpack.c.h.bf16 %v66
  %v110 = vunpack.c.l.bf16 %v67
  %v111 = vunpack.c.h.bf16 %v67
  %v112 = vunpack.c.l.bf16 %v68
  %v113 = vunpack.c.h.bf16 %v68
  %v114 = vunpack.c.l.bf16 %v69
  %v115 = vunpack.c.h.bf16 %v69
  %v116 = vunpack.c.l.bf16 %v70
  %v117 = vunpack.c.h.bf16 %v70
  %v118 = vunpack.c.l.bf16 %v71
  %v119 = vunpack.c.h.bf16 %v71
  %v120 = vrot.slane %v72, 4
  %v121 = vadd.f32 %v72, %v120
  %v122 = vrot.slane %v121, 2
  %v123 = vadd.f32 %v121, %v122
  %v124 = vrot.slane %v123, 1
  %v125 = vadd.f32 %v123, %v124
  %v126 = vrot.slane %v73, 4
  %v127 = vadd.f32 %v73, %v126
  %v128 = vrot.slane %v127, 2
  %v129 = vadd.f32 %v127, %v128
  %v130 = vrot.slane %v129, 1
  %v131 = vadd.f32 %v129, %v130
  %v132 = vrot.slane %v74, 4
  %v133 = vadd.f32 %v74, %v132
  %v134 = vrot.slane %v133, 2
  %v135 = vadd.f32 %v133, %v134
  %v136 = vrot.slane %v135, 1
  %v137 = vadd.f32 %v135, %v136
  %v138 = vrot.slane %v75, 4
  %v139 = vadd.f32 %v75, %v138
  %v140 = vrot.slane %v139, 2
  %v141 = vadd.f32 %v139, %v140
  %v142 = vrot.slane %v141, 1
  %v143 = vadd.f32 %v141, %v142
  %v144 = vrot.slane %v76, 4
  %v145 = vadd.f32 %v76, %v144
  %v146 = vrot.slane %v145, 2
  %v147 = vadd.f32 %v145, %v146
  %v148 = vrot.slane %v147, 1
  %v149 = vadd.f32 %v147, %v148
  %v150 = vrot.slane %v77, 4
  %v151 = vadd.f32 %v77, %v150
  %v152 = vrot.slane %v151, 2
  %v153 = vadd.f32 %v151, %v152
  %v154 = vrot.slane %v153, 1
  %v155 = vadd.f32 %v153, %v154
  %v156 = vrot.slane %v78, 4
  %v157 = vadd.f32 %v78, %v156
  %v158 = vrot.slane %v157, 2
  %v159 = vadd.f32 %v157, %v158
  %v160 = vrot.slane %v159, 1
  %v161 = vadd.f32 %v159, %v160
  %v162 = vrot.slane %v79, 4
  %v163 = vadd.f32 %v79, %v162
  %v164 = vrot.slane %v163, 2
  %v165 = vadd.f32 %v163, %v164
  %v166 = vrot.slane %v165, 1
  %v167 = vadd.f32 %v165, %v166
  %v168 = vrot.slane %v80, 4
  %v169 = vadd.f32 %v80, %v168
  %v170 = vrot.slane %v169, 2
  %v171 = vadd.f32 %v169, %v170
  %v172 = vrot.slane %v171, 1
  %v173 = vadd.f32 %v171, %v172
  %v174 = vrot.slane %v81, 4
  %v175 = vadd.f32 %v81, %v174
  %v176 = vrot.slane %v175, 2
  %v177 = vadd.f32 %v175, %v176
  %v178 = vrot.slane %v177, 1
  %v179 = vadd.f32 %v177, %v178
  %v180 = vrot.slane %v82, 4
  %v181 = vadd.f32 %v82, %v180
  %v182 = vrot.slane %v181, 2
  %v183 = vadd.f32 %v181, %v182
  %v184 = vrot.slane %v183, 1
  %v185 = vadd.f32 %v183, %v184
  %v186 = vrot.slane %v83, 4
  %v187 = vadd.f32 %v83, %v186
  %v188 = vrot.slane %v187, 2
  %v189 = vadd.f32 %v187, %v188
  %v190 = vrot.slane %v189, 1
  %v191 = vadd.f32 %v189, %v190
  %v192 = vrot.slane %v84, 4
  %v193 = vadd.f32 %v84, %v192
  %v194 = vrot.slane %v193, 2
  %v195 = vadd.f32 %v193, %v194
  %v196 = vrot.slane %v195, 1
  %v197 = vadd.f32 %v195, %v196
  %v198 = vrot.slane %v85, 4
  %v199 = vadd.f32 %v85, %v198
  %v200 = vrot.slane %v199, 2
  %v201 = vadd.f32 %v199, %v200
  %v202 = vrot.slane %v201, 1
  %v203 = vadd.f32 %v201, %v202
  %v204 = vrot.slane %v86, 4
  %v205 = vadd.f32 %v86, %v204
  %v206 = vrot.slane %v205, 2
  %v207 = vadd.f32 %v205, %v206
  %v208 = vrot.slane %v207, 1
  %v209 = vadd.f32 %v207, %v208
  %v210 = vrot.slane %v87, 4
  %v211 = vadd.f32 %v87, %v210
  %v212 = vrot.slane %v211, 2
  %v213 = vadd.f32 %v211, %v212
  %v214 = vrot.slane %v213, 1
  %v215 = vadd.f32 %v213, %v214
  %v216 = vrot.slane %v88, 4
  %v217 = vadd.f32 %v88, %v216
  %v218 = vrot.slane %v217, 2
  %v219 = vadd.f32 %v217, %v218
  %v220 = vrot.slane %v219, 1
  %v221 = vadd.f32 %v219, %v220
  %v222 = vrot.slane %v89, 4
  %v223 = vadd.f32 %v89, %v222
  %v224 = vrot.slane %v223, 2
  %v225 = vadd.f32 %v223, %v224
  %v226 = vrot.slane %v225, 1
  %v227 = vadd.f32 %v225, %v226
  %v228 = vrot.slane %v90, 4
  %v229 = vadd.f32 %v90, %v228
  %v230 = vrot.slane %v229, 2
  %v231 = vadd.f32 %v229, %v230
  %v232 = vrot.slane %v231, 1
  %v233 = vadd.f32 %v231, %v232
  %v234 = vrot.slane %v91, 4
  %v235 = vadd.f32 %v91, %v234
  %v236 = vrot.slane %v235, 2
  %v237 = vadd.f32 %v235, %v236
  %v238 = vrot.slane %v237, 1
  %v239 = vadd.f32 %v237, %v238
  %v240 = vrot.slane %v92, 4
  %v241 = vadd.f32 %v92, %v240
  %v242 = vrot.slane %v241, 2
  %v243 = vadd.f32 %v241, %v242
  %v244 = vrot.slane %v243, 1
  %v245 = vadd.f32 %v243, %v244
  %v246 = vrot.slane %v93, 4
  %v247 = vadd.f32 %v93, %v246
  %v248 = vrot.slane %v247, 2
  %v249 = vadd.f32 %v247, %v248
  %v250 = vrot.slane %v249, 1
  %v251 = vadd.f32 %v249, %v250
  %v252 = vrot.slane %v94, 4
  %v253 = vadd.f32 %v94, %v252
  %v254 = vrot.slane %v253, 2
  %v255 = vadd.f32 %v253, %v254
  %v256 = vrot.slane %v255, 1
  %v257 = vadd.f32 %v255, %v256
  %v258 = vrot.slane %v95, 4
  %v259 = vadd.f32 %v95, %v258
  %v260 = vrot.slane %v259, 2
  %v261 = vadd.f32 %v259, %v260
  %v262 = vrot.slane %v261, 1
  %v263 = vadd.f32 %v261, %v262
  %v264 = vrot.slane %v96, 4
  %v265 = vadd.f32 %v96, %v264
  %v266 = vrot.slane %v265, 2
  %v267 = vadd.f32 %v265, %v266
  %v268 = vrot.slane %v267, 1
  %v269 = vadd.f32 %v267, %v268
  %v270 = vrot.slane %v97, 4
  %v271 = vadd.f32 %v97, %v270
  %v272 = vrot.slane %v271, 2
  %v273 = vadd.f32 %v271, %v272
  %v274 = vrot.slane %v273, 1
  %v275 = vadd.f32 %v273, %v274
  %v276 = vrot.slane %v98, 4
  %v277 = vadd.f32 %v98, %v276
  %v278 = vrot.slane %v277, 2
  %v279 = vadd.f32 %v277, %v278
  %v280 = vrot.slane %v279, 1
  %v281 = vadd.f32 %v279, %v280
  %v282 = vrot.slane %v99, 4
  %v283 = vadd.f32 %v99, %v282
  %v284 = vrot.slane %v283, 2
  %v285 = vadd.f32 %v283, %v284
  %v286 = vrot.slane %v285, 1
  %v287 = vadd.f32 %v285, %v286
  %v288 = vrot.slane %v100, 4
  %v289 = vadd.f32 %v100, %v288
  %v290 = vrot.slane %v289, 2
  %v291 = vadd.f32 %v289, %v290
  %v292 = vrot.slane %v291, 1
  %v293 = vadd.f32 %v291, %v292
  %v294 = vrot.slane %v101, 4
  %v295 = vadd.f32 %v101, %v294
  %v296 = vrot.slane %v295, 2
  %v297 = vadd.f32 %v295, %v296
  %v298 = vrot.slane %v297, 1
  %v299 = vadd.f32 %v297, %v298
  %v300 = vrot.slane %v102, 4
  %v301 = vadd.f32 %v102, %v300
  %v302 = vrot.slane %v301, 2
  %v303 = vadd.f32 %v301, %v302
  %v304 = vrot.slane %v303, 1
  %v305 = vadd.f32 %v303, %v304
  %v306 = vrot.slane %v103, 4
  %v307 = vadd.f32 %v103, %v306
  %v308 = vrot.slane %v307, 2
  %v309 = vadd.f32 %v307, %v308
  %v310 = vrot.slane %v309, 1
  %v311 = vadd.f32 %v309, %v310
  %v312 = vrot.slane %v104, 4
  %v313 = vadd.f32 %v104, %v312
  %v314 = vrot.slane %v313, 2
  %v315 = vadd.f32 %v313, %v314
  %v316 = vrot.slane %v315, 1
  %v317 = vadd.f32 %v315, %v316
  %v318 = vrot.slane %v105, 4
  %v319 = vadd.f32 %v105, %v318
  %v320 = vrot.slane %v319, 2
  %v321 = vadd.f32 %v319, %v320
  %v322 = vrot.slane %v321, 1
  %v323 = vadd.f32 %v321, %v322
  %v324 = vrot.slane %v106, 4
  %v325 = vadd.f32 %v106, %v324
  %v326 = vrot.slane %v325, 2
  %v327 = vadd.f32 %v325, %v326
  %v328 = vrot.slane %v327, 1
  %v329 = vadd.f32 %v327, %v328
  %v330 = vrot.slane %v107, 4
  %v331 = vadd.f32 %v107, %v330
  %v332 = vrot.slane %v331, 2
  %v333 = vadd.f32 %v331, %v332
  %v334 = vrot.slane %v333, 1
  %v335 = vadd.f32 %v333, %v334
  %v336 = vrot.slane %v108, 4
  %v337 = vadd.f32 %v108, %v336
  %v338 = vrot.slane %v337, 2
  %v339 = vadd.f32 %v337, %v338
  %v340 = vrot.slane %v339, 1
  %v341 = vadd.f32 %v339, %v340
  %v342 = vrot.slane %v109, 4
  %v343 = vadd.f32 %v109, %v342
  %v344 = vrot.slane %v343, 2
  %v345 = vadd.f32 %v343, %v344
  %v346 = vrot.slane %v345, 1
  %v347 = vadd.f32 %v345, %v346
  %v348 = vrot.slane %v110, 4
  %v349 = vadd.f32 %v110, %v348
  %v350 = vrot.slane %v349, 2
  %v351 = vadd.f32 %v349, %v350
  %v352 = vrot.slane %v351, 1
  %v353 = vadd.f32 %v351, %v352
  %v354 = vrot.slane %v111, 4
  %v355 = vadd.f32 %v111, %v354
  %v356 = vrot.slane %v355, 2
  %v357 = vadd.f32 %v355, %v356
  %v358 = vrot.slane %v357, 1
  %v359 = vadd.f32 %v357, %v358
  %v360 = vrot.slane %v112, 4
  %v361 = vadd.f32 %v112, %v360
  %v362 = vrot.slane %v361, 2
  %v363 = vadd.f32 %v361, %v362
  %v364 = vrot.slane %v363, 1
  %v365 = vadd.f32 %v363, %v364
  %v366 = vrot.slane %v113, 4
  %v367 = vadd.f32 %v113, %v366
  %v368 = vrot.slane %v367, 2
  %v369 = vadd.f32 %v367, %v368
  %v370 = vrot.slane %v369, 1
  %v371 = vadd.f32 %v369, %v370
  %v372 = vrot.slane %v114, 4
  %v373 = vadd.f32 %v114, %v372
  %v374 = vrot.slane %v373, 2
  %v375 = vadd.f32 %v373, %v374
  %v376 = vrot.slane %v375, 1
  %v377 = vadd.f32 %v375, %v376
  %v378 = vrot.slane %v115, 4
  %v379 = vadd.f32 %v115, %v378
  %v380 = vrot.slane %v379, 2
  %v381 = vadd.f32 %v379, %v380
  %v382 = vrot.slane %v381, 1
  %v383 = vadd.f32 %v381, %v382
  %v384 = vrot.slane %v116, 4
  %v385 = vadd.f32 %v116, %v384
  %v386 = vrot.slane %v385, 2
  %v387 = vadd.f32 %v385, %v386
  %v388 = vrot.slane %v387, 1
  %v389 = vadd.f32 %v387, %v388
  %v390 = vrot.slane %v117, 4
  %v391 = vadd.f32 %v117, %v390
  %v392 = vrot.slane %v391, 2
  %v393 = vadd.f32 %v391, %v392
  %v394 = vrot.slane %v393, 1
  %v395 = vadd.f32 %v393, %v394
  %v396 = vrot.slane %v118, 4
  %v397 = vadd.f32 %v118, %v396
  %v398 = vrot.slane %v397, 2
  %v399 = vadd.f32 %v397, %v398
  %v400 = vrot.slane %v399, 1
  %v401 = vadd.f32 %v399, %v400
  %v402 = vrot.slane %v119, 4
  %v403 = vadd.f32 %v119, %v402
  %v404 = vrot.slane %v403, 2
  %v405 = vadd.f32 %v403, %v404
  %v406 = vrot.slane %v405, 1
  %v407 = vadd.f32 %v405, %v406
  %vm456 = vcmask 1041409
  %v457 = vsel %vm456, %v161, %v125
  %vm458 = vcmask 1042434
  %v459 = vsel %vm458, %v197, %v457
  %vm460 = vcmask 1043459
  %v461 = vsel %vm460, %v233, %v459
  %vm462 = vcmask 1044484
  %v463 = vsel %vm462, %v269, %v461
  %vm464 = vcmask 1045509
  %v465 = vsel %vm464, %v305, %v463
  %vm466 = vcmask 1046534
  %v467 = vsel %vm466, %v341, %v465
  %vm468 = vcmask 1047559
  %v469 = vsel %vm468, %v377, %v467
  %v470 = vsel %vm456, %v167, %v131
  %v471 = vsel %vm458, %v203, %v470
  %v472 = vsel %vm460, %v239, %v471
  %v473 = vsel %vm462, %v275, %v472
  %v474 = vsel %vm464, %v311, %v473
  %v475 = vsel %vm466, %v347, %v474
  %v476 = vsel %vm468, %v383, %v475
  %v477 = vsel %vm456, %v173, %v137
  %v478 = vsel %vm458, %v209, %v477
  %v479 = vsel %vm460, %v245, %v478
  %v480 = vsel %vm462, %v281, %v479
  %v481 = vsel %vm464, %v317, %v480
  %v482 = vsel %vm466, %v353, %v481
  %v483 = vsel %vm468, %v389, %v482
  %v484 = vsel %vm456, %v179, %v143
  %v485 = vsel %vm458, %v215, %v484
  %v486 = vsel %vm460, %v251, %v485
  %v487 = vsel %vm462, %v287, %v486
  %v488 = vsel %vm464, %v323, %v487
  %v489 = vsel %vm466, %v359, %v488
  %v490 = vsel %vm468, %v395, %v489
  %v491 = vsel %vm456, %v185, %v149
  %v492 = vsel %vm458, %v221, %v491
  %v493 = vsel %vm460, %v257, %v492
  %v494 = vsel %vm462, %v293, %v493
  %v495 = vsel %vm464, %v329, %v494
  %v496 = vsel %vm466, %v365, %v495
  %v497 = vsel %vm468, %v401, %v496
  %v498 = vsel %vm456, %v191, %v155
  %v499 = vsel %vm458, %v227, %v498
  %v500 = vsel %vm460, %v263, %v499
  %v501 = vsel %vm462, %v299, %v500
  %v502 = vsel %vm464, %v335, %v501
  %v503 = vsel %vm466, %v371, %v502
  %v504 = vsel %vm468, %v407, %v503
  %v511 = vadd.f32 %v42, %v469
  %v512 = vadd.f32 %v43, %v476
  %v513 = vadd.f32 %v44, %v483
  %v514 = vadd.f32 %v45, %v490
  %v515 = vadd.f32 %v46, %v497
  %v516 = vadd.f32 %v47, %v504
  %517 = vst [vmem:[#allocation2] sm:$0xff] %v511
  %518 = vst [vmem:[#allocation2 + $0x8] sm:$0xff] %v512
  %519 = vst [vmem:[#allocation2 + $0x10] sm:$0xff] %v513
  %520 = vst [vmem:[#allocation2 + $0x18] sm:$0xff] %v514
  %521 = vst [vmem:[#allocation2 + $0x20] sm:$0xff] %v515
  %522 = vst [vmem:[#allocation2 + $0x28] sm:$0xff] %v516
  // Predicated region
  $region42: #{simple_embedding_net.1} parent=0 // pred_check
    %p523 = pneg %p32
  $region43: #{simple_embedding_net.1} parent=0 // pred_check_branch
    %525 = sbr.rel (%p523) target = $region45
  $region44: #{simple_embedding_net.1} parent=0 // pred_region
    %v526 = vld [vmem:[#allocation2] sm:$0xff]
    %v527 = vld [vmem:[#allocation2 + $0x8] sm:$0xff]
    %v528 = vld [vmem:[#allocation2 + $0x10] sm:$0xff]
    %v529 = vld [vmem:[#allocation2 + $0x18] sm:$0xff]
    %v530 = vld [vmem:[#allocation2 + $0x20] sm:$0xff]
    %v531 = vld [vmem:[#allocation2 + $0x28] sm:$0xff]
    %v532 = vmul.f32 %v526, 0.125
    %v533 = vmul.f32 %v527, 0.125
    %v534 = vmul.f32 %v528, 0.125
    %v535 = vmul.f32 %v529, 0.125
    %v536 = vmul.f32 %v530, 0.125
    %v537 = vmul.f32 %v531, 0.125
    %v538 = vpack.c.bf16 %v532, %v532
    %v539 = vpack.c.bf16 %v533, %v533
    %v540 = vpack.c.bf16 %v534, %v534
    %v541 = vpack.c.bf16 %v535, %v535
    %v542 = vpack.c.bf16 %v536, %v536
    %v543 = vpack.c.bf16 %v537, %v537
    %v544 = vld [vmem:[%s1] sm:$0xff]
    %v545 = vld [vmem:[%s1 + $0x8] sm:$0xff]
    %v546 = vld [vmem:[%s1 + $0x10] sm:$0xff]
    %v547 = vld [vmem:[%s1 + $0x18] sm:$0xff]
    %v548 = vld [vmem:[%s1 + $0x20] sm:$0xff]
    %v549 = vld [vmem:[%s1 + $0x28] sm:$0xff]
    %v550 = vld [vmem:[%s1 + $0x30] sm:$0xff]
    %v551 = vld [vmem:[%s1 + $0x38] sm:$0xff]
    %v552 = vld [vmem:[%s1 + $0x40] sm:$0xff]
    %v553 = vld [vmem:[%s1 + $0x48] sm:$0xff]
    %v554 = vld [vmem:[%s1 + $0x50] sm:$0xff]
    %v555 = vld [vmem:[%s1 + $0x58] sm:$0xff]
    %v556 = vld [vmem:[%s1 + $0x60] sm:$0xff]
    %v557 = vld [vmem:[%s1 + $0x68] sm:$0xff]
    %v558 = vld [vmem:[%s1 + $0x70] sm:$0xff]
    %v559 = vld [vmem:[%s1 + $0x78] sm:$0xff]
    %v560 = vld [vmem:[%s1 + $0x80] sm:$0xff]
    %v561 = vld [vmem:[%s1 + $0x88] sm:$0xff]
    %v562 = vld [vmem:[%s1 + $0x90] sm:$0xff]
    %v563 = vld [vmem:[%s1 + $0x98] sm:$0xff]
    %v564 = vld [vmem:[%s1 + $0xa0] sm:$0xff]
    %v565 = vld [vmem:[%s1 + $0xa8] sm:$0xff]
    %v566 = vld [vmem:[%s1 + $0xb0] sm:$0xff]
    %v567 = vld [vmem:[%s1 + $0xb8] sm:$0xff]
    %v568 = vld [vmem:[%s1 + $0xc0] sm:$0xff]
    %v569 = vld [vmem:[%s1 + $0xc8] sm:$0xff]
    %v570 = vld [vmem:[%s1 + $0xd0] sm:$0xff]
    %v571 = vld [vmem:[%s1 + $0xd8] sm:$0xff]
    %v572 = vld [vmem:[%s1 + $0xe0] sm:$0xff]
    %v573 = vld [vmem:[%s1 + $0xe8] sm:$0xff]
    %v574 = vld [vmem:[%s1 + $0xf0] sm:$0xff]
    %v575 = vld [vmem:[%s1 + $0xf8] sm:$0xff]
    %v576 = vld [vmem:[%s1 + $0x100] sm:$0xff]
    %v577 = vld [vmem:[%s1 + $0x108] sm:$0xff]
    %v578 = vld [vmem:[%s1 + $0x110] sm:$0xff]
    %v579 = vld [vmem:[%s1 + $0x118] sm:$0xff]
    %v580 = vld [vmem:[%s1 + $0x120] sm:$0xff]
    %v581 = vld [vmem:[%s1 + $0x128] sm:$0xff]
    %v582 = vld [vmem:[%s1 + $0x130] sm:$0xff]
    %v583 = vld [vmem:[%s1 + $0x138] sm:$0xff]
    %v584 = vld [vmem:[%s1 + $0x140] sm:$0xff]
    %v585 = vld [vmem:[%s1 + $0x148] sm:$0xff]
    %v586 = vld [vmem:[%s1 + $0x150] sm:$0xff]
    %v587 = vld [vmem:[%s1 + $0x158] sm:$0xff]
    %v588 = vld [vmem:[%s1 + $0x160] sm:$0xff]
    %v589 = vld [vmem:[%s1 + $0x168] sm:$0xff]
    %v590 = vld [vmem:[%s1 + $0x170] sm:$0xff]
    %v591 = vld [vmem:[%s1 + $0x178] sm:$0xff]
    %v592 = vld [vmem:[%s1 + $0x180] sm:$0xff]
    %v593 = vld [vmem:[%s1 + $0x188] sm:$0xff]
    %v594 = vld [vmem:[%s1 + $0x190] sm:$0xff]
    %v595 = vld [vmem:[%s1 + $0x198] sm:$0xff]
    %v596 = vld [vmem:[%s1 + $0x1a0] sm:$0xff]
    %v597 = vld [vmem:[%s1 + $0x1a8] sm:$0xff]
    %v598 = vld [vmem:[%s1 + $0x1b0] sm:$0xff]
    %v599 = vld [vmem:[%s1 + $0x1b8] sm:$0xff]
    %v600 = vld [vmem:[%s1 + $0x1c0] sm:$0xff]
    %v601 = vld [vmem:[%s1 + $0x1c8] sm:$0xff]
    %v602 = vld [vmem:[%s1 + $0x1d0] sm:$0xff]
    %v603 = vld [vmem:[%s1 + $0x1d8] sm:$0xff]
    %v604 = vld [vmem:[%s1 + $0x1e0] sm:$0xff]
    %v605 = vld [vmem:[%s1 + $0x1e8] sm:$0xff]
    %v606 = vld [vmem:[%s1 + $0x1f0] sm:$0xff]
    %v607 = vld [vmem:[%s1 + $0x1f8] sm:$0xff]
    %v608 = vld [vmem:[%s1 + $0x200] sm:$0xff]
    %v609 = vld [vmem:[%s1 + $0x208] sm:$0xff]
    %v610 = vld [vmem:[%s1 + $0x210] sm:$0xff]
    %v611 = vld [vmem:[%s1 + $0x218] sm:$0xff]
    %v612 = vld [vmem:[%s1 + $0x220] sm:$0xff]
    %v613 = vld [vmem:[%s1 + $0x228] sm:$0xff]
    %v614 = vld [vmem:[%s1 + $0x230] sm:$0xff]
    %v615 = vld [vmem:[%s1 + $0x238] sm:$0xff]
    %v616 = vld [vmem:[%s1 + $0x240] sm:$0xff]
    %v617 = vld [vmem:[%s1 + $0x248] sm:$0xff]
    %v618 = vld [vmem:[%s1 + $0x250] sm:$0xff]
    %v619 = vld [vmem:[%s1 + $0x258] sm:$0xff]
    %v620 = vld [vmem:[%s1 + $0x260] sm:$0xff]
    %v621 = vld [vmem:[%s1 + $0x268] sm:$0xff]
    %v622 = vld [vmem:[%s1 + $0x270] sm:$0xff]
    %v623 = vld [vmem:[%s1 + $0x278] sm:$0xff]
    %v624 = vld [vmem:[%s1 + $0x280] sm:$0xff]
    %v625 = vld [vmem:[%s1 + $0x288] sm:$0xff]
    %v626 = vld [vmem:[%s1 + $0x290] sm:$0xff]
    %v627 = vld [vmem:[%s1 + $0x298] sm:$0xff]
    %v628 = vld [vmem:[%s1 + $0x2a0] sm:$0xff]
    %v629 = vld [vmem:[%s1 + $0x2a8] sm:$0xff]
    %v630 = vld [vmem:[%s1 + $0x2b0] sm:$0xff]
    %v631 = vld [vmem:[%s1 + $0x2b8] sm:$0xff]
    %v632 = vld [vmem:[%s1 + $0x2c0] sm:$0xff]
    %v633 = vld [vmem:[%s1 + $0x2c8] sm:$0xff]
    %v634 = vld [vmem:[%s1 + $0x2d0] sm:$0xff]
    %v635 = vld [vmem:[%s1 + $0x2d8] sm:$0xff]
    %v636 = vld [vmem:[%s1 + $0x2e0] sm:$0xff]
    %v637 = vld [vmem:[%s1 + $0x2e8] sm:$0xff]
    %v638 = vld [vmem:[%s1 + $0x2f0] sm:$0xff]
    %v639 = vld [vmem:[%s1 + $0x2f8] sm:$0xff]
    %v640 = vld [vmem:[%s1 + $0x300] sm:$0xff]
    %v641 = vld [vmem:[%s1 + $0x308] sm:$0xff]
    %v642 = vld [vmem:[%s1 + $0x310] sm:$0xff]
    %v643 = vld [vmem:[%s1 + $0x318] sm:$0xff]
    %v644 = vld [vmem:[%s1 + $0x320] sm:$0xff]
    %v645 = vld [vmem:[%s1 + $0x328] sm:$0xff]
    %v646 = vld [vmem:[%s1 + $0x330] sm:$0xff]
    %v647 = vld [vmem:[%s1 + $0x338] sm:$0xff]
    %v648 = vld [vmem:[%s1 + $0x340] sm:$0xff]
    %v649 = vld [vmem:[%s1 + $0x348] sm:$0xff]
    %v650 = vld [vmem:[%s1 + $0x350] sm:$0xff]
    %v651 = vld [vmem:[%s1 + $0x358] sm:$0xff]
    %v652 = vld [vmem:[%s1 + $0x360] sm:$0xff]
    %v653 = vld [vmem:[%s1 + $0x368] sm:$0xff]
    %v654 = vld [vmem:[%s1 + $0x370] sm:$0xff]
    %v655 = vld [vmem:[%s1 + $0x378] sm:$0xff]
    %v656 = vld [vmem:[%s1 + $0x380] sm:$0xff]
    %v657 = vld [vmem:[%s1 + $0x388] sm:$0xff]
    %v658 = vld [vmem:[%s1 + $0x390] sm:$0xff]
    %v659 = vld [vmem:[%s1 + $0x398] sm:$0xff]
    %v660 = vld [vmem:[%s1 + $0x3a0] sm:$0xff]
    %v661 = vld [vmem:[%s1 + $0x3a8] sm:$0xff]
    %v662 = vld [vmem:[%s1 + $0x3b0] sm:$0xff]
    %v663 = vld [vmem:[%s1 + $0x3b8] sm:$0xff]
    %v664 = vld [vmem:[%s1 + $0x3c0] sm:$0xff]
    %v665 = vld [vmem:[%s1 + $0x3c8] sm:$0xff]
    %v666 = vld [vmem:[%s1 + $0x3d0] sm:$0xff]
    %v667 = vld [vmem:[%s1 + $0x3d8] sm:$0xff]
    %v668 = vld [vmem:[%s1 + $0x3e0] sm:$0xff]
    %v669 = vld [vmem:[%s1 + $0x3e8] sm:$0xff]
    %v670 = vld [vmem:[%s1 + $0x3f0] sm:$0xff]
    %v671 = vld [vmem:[%s1 + $0x3f8] sm:$0xff]
    %v672 = vld [vmem:[%s1 + $0x400] sm:$0xff]
    %v673 = vld [vmem:[%s1 + $0x408] sm:$0xff]
    %v674 = vld [vmem:[%s1 + $0x410] sm:$0xff]
    %v675 = vld [vmem:[%s1 + $0x418] sm:$0xff]
    %v676 = vld [vmem:[%s1 + $0x420] sm:$0xff]
    %v677 = vld [vmem:[%s1 + $0x428] sm:$0xff]
    %v678 = vld [vmem:[%s1 + $0x430] sm:$0xff]
    %v679 = vld [vmem:[%s1 + $0x438] sm:$0xff]
    %v680 = vld [vmem:[%s1 + $0x440] sm:$0xff]
    %v681 = vld [vmem:[%s1 + $0x448] sm:$0xff]
    %v682 = vld [vmem:[%s1 + $0x450] sm:$0xff]
    %v683 = vld [vmem:[%s1 + $0x458] sm:$0xff]
    %v684 = vld [vmem:[%s1 + $0x460] sm:$0xff]
    %v685 = vld [vmem:[%s1 + $0x468] sm:$0xff]
    %v686 = vld [vmem:[%s1 + $0x470] sm:$0xff]
    %v687 = vld [vmem:[%s1 + $0x478] sm:$0xff]
    %v688 = vld [vmem:[%s1 + $0x480] sm:$0xff]
    %v689 = vld [vmem:[%s1 + $0x488] sm:$0xff]
    %v690 = vld [vmem:[%s1 + $0x490] sm:$0xff]
    %v691 = vld [vmem:[%s1 + $0x498] sm:$0xff]
    %v692 = vld [vmem:[%s1 + $0x4a0] sm:$0xff]
    %v693 = vld [vmem:[%s1 + $0x4a8] sm:$0xff]
    %v694 = vld [vmem:[%s1 + $0x4b0] sm:$0xff]
    %v695 = vld [vmem:[%s1 + $0x4b8] sm:$0xff]
    %v696 = vld [vmem:[%s1 + $0x4c0] sm:$0xff]
    %v697 = vld [vmem:[%s1 + $0x4c8] sm:$0xff]
    %v698 = vld [vmem:[%s1 + $0x4d0] sm:$0xff]
    %v699 = vld [vmem:[%s1 + $0x4d8] sm:$0xff]
    %v700 = vld [vmem:[%s1 + $0x4e0] sm:$0xff]
    %v701 = vld [vmem:[%s1 + $0x4e8] sm:$0xff]
    %v702 = vld [vmem:[%s1 + $0x4f0] sm:$0xff]
    %v703 = vld [vmem:[%s1 + $0x4f8] sm:$0xff]
    %v704 = vld [vmem:[%s1 + $0x500] sm:$0xff]
    %v705 = vld [vmem:[%s1 + $0x508] sm:$0xff]
    %v706 = vld [vmem:[%s1 + $0x510] sm:$0xff]
    %v707 = vld [vmem:[%s1 + $0x518] sm:$0xff]
    %v708 = vld [vmem:[%s1 + $0x520] sm:$0xff]
    %v709 = vld [vmem:[%s1 + $0x528] sm:$0xff]
    %v710 = vld [vmem:[%s1 + $0x530] sm:$0xff]
    %v711 = vld [vmem:[%s1 + $0x538] sm:$0xff]
    %v712 = vld [vmem:[%s1 + $0x540] sm:$0xff]
    %v713 = vld [vmem:[%s1 + $0x548] sm:$0xff]
    %v714 = vld [vmem:[%s1 + $0x550] sm:$0xff]
    %v715 = vld [vmem:[%s1 + $0x558] sm:$0xff]
    %v716 = vld [vmem:[%s1 + $0x560] sm:$0xff]
    %v717 = vld [vmem:[%s1 + $0x568] sm:$0xff]
    %v718 = vld [vmem:[%s1 + $0x570] sm:$0xff]
    %v719 = vld [vmem:[%s1 + $0x578] sm:$0xff]
    %v720 = vld [vmem:[%s1 + $0x580] sm:$0xff]
    %v721 = vld [vmem:[%s1 + $0x588] sm:$0xff]
    %v722 = vld [vmem:[%s1 + $0x590] sm:$0xff]
    %v723 = vld [vmem:[%s1 + $0x598] sm:$0xff]
    %v724 = vld [vmem:[%s1 + $0x5a0] sm:$0xff]
    %v725 = vld [vmem:[%s1 + $0x5a8] sm:$0xff]
    %v726 = vld [vmem:[%s1 + $0x5b0] sm:$0xff]
    %v727 = vld [vmem:[%s1 + $0x5b8] sm:$0xff]
    %v728 = vld [vmem:[%s1 + $0x5c0] sm:$0xff]
    %v729 = vld [vmem:[%s1 + $0x5c8] sm:$0xff]
    %v730 = vld [vmem:[%s1 + $0x5d0] sm:$0xff]
    %v731 = vld [vmem:[%s1 + $0x5d8] sm:$0xff]
    %v732 = vld [vmem:[%s1 + $0x5e0] sm:$0xff]
    %v733 = vld [vmem:[%s1 + $0x5e8] sm:$0xff]
    %v734 = vld [vmem:[%s1 + $0x5f0] sm:$0xff]
    %v735 = vld [vmem:[%s1 + $0x5f8] sm:$0xff]
    %v736 = vld [vmem:[%s2] sm:$0xf]
    %v738 = vperm.slane %v736, 0
    %v739 = vperm.slane %v736, 1
    %v740 = vperm.slane %v736, 2
    %v741 = vperm.slane %v736, 3
    %v938 = vunpack.c.l.b16 %v544
    %v939 = vunpack.c.h.b16 %v544
    %v940 = vunpack.c.l.b16 %v545
    %v941 = vunpack.c.h.b16 %v545
    %v942 = vunpack.c.l.b16 %v546
    %v943 = vunpack.c.h.b16 %v546
    %v944 = vunpack.c.l.b16 %v547
    %v945 = vunpack.c.h.b16 %v547
    %v946 = vunpack.c.l.b16 %v548
    %v947 = vunpack.c.h.b16 %v548
    %v948 = vunpack.c.l.b16 %v549
    %v949 = vunpack.c.h.b16 %v549
    %v950 = vunpack.c.l.b16 %v550
    %v951 = vunpack.c.h.b16 %v550
    %v952 = vunpack.c.l.b16 %v551
    %v953 = vunpack.c.h.b16 %v551
    %v954 = vunpack.c.l.b16 %v552
    %v955 = vunpack.c.h.b16 %v552
    %v956 = vunpack.c.l.b16 %v553
    %v957 = vunpack.c.h.b16 %v553
    %v958 = vunpack.c.l.b16 %v554
    %v959 = vunpack.c.h.b16 %v554
    %v960 = vunpack.c.l.b16 %v555
    %v961 = vunpack.c.h.b16 %v555
    %v962 = vunpack.c.l.b16 %v556
    %v963 = vunpack.c.h.b16 %v556
    %v964 = vunpack.c.l.b16 %v557
    %v965 = vunpack.c.h.b16 %v557
    %v966 = vunpack.c.l.b16 %v558
    %v967 = vunpack.c.h.b16 %v558
    %v968 = vunpack.c.l.b16 %v559
    %v969 = vunpack.c.h.b16 %v559
    %v970 = vunpack.c.l.b16 %v560
    %v971 = vunpack.c.h.b16 %v560
    %v972 = vunpack.c.l.b16 %v561
    %v973 = vunpack.c.h.b16 %v561
    %v974 = vunpack.c.l.b16 %v562
    %v975 = vunpack.c.h.b16 %v562
    %v976 = vunpack.c.l.b16 %v563
    %v977 = vunpack.c.h.b16 %v563
    %v978 = vunpack.c.l.b16 %v564
    %v979 = vunpack.c.h.b16 %v564
    %v980 = vunpack.c.l.b16 %v565
    %v981 = vunpack.c.h.b16 %v565
    %v982 = vunpack.c.l.b16 %v566
    %v983 = vunpack.c.h.b16 %v566
    %v984 = vunpack.c.l.b16 %v567
    %v985 = vunpack.c.h.b16 %v567
    %v986 = vunpack.c.l.b16 %v568
    %v987 = vunpack.c.h.b16 %v568
    %v988 = vunpack.c.l.b16 %v569
    %v989 = vunpack.c.h.b16 %v569
    %v990 = vunpack.c.l.b16 %v570
    %v991 = vunpack.c.h.b16 %v570
    %v992 = vunpack.c.l.b16 %v571
    %v993 = vunpack.c.h.b16 %v571
    %v994 = vunpack.c.l.b16 %v572
    %v995 = vunpack.c.h.b16 %v572
    %v996 = vunpack.c.l.b16 %v573
    %v997 = vunpack.c.h.b16 %v573
    %v998 = vunpack.c.l.b16 %v574
    %v999 = vunpack.c.h.b16 %v574
    %v1000 = vunpack.c.l.b16 %v575
    %v1001 = vunpack.c.h.b16 %v575
    %v1002 = vunpack.c.l.b16 %v576
    %v1003 = vunpack.c.h.b16 %v576
    %v1004 = vunpack.c.l.b16 %v577
    %v1005 = vunpack.c.h.b16 %v577
    %v1006 = vunpack.c.l.b16 %v578
    %v1007 = vunpack.c.h.b16 %v578
    %v1008 = vunpack.c.l.b16 %v579
    %v1009 = vunpack.c.h.b16 %v579
    %v1010 = vunpack.c.l.b16 %v580
    %v1011 = vunpack.c.h.b16 %v580
    %v1012 = vunpack.c.l.b16 %v581
    %v1013 = vunpack.c.h.b16 %v581
    %v1014 = vunpack.c.l.b16 %v582
    %v1015 = vunpack.c.h.b16 %v582
    %v1016 = vunpack.c.l.b16 %v583
    %v1017 = vunpack.c.h.b16 %v583
    %v1018 = vunpack.c.l.b16 %v584
    %v1019 = vunpack.c.h.b16 %v584
    %v1020 = vunpack.c.l.b16 %v585
    %v1021 = vunpack.c.h.b16 %v585
    %v1022 = vunpack.c.l.b16 %v586
    %v1023 = vunpack.c.h.b16 %v586
    %v1024 = vunpack.c.l.b16 %v587
    %v1025 = vunpack.c.h.b16 %v587
    %v1026 = vunpack.c.l.b16 %v588
    %v1027 = vunpack.c.h.b16 %v588
    %v1028 = vunpack.c.l.b16 %v589
    %v1029 = vunpack.c.h.b16 %v589
    %v1030 = vunpack.c.l.b16 %v590
    %v1031 = vunpack.c.h.b16 %v590
    %v1032 = vunpack.c.l.b16 %v591
    %v1033 = vunpack.c.h.b16 %v591
    %v1034 = vunpack.c.l.b16 %v592
    %v1035 = vunpack.c.h.b16 %v592
    %v1036 = vunpack.c.l.b16 %v593
    %v1037 = vunpack.c.h.b16 %v593
    %v1038 = vunpack.c.l.b16 %v594
    %v1039 = vunpack.c.h.b16 %v594
    %v1040 = vunpack.c.l.b16 %v595
    %v1041 = vunpack.c.h.b16 %v595
    %v1042 = vunpack.c.l.b16 %v596
    %v1043 = vunpack.c.h.b16 %v596
    %v1044 = vunpack.c.l.b16 %v597
    %v1045 = vunpack.c.h.b16 %v597
    %v1046 = vunpack.c.l.b16 %v598
    %v1047 = vunpack.c.h.b16 %v598
    %v1048 = vunpack.c.l.b16 %v599
    %v1049 = vunpack.c.h.b16 %v599
    %v1050 = vunpack.c.l.b16 %v600
    %v1051 = vunpack.c.h.b16 %v600
    %v1052 = vunpack.c.l.b16 %v601
    %v1053 = vunpack.c.h.b16 %v601
    %v1054 = vunpack.c.l.b16 %v602
    %v1055 = vunpack.c.h.b16 %v602
    %v1056 = vunpack.c.l.b16 %v603
    %v1057 = vunpack.c.h.b16 %v603
    %v1058 = vunpack.c.l.b16 %v604
    %v1059 = vunpack.c.h.b16 %v604
    %v1060 = vunpack.c.l.b16 %v605
    %v1061 = vunpack.c.h.b16 %v605
    %v1062 = vunpack.c.l.b16 %v606
    %v1063 = vunpack.c.h.b16 %v606
    %v1064 = vunpack.c.l.b16 %v607
    %v1065 = vunpack.c.h.b16 %v607
    %v1066 = vunpack.c.l.b16 %v608
    %v1067 = vunpack.c.h.b16 %v608
    %v1068 = vunpack.c.l.b16 %v609
    %v1069 = vunpack.c.h.b16 %v609
    %v1070 = vunpack.c.l.b16 %v610
    %v1071 = vunpack.c.h.b16 %v610
    %v1072 = vunpack.c.l.b16 %v611
    %v1073 = vunpack.c.h.b16 %v611
    %v1074 = vunpack.c.l.b16 %v612
    %v1075 = vunpack.c.h.b16 %v612
    %v1076 = vunpack.c.l.b16 %v613
    %v1077 = vunpack.c.h.b16 %v613
    %v1078 = vunpack.c.l.b16 %v614
    %v1079 = vunpack.c.h.b16 %v614
    %v1080 = vunpack.c.l.b16 %v615
    %v1081 = vunpack.c.h.b16 %v615
    %v1082 = vunpack.c.l.b16 %v616
    %v1083 = vunpack.c.h.b16 %v616
    %v1084 = vunpack.c.l.b16 %v617
    %v1085 = vunpack.c.h.b16 %v617
    %v1086 = vunpack.c.l.b16 %v618
    %v1087 = vunpack.c.h.b16 %v618
    %v1088 = vunpack.c.l.b16 %v619
    %v1089 = vunpack.c.h.b16 %v619
    %v1090 = vunpack.c.l.b16 %v620
    %v1091 = vunpack.c.h.b16 %v620
    %v1092 = vunpack.c.l.b16 %v621
    %v1093 = vunpack.c.h.b16 %v621
    %v1094 = vunpack.c.l.b16 %v622
    %v1095 = vunpack.c.h.b16 %v622
    %v1096 = vunpack.c.l.b16 %v623
    %v1097 = vunpack.c.h.b16 %v623
    %v1098 = vunpack.c.l.b16 %v624
    %v1099 = vunpack.c.h.b16 %v624
    %v1100 = vunpack.c.l.b16 %v625
    %v1101 = vunpack.c.h.b16 %v625
    %v1102 = vunpack.c.l.b16 %v626
    %v1103 = vunpack.c.h.b16 %v626
    %v1104 = vunpack.c.l.b16 %v627
    %v1105 = vunpack.c.h.b16 %v627
    %v1106 = vunpack.c.l.b16 %v628
    %v1107 = vunpack.c.h.b16 %v628
    %v1108 = vunpack.c.l.b16 %v629
    %v1109 = vunpack.c.h.b16 %v629
    %v1110 = vunpack.c.l.b16 %v630
    %v1111 = vunpack.c.h.b16 %v630
    %v1112 = vunpack.c.l.b16 %v631
    %v1113 = vunpack.c.h.b16 %v631
    %v1114 = vunpack.c.l.b16 %v632
    %v1115 = vunpack.c.h.b16 %v632
    %v1116 = vunpack.c.l.b16 %v633
    %v1117 = vunpack.c.h.b16 %v633
    %v1118 = vunpack.c.l.b16 %v634
    %v1119 = vunpack.c.h.b16 %v634
    %v1120 = vunpack.c.l.b16 %v635
    %v1121 = vunpack.c.h.b16 %v635
    %v1122 = vunpack.c.l.b16 %v636
    %v1123 = vunpack.c.h.b16 %v636
    %v1124 = vunpack.c.l.b16 %v637
    %v1125 = vunpack.c.h.b16 %v637
    %v1126 = vunpack.c.l.b16 %v638
    %v1127 = vunpack.c.h.b16 %v638
    %v1128 = vunpack.c.l.b16 %v639
    %v1129 = vunpack.c.h.b16 %v639
    %v1130 = vunpack.c.l.b16 %v640
    %v1131 = vunpack.c.h.b16 %v640
    %v1132 = vunpack.c.l.b16 %v641
    %v1133 = vunpack.c.h.b16 %v641
    %v1134 = vunpack.c.l.b16 %v642
    %v1135 = vunpack.c.h.b16 %v642
    %v1136 = vunpack.c.l.b16 %v643
    %v1137 = vunpack.c.h.b16 %v643
    %v1138 = vunpack.c.l.b16 %v644
    %v1139 = vunpack.c.h.b16 %v644
    %v1140 = vunpack.c.l.b16 %v645
    %v1141 = vunpack.c.h.b16 %v645
    %v1142 = vunpack.c.l.b16 %v646
    %v1143 = vunpack.c.h.b16 %v646
    %v1144 = vunpack.c.l.b16 %v647
    %v1145 = vunpack.c.h.b16 %v647
    %v1146 = vunpack.c.l.b16 %v648
    %v1147 = vunpack.c.h.b16 %v648
    %v1148 = vunpack.c.l.b16 %v649
    %v1149 = vunpack.c.h.b16 %v649
    %v1150 = vunpack.c.l.b16 %v650
    %v1151 = vunpack.c.h.b16 %v650
    %v1152 = vunpack.c.l.b16 %v651
    %v1153 = vunpack.c.h.b16 %v651
    %v1154 = vunpack.c.l.b16 %v652
    %v1155 = vunpack.c.h.b16 %v652
    %v1156 = vunpack.c.l.b16 %v653
    %v1157 = vunpack.c.h.b16 %v653
    %v1158 = vunpack.c.l.b16 %v654
    %v1159 = vunpack.c.h.b16 %v654
    %v1160 = vunpack.c.l.b16 %v655
    %v1161 = vunpack.c.h.b16 %v655
    %v1162 = vunpack.c.l.b16 %v656
    %v1163 = vunpack.c.h.b16 %v656
    %v1164 = vunpack.c.l.b16 %v657
    %v1165 = vunpack.c.h.b16 %v657
    %v1166 = vunpack.c.l.b16 %v658
    %v1167 = vunpack.c.h.b16 %v658
    %v1168 = vunpack.c.l.b16 %v659
    %v1169 = vunpack.c.h.b16 %v659
    %v1170 = vunpack.c.l.b16 %v660
    %v1171 = vunpack.c.h.b16 %v660
    %v1172 = vunpack.c.l.b16 %v661
    %v1173 = vunpack.c.h.b16 %v661
    %v1174 = vunpack.c.l.b16 %v662
    %v1175 = vunpack.c.h.b16 %v662
    %v1176 = vunpack.c.l.b16 %v663
    %v1177 = vunpack.c.h.b16 %v663
    %v1178 = vunpack.c.l.b16 %v664
    %v1179 = vunpack.c.h.b16 %v664
    %v1180 = vunpack.c.l.b16 %v665
    %v1181 = vunpack.c.h.b16 %v665
    %v1182 = vunpack.c.l.b16 %v666
    %v1183 = vunpack.c.h.b16 %v666
    %v1184 = vunpack.c.l.b16 %v667
    %v1185 = vunpack.c.h.b16 %v667
    %v1186 = vunpack.c.l.b16 %v668
    %v1187 = vunpack.c.h.b16 %v668
    %v1188 = vunpack.c.l.b16 %v669
    %v1189 = vunpack.c.h.b16 %v669
    %v1190 = vunpack.c.l.b16 %v670
    %v1191 = vunpack.c.h.b16 %v670
    %v1192 = vunpack.c.l.b16 %v671
    %v1193 = vunpack.c.h.b16 %v671
    %v1194 = vunpack.c.l.b16 %v672
    %v1195 = vunpack.c.h.b16 %v672
    %v1196 = vunpack.c.l.b16 %v673
    %v1197 = vunpack.c.h.b16 %v673
    %v1198 = vunpack.c.l.b16 %v674
    %v1199 = vunpack.c.h.b16 %v674
    %v1200 = vunpack.c.l.b16 %v675
    %v1201 = vunpack.c.h.b16 %v675
    %v1202 = vunpack.c.l.b16 %v676
    %v1203 = vunpack.c.h.b16 %v676
    %v1204 = vunpack.c.l.b16 %v677
    %v1205 = vunpack.c.h.b16 %v677
    %v1206 = vunpack.c.l.b16 %v678
    %v1207 = vunpack.c.h.b16 %v678
    %v1208 = vunpack.c.l.b16 %v679
    %v1209 = vunpack.c.h.b16 %v679
    %v1210 = vunpack.c.l.b16 %v680
    %v1211 = vunpack.c.h.b16 %v680
    %v1212 = vunpack.c.l.b16 %v681
    %v1213 = vunpack.c.h.b16 %v681
    %v1214 = vunpack.c.l.b16 %v682
    %v1215 = vunpack.c.h.b16 %v682
    %v1216 = vunpack.c.l.b16 %v683
    %v1217 = vunpack.c.h.b16 %v683
    %v1218 = vunpack.c.l.b16 %v684
    %v1219 = vunpack.c.h.b16 %v684
    %v1220 = vunpack.c.l.b16 %v685
    %v1221 = vunpack.c.h.b16 %v685
    %v1222 = vunpack.c.l.b16 %v686
    %v1223 = vunpack.c.h.b16 %v686
    %v1224 = vunpack.c.l.b16 %v687
    %v1225 = vunpack.c.h.b16 %v687
    %v1226 = vunpack.c.l.b16 %v688
    %v1227 = vunpack.c.h.b16 %v688
    %v1228 = vunpack.c.l.b16 %v689
    %v1229 = vunpack.c.h.b16 %v689
    %v1230 = vunpack.c.l.b16 %v690
    %v1231 = vunpack.c.h.b16 %v690
    %v1232 = vunpack.c.l.b16 %v691
    %v1233 = vunpack.c.h.b16 %v691
    %v1234 = vunpack.c.l.b16 %v692
    %v1235 = vunpack.c.h.b16 %v692
    %v1236 = vunpack.c.l.b16 %v693
    %v1237 = vunpack.c.h.b16 %v693
    %v1238 = vunpack.c.l.b16 %v694
    %v1239 = vunpack.c.h.b16 %v694
    %v1240 = vunpack.c.l.b16 %v695
    %v1241 = vunpack.c.h.b16 %v695
    %v1242 = vunpack.c.l.b16 %v696
    %v1243 = vunpack.c.h.b16 %v696
    %v1244 = vunpack.c.l.b16 %v697
    %v1245 = vunpack.c.h.b16 %v697
    %v1246 = vunpack.c.l.b16 %v698
    %v1247 = vunpack.c.h.b16 %v698
    %v1248 = vunpack.c.l.b16 %v699
    %v1249 = vunpack.c.h.b16 %v699
    %v1250 = vunpack.c.l.b16 %v700
    %v1251 = vunpack.c.h.b16 %v700
    %v1252 = vunpack.c.l.b16 %v701
    %v1253 = vunpack.c.h.b16 %v701
    %v1254 = vunpack.c.l.b16 %v702
    %v1255 = vunpack.c.h.b16 %v702
    %v1256 = vunpack.c.l.b16 %v703
    %v1257 = vunpack.c.h.b16 %v703
    %v1258 = vunpack.c.l.b16 %v704
    %v1259 = vunpack.c.h.b16 %v704
    %v1260 = vunpack.c.l.b16 %v705
    %v1261 = vunpack.c.h.b16 %v705
    %v1262 = vunpack.c.l.b16 %v706
    %v1263 = vunpack.c.h.b16 %v706
    %v1264 = vunpack.c.l.b16 %v707
    %v1265 = vunpack.c.h.b16 %v707
    %v1266 = vunpack.c.l.b16 %v708
    %v1267 = vunpack.c.h.b16 %v708
    %v1268 = vunpack.c.l.b16 %v709
    %v1269 = vunpack.c.h.b16 %v709
    %v1270 = vunpack.c.l.b16 %v710
    %v1271 = vunpack.c.h.b16 %v710
    %v1272 = vunpack.c.l.b16 %v711
    %v1273 = vunpack.c.h.b16 %v711
    %v1274 = vunpack.c.l.b16 %v712
    %v1275 = vunpack.c.h.b16 %v712
    %v1276 = vunpack.c.l.b16 %v713
    %v1277 = vunpack.c.h.b16 %v713
    %v1278 = vunpack.c.l.b16 %v714
    %v1279 = vunpack.c.h.b16 %v714
    %v1280 = vunpack.c.l.b16 %v715
    %v1281 = vunpack.c.h.b16 %v715
    %v1282 = vunpack.c.l.b16 %v716
    %v1283 = vunpack.c.h.b16 %v716
    %v1284 = vunpack.c.l.b16 %v717
    %v1285 = vunpack.c.h.b16 %v717
    %v1286 = vunpack.c.l.b16 %v718
    %v1287 = vunpack.c.h.b16 %v718
    %v1288 = vunpack.c.l.b16 %v719
    %v1289 = vunpack.c.h.b16 %v719
    %v1290 = vunpack.c.l.b16 %v720
    %v1291 = vunpack.c.h.b16 %v720
    %v1292 = vunpack.c.l.b16 %v721
    %v1293 = vunpack.c.h.b16 %v721
    %v1294 = vunpack.c.l.b16 %v722
    %v1295 = vunpack.c.h.b16 %v722
    %v1296 = vunpack.c.l.b16 %v723
    %v1297 = vunpack.c.h.b16 %v723
    %v1298 = vunpack.c.l.b16 %v724
    %v1299 = vunpack.c.h.b16 %v724
    %v1300 = vunpack.c.l.b16 %v725
    %v1301 = vunpack.c.h.b16 %v725
    %v1302 = vunpack.c.l.b16 %v726
    %v1303 = vunpack.c.h.b16 %v726
    %v1304 = vunpack.c.l.b16 %v727
    %v1305 = vunpack.c.h.b16 %v727
    %v1306 = vunpack.c.l.b16 %v728
    %v1307 = vunpack.c.h.b16 %v728
    %v1308 = vunpack.c.l.b16 %v729
    %v1309 = vunpack.c.h.b16 %v729
    %v1310 = vunpack.c.l.b16 %v730
    %v1311 = vunpack.c.h.b16 %v730
    %v1312 = vunpack.c.l.b16 %v731
    %v1313 = vunpack.c.h.b16 %v731
    %v1314 = vunpack.c.l.b16 %v732
    %v1315 = vunpack.c.h.b16 %v732
    %v1316 = vunpack.c.l.b16 %v733
    %v1317 = vunpack.c.h.b16 %v733
    %v1318 = vunpack.c.l.b16 %v734
    %v1319 = vunpack.c.h.b16 %v734
    %v1320 = vunpack.c.l.b16 %v735
    %v1321 = vunpack.c.h.b16 %v735
    %v1322 = vpack.c.b16 %v942, %v938
    %v1323 = vpack.c.b16 %v943, %v939
    %v1324 = vpack.c.b16 %v944, %v940
    %v1325 = vpack.c.b16 %v945, %v941
    %v1326 = vpack.c.b16 %v950, %v946
    %v1327 = vpack.c.b16 %v951, %v947
    %v1328 = vpack.c.b16 %v952, %v948
    %v1329 = vpack.c.b16 %v953, %v949
    %v1330 = vpack.c.b16 %v958, %v954
    %v1331 = vpack.c.b16 %v959, %v955
    %v1332 = vpack.c.b16 %v960, %v956
    %v1333 = vpack.c.b16 %v961, %v957
    %v1334 = vpack.c.b16 %v966, %v962
    %v1335 = vpack.c.b16 %v967, %v963
    %v1336 = vpack.c.b16 %v968, %v964
    %v1337 = vpack.c.b16 %v969, %v965
    %v1338 = vpack.c.b16 %v974, %v970
    %v1339 = vpack.c.b16 %v975, %v971
    %v1340 = vpack.c.b16 %v976, %v972
    %v1341 = vpack.c.b16 %v977, %v973
    %v1342 = vpack.c.b16 %v982, %v978
    %v1343 = vpack.c.b16 %v983, %v979
    %v1344 = vpack.c.b16 %v984, %v980
    %v1345 = vpack.c.b16 %v985, %v981
    %v1346 = vpack.c.b16 %v990, %v986
    %v1347 = vpack.c.b16 %v991, %v987
    %v1348 = vpack.c.b16 %v992, %v988
    %v1349 = vpack.c.b16 %v993, %v989
    %v1350 = vpack.c.b16 %v998, %v994
    %v1351 = vpack.c.b16 %v999, %v995
    %v1352 = vpack.c.b16 %v1000, %v996
    %v1353 = vpack.c.b16 %v1001, %v997
    %v1354 = vpack.c.b16 %v1006, %v1002
    %v1355 = vpack.c.b16 %v1007, %v1003
    %v1356 = vpack.c.b16 %v1008, %v1004
    %v1357 = vpack.c.b16 %v1009, %v1005
    %v1358 = vpack.c.b16 %v1014, %v1010
    %v1359 = vpack.c.b16 %v1015, %v1011
    %v1360 = vpack.c.b16 %v1016, %v1012
    %v1361 = vpack.c.b16 %v1017, %v1013
    %v1362 = vpack.c.b16 %v1022, %v1018
    %v1363 = vpack.c.b16 %v1023, %v1019
    %v1364 = vpack.c.b16 %v1024, %v1020
    %v1365 = vpack.c.b16 %v1025, %v1021
    %v1366 = vpack.c.b16 %v1030, %v1026
    %v1367 = vpack.c.b16 %v1031, %v1027
    %v1368 = vpack.c.b16 %v1032, %v1028
    %v1369 = vpack.c.b16 %v1033, %v1029
    %v1370 = vpack.c.b16 %v1038, %v1034
    %v1371 = vpack.c.b16 %v1039, %v1035
    %v1372 = vpack.c.b16 %v1040, %v1036
    %v1373 = vpack.c.b16 %v1041, %v1037
    %v1374 = vpack.c.b16 %v1046, %v1042
    %v1375 = vpack.c.b16 %v1047, %v1043
    %v1376 = vpack.c.b16 %v1048, %v1044
    %v1377 = vpack.c.b16 %v1049, %v1045
    %v1378 = vpack.c.b16 %v1054, %v1050
    %v1379 = vpack.c.b16 %v1055, %v1051
    %v1380 = vpack.c.b16 %v1056, %v1052
    %v1381 = vpack.c.b16 %v1057, %v1053
    %v1382 = vpack.c.b16 %v1062, %v1058
    %v1383 = vpack.c.b16 %v1063, %v1059
    %v1384 = vpack.c.b16 %v1064, %v1060
    %v1385 = vpack.c.b16 %v1065, %v1061
    %v1386 = vpack.c.b16 %v1070, %v1066
    %v1387 = vpack.c.b16 %v1071, %v1067
    %v1388 = vpack.c.b16 %v1072, %v1068
    %v1389 = vpack.c.b16 %v1073, %v1069
    %v1390 = vpack.c.b16 %v1078, %v1074
    %v1391 = vpack.c.b16 %v1079, %v1075
    %v1392 = vpack.c.b16 %v1080, %v1076
    %v1393 = vpack.c.b16 %v1081, %v1077
    %v1394 = vpack.c.b16 %v1086, %v1082
    %v1395 = vpack.c.b16 %v1087, %v1083
    %v1396 = vpack.c.b16 %v1088, %v1084
    %v1397 = vpack.c.b16 %v1089, %v1085
    %v1398 = vpack.c.b16 %v1094, %v1090
    %v1399 = vpack.c.b16 %v1095, %v1091
    %v1400 = vpack.c.b16 %v1096, %v1092
    %v1401 = vpack.c.b16 %v1097, %v1093
    %v1402 = vpack.c.b16 %v1102, %v1098
    %v1403 = vpack.c.b16 %v1103, %v1099
    %v1404 = vpack.c.b16 %v1104, %v1100
    %v1405 = vpack.c.b16 %v1105, %v1101
    %v1406 = vpack.c.b16 %v1110, %v1106
    %v1407 = vpack.c.b16 %v1111, %v1107
    %v1408 = vpack.c.b16 %v1112, %v1108
    %v1409 = vpack.c.b16 %v1113, %v1109
    %v1410 = vpack.c.b16 %v1118, %v1114
    %v1411 = vpack.c.b16 %v1119, %v1115
    %v1412 = vpack.c.b16 %v1120, %v1116
    %v1413 = vpack.c.b16 %v1121, %v1117
    %v1414 = vpack.c.b16 %v1126, %v1122
    %v1415 = vpack.c.b16 %v1127, %v1123
    %v1416 = vpack.c.b16 %v1128, %v1124
    %v1417 = vpack.c.b16 %v1129, %v1125
    %v1418 = vpack.c.b16 %v1134, %v1130
    %v1419 = vpack.c.b16 %v1135, %v1131
    %v1420 = vpack.c.b16 %v1136, %v1132
    %v1421 = vpack.c.b16 %v1137, %v1133
    %v1422 = vpack.c.b16 %v1142, %v1138
    %v1423 = vpack.c.b16 %v1143, %v1139
    %v1424 = vpack.c.b16 %v1144, %v1140
    %v1425 = vpack.c.b16 %v1145, %v1141
    %v1426 = vpack.c.b16 %v1150, %v1146
    %v1427 = vpack.c.b16 %v1151, %v1147
    %v1428 = vpack.c.b16 %v1152, %v1148
    %v1429 = vpack.c.b16 %v1153, %v1149
    %v1430 = vpack.c.b16 %v1158, %v1154
    %v1431 = vpack.c.b16 %v1159, %v1155
    %v1432 = vpack.c.b16 %v1160, %v1156
    %v1433 = vpack.c.b16 %v1161, %v1157
    %v1434 = vpack.c.b16 %v1166, %v1162
    %v1435 = vpack.c.b16 %v1167, %v1163
    %v1436 = vpack.c.b16 %v1168, %v1164
    %v1437 = vpack.c.b16 %v1169, %v1165
    %v1438 = vpack.c.b16 %v1174, %v1170
    %v1439 = vpack.c.b16 %v1175, %v1171
    %v1440 = vpack.c.b16 %v1176, %v1172
    %v1441 = vpack.c.b16 %v1177, %v1173
    %v1442 = vpack.c.b16 %v1182, %v1178
    %v1443 = vpack.c.b16 %v1183, %v1179
    %v1444 = vpack.c.b16 %v1184, %v1180
    %v1445 = vpack.c.b16 %v1185, %v1181
    %v1446 = vpack.c.b16 %v1190, %v1186
    %v1447 = vpack.c.b16 %v1191, %v1187
    %v1448 = vpack.c.b16 %v1192, %v1188
    %v1449 = vpack.c.b16 %v1193, %v1189
    %v1450 = vpack.c.b16 %v1198, %v1194
    %v1451 = vpack.c.b16 %v1199, %v1195
    %v1452 = vpack.c.b16 %v1200, %v1196
    %v1453 = vpack.c.b16 %v1201, %v1197
    %v1454 = vpack.c.b16 %v1206, %v1202
    %v1455 = vpack.c.b16 %v1207, %v1203
    %v1456 = vpack.c.b16 %v1208, %v1204
    %v1457 = vpack.c.b16 %v1209, %v1205
    %v1458 = vpack.c.b16 %v1214, %v1210
    %v1459 = vpack.c.b16 %v1215, %v1211
    %v1460 = vpack.c.b16 %v1216, %v1212
    %v1461 = vpack.c.b16 %v1217, %v1213
    %v1462 = vpack.c.b16 %v1222, %v1218
    %v1463 = vpack.c.b16 %v1223, %v1219
    %v1464 = vpack.c.b16 %v1224, %v1220
    %v1465 = vpack.c.b16 %v1225, %v1221
    %v1466 = vpack.c.b16 %v1230, %v1226
    %v1467 = vpack.c.b16 %v1231, %v1227
    %v1468 = vpack.c.b16 %v1232, %v1228
    %v1469 = vpack.c.b16 %v1233, %v1229
    %v1470 = vpack.c.b16 %v1238, %v1234
    %v1471 = vpack.c.b16 %v1239, %v1235
    %v1472 = vpack.c.b16 %v1240, %v1236
    %v1473 = vpack.c.b16 %v1241, %v1237
    %v1474 = vpack.c.b16 %v1246, %v1242
    %v1475 = vpack.c.b16 %v1247, %v1243
    %v1476 = vpack.c.b16 %v1248, %v1244
    %v1477 = vpack.c.b16 %v1249, %v1245
    %v1478 = vpack.c.b16 %v1254, %v1250
    %v1479 = vpack.c.b16 %v1255, %v1251
    %v1480 = vpack.c.b16 %v1256, %v1252
    %v1481 = vpack.c.b16 %v1257, %v1253
    %v1482 = vpack.c.b16 %v1262, %v1258
    %v1483 = vpack.c.b16 %v1263, %v1259
    %v1484 = vpack.c.b16 %v1264, %v1260
    %v1485 = vpack.c.b16 %v1265, %v1261
    %v1486 = vpack.c.b16 %v1270, %v1266
    %v1487 = vpack.c.b16 %v1271, %v1267
    %v1488 = vpack.c.b16 %v1272, %v1268
    %v1489 = vpack.c.b16 %v1273, %v1269
    %v1490 = vpack.c.b16 %v1278, %v1274
    %v1491 = vpack.c.b16 %v1279, %v1275
    %v1492 = vpack.c.b16 %v1280, %v1276
    %v1493 = vpack.c.b16 %v1281, %v1277
    %v1494 = vpack.c.b16 %v1286, %v1282
    %v1495 = vpack.c.b16 %v1287, %v1283
    %v1496 = vpack.c.b16 %v1288, %v1284
    %v1497 = vpack.c.b16 %v1289, %v1285
    %v1498 = vpack.c.b16 %v1294, %v1290
    %v1499 = vpack.c.b16 %v1295, %v1291
    %v1500 = vpack.c.b16 %v1296, %v1292
    %v1501 = vpack.c.b16 %v1297, %v1293
    %v1502 = vpack.c.b16 %v1302, %v1298
    %v1503 = vpack.c.b16 %v1303, %v1299
    %v1504 = vpack.c.b16 %v1304, %v1300
    %v1505 = vpack.c.b16 %v1305, %v1301
    %v1506 = vpack.c.b16 %v1310, %v1306
    %v1507 = vpack.c.b16 %v1311, %v1307
    %v1508 = vpack.c.b16 %v1312, %v1308
    %v1509 = vpack.c.b16 %v1313, %v1309
    %v1510 = vpack.c.b16 %v1318, %v1314
    %v1511 = vpack.c.b16 %v1319, %v1315
    %v1512 = vpack.c.b16 %v1320, %v1316
    %v1513 = vpack.c.b16 %v1321, %v1317
    %1706 = vmatpush.bf16.msra.mxu0 %v1350
    %1707 = vmatpush.bf16.msra.mxu0 %v1346
    %1708 = vmatpush.bf16.msra.mxu0 %v1342
    %1709 = vmatpush.bf16.msra.mxu0 %v1338
    %1710 = vmatpush.bf16.msra.mxu0 %v1334
    %1711 = vmatpush.bf16.msra.mxu0 %v1330
    %1712 = vmatpush.bf16.msra.mxu0 %v1326
    %1713 = vmatpush.bf16.msra.mxu0 %v1322
    %1714 = vmatmul.bf16.gmra.mxu0 %v538
    %v1715 = vpop.f32.mrf.mxu0
    %v1716 = vadd.f32 %v738, %v1715
    %v1717 = vpop.f32.mrf.mxu0
    %1718 = vdwg.mxu0
    %1719 = vmatpush.bf16.msra.mxu0 %v1382
    %1720 = vmatpush.bf16.msra.mxu0 %v1378
    %1721 = vmatpush.bf16.msra.mxu0 %v1374
    %1722 = vmatpush.bf16.msra.mxu0 %v1370
    %1723 = vmatpush.bf16.msra.mxu0 %v1366
    %1724 = vmatpush.bf16.msra.mxu0 %v1362
    %1725 = vmatpush.bf16.msra.mxu0 %v1358
    %1726 = vmatpush.bf16.msra.mxu0 %v1354
    %1727 = vmatmul.bf16.gmra.mxu0 %v539
    %v1728 = vpop.f32.mrf.mxu0
    %v1729 = vadd.f32 %v1716, %v1728
    %v1730 = vpop.f32.mrf.mxu0
    %1731 = vdwg.mxu0
    %1732 = vmatpush.bf16.msra.mxu0 %v1414
    %1733 = vmatpush.bf16.msra.mxu0 %v1410
    %1734 = vmatpush.bf16.msra.mxu0 %v1406
    %1735 = vmatpush.bf16.msra.mxu0 %v1402
    %1736 = vmatpush.bf16.msra.mxu0 %v1398
    %1737 = vmatpush.bf16.msra.mxu0 %v1394
    %1738 = vmatpush.bf16.msra.mxu0 %v1390
    %1739 = vmatpush.bf16.msra.mxu0 %v1386
    %1740 = vmatmul.bf16.gmra.mxu0 %v540
    %v1741 = vpop.f32.mrf.mxu0
    %v1742 = vadd.f32 %v1729, %v1741
    %v1743 = vpop.f32.mrf.mxu0
    %1744 = vdwg.mxu0
    %1745 = vmatpush.bf16.msra.mxu0 %v1446
    %1746 = vmatpush.bf16.msra.mxu0 %v1442
    %1747 = vmatpush.bf16.msra.mxu0 %v1438
    %1748 = vmatpush.bf16.msra.mxu0 %v1434
    %1749 = vmatpush.bf16.msra.mxu0 %v1430
    %1750 = vmatpush.bf16.msra.mxu0 %v1426
    %1751 = vmatpush.bf16.msra.mxu0 %v1422
    %1752 = vmatpush.bf16.msra.mxu0 %v1418
    %1753 = vmatmul.bf16.gmra.mxu0 %v541
    %v1754 = vpop.f32.mrf.mxu0
    %v1755 = vadd.f32 %v1742, %v1754
    %v1756 = vpop.f32.mrf.mxu0
    %1757 = vdwg.mxu0
    %1758 = vmatpush.bf16.msra.mxu0 %v1478
    %1759 = vmatpush.bf16.msra.mxu0 %v1474
    %1760 = vmatpush.bf16.msra.mxu0 %v1470
    %1761 = vmatpush.bf16.msra.mxu0 %v1466
    %1762 = vmatpush.bf16.msra.mxu0 %v1462
    %1763 = vmatpush.bf16.msra.mxu0 %v1458
    %1764 = vmatpush.bf16.msra.mxu0 %v1454
    %1765 = vmatpush.bf16.msra.mxu0 %v1450
    %1766 = vmatmul.bf16.gmra.mxu0 %v542
    %v1767 = vpop.f32.mrf.mxu0
    %v1768 = vadd.f32 %v1755, %v1767
    %v1769 = vpop.f32.mrf.mxu0
    %1770 = vdwg.mxu0
    %1771 = vmatpush.bf16.msra.mxu0 %v1510
    %1772 = vmatpush.bf16.msra.mxu0 %v1506
    %1773 = vmatpush.bf16.msra.mxu0 %v1502
    %1774 = vmatpush.bf16.msra.mxu0 %v1498
    %1775 = vmatpush.bf16.msra.mxu0 %v1494
    %1776 = vmatpush.bf16.msra.mxu0 %v1490
    %1777 = vmatpush.bf16.msra.mxu0 %v1486
    %1778 = vmatpush.bf16.msra.mxu0 %v1482
    %1779 = vmatmul.bf16.gmra.mxu0 %v543
    %v1780 = vpop.f32.mrf.mxu0
    %v1781 = vadd.f32 %v1768, %v1780
    %v1782 = vpop.f32.mrf.mxu0
    %1783 = vdwg.mxu0
    %1784 = vmatpush.bf16.msra.mxu0 %v1351
    %1785 = vmatpush.bf16.msra.mxu0 %v1347
    %1786 = vmatpush.bf16.msra.mxu0 %v1343
    %1787 = vmatpush.bf16.msra.mxu0 %v1339
    %1788 = vmatpush.bf16.msra.mxu0 %v1335
    %1789 = vmatpush.bf16.msra.mxu0 %v1331
    %1790 = vmatpush.bf16.msra.mxu0 %v1327
    %1791 = vmatpush.bf16.msra.mxu0 %v1323
    %1792 = vmatmul.bf16.gmra.mxu0 %v538
    %v1793 = vpop.f32.mrf.mxu0
    %v1794 = vadd.f32 %v739, %v1793
    %v1795 = vpop.f32.mrf.mxu0
    %1796 = vdwg.mxu0
    %1797 = vmatpush.bf16.msra.mxu0 %v1383
    %1798 = vmatpush.bf16.msra.mxu0 %v1379
    %1799 = vmatpush.bf16.msra.mxu0 %v1375
    %1800 = vmatpush.bf16.msra.mxu0 %v1371
    %1801 = vmatpush.bf16.msra.mxu0 %v1367
    %1802 = vmatpush.bf16.msra.mxu0 %v1363
    %1803 = vmatpush.bf16.msra.mxu0 %v1359
    %1804 = vmatpush.bf16.msra.mxu0 %v1355
    %1805 = vmatmul.bf16.gmra.mxu0 %v539
    %v1806 = vpop.f32.mrf.mxu0
    %v1807 = vadd.f32 %v1794, %v1806
    %v1808 = vpop.f32.mrf.mxu0
    %1809 = vdwg.mxu0
    %1810 = vmatpush.bf16.msra.mxu0 %v1415
    %1811 = vmatpush.bf16.msra.mxu0 %v1411
    %1812 = vmatpush.bf16.msra.mxu0 %v1407
    %1813 = vmatpush.bf16.msra.mxu0 %v1403
    %1814 = vmatpush.bf16.msra.mxu0 %v1399
    %1815 = vmatpush.bf16.msra.mxu0 %v1395
    %1816 = vmatpush.bf16.msra.mxu0 %v1391
    %1817 = vmatpush.bf16.msra.mxu0 %v1387
    %1818 = vmatmul.bf16.gmra.mxu0 %v540
    %v1819 = vpop.f32.mrf.mxu0
    %v1820 = vadd.f32 %v1807, %v1819
    %v1821 = vpop.f32.mrf.mxu0
    %1822 = vdwg.mxu0
    %1823 = vmatpush.bf16.msra.mxu0 %v1447
    %1824 = vmatpush.bf16.msra.mxu0 %v1443
    %1825 = vmatpush.bf16.msra.mxu0 %v1439
    %1826 = vmatpush.bf16.msra.mxu0 %v1435
    %1827 = vmatpush.bf16.msra.mxu0 %v1431
    %1828 = vmatpush.bf16.msra.mxu0 %v1427
    %1829 = vmatpush.bf16.msra.mxu0 %v1423
    %1830 = vmatpush.bf16.msra.mxu0 %v1419
    %1831 = vmatmul.bf16.gmra.mxu0 %v541
    %v1832 = vpop.f32.mrf.mxu0
    %v1833 = vadd.f32 %v1820, %v1832
    %v1834 = vpop.f32.mrf.mxu0
    %1835 = vdwg.mxu0
    %1836 = vmatpush.bf16.msra.mxu0 %v1479
    %1837 = vmatpush.bf16.msra.mxu0 %v1475
    %1838 = vmatpush.bf16.msra.mxu0 %v1471
    %1839 = vmatpush.bf16.msra.mxu0 %v1467
    %1840 = vmatpush.bf16.msra.mxu0 %v1463
    %1841 = vmatpush.bf16.msra.mxu0 %v1459
    %1842 = vmatpush.bf16.msra.mxu0 %v1455
    %1843 = vmatpush.bf16.msra.mxu0 %v1451
    %1844 = vmatmul.bf16.gmra.mxu0 %v542
    %v1845 = vpop.f32.mrf.mxu0
    %v1846 = vadd.f32 %v1833, %v1845
    %v1847 = vpop.f32.mrf.mxu0
    %1848 = vdwg.mxu0
    %1849 = vmatpush.bf16.msra.mxu0 %v1511
    %1850 = vmatpush.bf16.msra.mxu0 %v1507
    %1851 = vmatpush.bf16.msra.mxu0 %v1503
    %1852 = vmatpush.bf16.msra.mxu0 %v1499
    %1853 = vmatpush.bf16.msra.mxu0 %v1495
    %1854 = vmatpush.bf16.msra.mxu0 %v1491
    %1855 = vmatpush.bf16.msra.mxu0 %v1487
    %1856 = vmatpush.bf16.msra.mxu0 %v1483
    %1857 = vmatmul.bf16.gmra.mxu0 %v543
    %v1858 = vpop.f32.mrf.mxu0
    %v1859 = vadd.f32 %v1846, %v1858
    %v1860 = vpop.f32.mrf.mxu0
    %1861 = vdwg.mxu0
    %1862 = vmatpush.bf16.msra.mxu0 %v1352
    %1863 = vmatpush.bf16.msra.mxu0 %v1348
    %1864 = vmatpush.bf16.msra.mxu0 %v1344
    %1865 = vmatpush.bf16.msra.mxu0 %v1340
    %1866 = vmatpush.bf16.msra.mxu0 %v1336
    %1867 = vmatpush.bf16.msra.mxu0 %v1332
    %1868 = vmatpush.bf16.msra.mxu0 %v1328
    %1869 = vmatpush.bf16.msra.mxu0 %v1324
    %1870 = vmatmul.bf16.gmra.mxu0 %v538
    %v1871 = vpop.f32.mrf.mxu0
    %v1872 = vadd.f32 %v740, %v1871
    %v1873 = vpop.f32.mrf.mxu0
    %1874 = vdwg.mxu0
    %1875 = vmatpush.bf16.msra.mxu0 %v1384
    %1876 = vmatpush.bf16.msra.mxu0 %v1380
    %1877 = vmatpush.bf16.msra.mxu0 %v1376
    %1878 = vmatpush.bf16.msra.mxu0 %v1372
    %1879 = vmatpush.bf16.msra.mxu0 %v1368
    %1880 = vmatpush.bf16.msra.mxu0 %v1364
    %1881 = vmatpush.bf16.msra.mxu0 %v1360
    %1882 = vmatpush.bf16.msra.mxu0 %v1356
    %1883 = vmatmul.bf16.gmra.mxu0 %v539
    %v1884 = vpop.f32.mrf.mxu0
    %v1885 = vadd.f32 %v1872, %v1884
    %v1886 = vpop.f32.mrf.mxu0
    %1887 = vdwg.mxu0
    %1888 = vmatpush.bf16.msra.mxu0 %v1416
    %1889 = vmatpush.bf16.msra.mxu0 %v1412
    %1890 = vmatpush.bf16.msra.mxu0 %v1408
    %1891 = vmatpush.bf16.msra.mxu0 %v1404
    %1892 = vmatpush.bf16.msra.mxu0 %v1400
    %1893 = vmatpush.bf16.msra.mxu0 %v1396
    %1894 = vmatpush.bf16.msra.mxu0 %v1392
    %1895 = vmatpush.bf16.msra.mxu0 %v1388
    %1896 = vmatmul.bf16.gmra.mxu0 %v540
    %v1897 = vpop.f32.mrf.mxu0
    %v1898 = vadd.f32 %v1885, %v1897
    %v1899 = vpop.f32.mrf.mxu0
    %1900 = vdwg.mxu0
    %1901 = vmatpush.bf16.msra.mxu0 %v1448
    %1902 = vmatpush.bf16.msra.mxu0 %v1444
    %1903 = vmatpush.bf16.msra.mxu0 %v1440
    %1904 = vmatpush.bf16.msra.mxu0 %v1436
    %1905 = vmatpush.bf16.msra.mxu0 %v1432
    %1906 = vmatpush.bf16.msra.mxu0 %v1428
    %1907 = vmatpush.bf16.msra.mxu0 %v1424
    %1908 = vmatpush.bf16.msra.mxu0 %v1420
    %1909 = vmatmul.bf16.gmra.mxu0 %v541
    %v1910 = vpop.f32.mrf.mxu0
    %v1911 = vadd.f32 %v1898, %v1910
    %v1912 = vpop.f32.mrf.mxu0
    %1913 = vdwg.mxu0
    %1914 = vmatpush.bf16.msra.mxu0 %v1480
    %1915 = vmatpush.bf16.msra.mxu0 %v1476
    %1916 = vmatpush.bf16.msra.mxu0 %v1472
    %1917 = vmatpush.bf16.msra.mxu0 %v1468
    %1918 = vmatpush.bf16.msra.mxu0 %v1464
    %1919 = vmatpush.bf16.msra.mxu0 %v1460
    %1920 = vmatpush.bf16.msra.mxu0 %v1456
    %1921 = vmatpush.bf16.msra.mxu0 %v1452
    %1922 = vmatmul.bf16.gmra.mxu0 %v542
    %v1923 = vpop.f32.mrf.mxu0
    %v1924 = vadd.f32 %v1911, %v1923
    %v1925 = vpop.f32.mrf.mxu0
    %1926 = vdwg.mxu0
    %1927 = vmatpush.bf16.msra.mxu0 %v1512
    %1928 = vmatpush.bf16.msra.mxu0 %v1508
    %1929 = vmatpush.bf16.msra.mxu0 %v1504
    %1930 = vmatpush.bf16.msra.mxu0 %v1500
    %1931 = vmatpush.bf16.msra.mxu0 %v1496
    %1932 = vmatpush.bf16.msra.mxu0 %v1492
    %1933 = vmatpush.bf16.msra.mxu0 %v1488
    %1934 = vmatpush.bf16.msra.mxu0 %v1484
    %1935 = vmatmul.bf16.gmra.mxu0 %v543
    %v1936 = vpop.f32.mrf.mxu0
    %v1937 = vadd.f32 %v1924, %v1936
    %v1938 = vpop.f32.mrf.mxu0
    %1939 = vdwg.mxu0
    %1940 = vmatpush.bf16.msra.mxu0 %v1353
    %1941 = vmatpush.bf16.msra.mxu0 %v1349
    %1942 = vmatpush.bf16.msra.mxu0 %v1345
    %1943 = vmatpush.bf16.msra.mxu0 %v1341
    %1944 = vmatpush.bf16.msra.mxu0 %v1337
    %1945 = vmatpush.bf16.msra.mxu0 %v1333
    %1946 = vmatpush.bf16.msra.mxu0 %v1329
    %1947 = vmatpush.bf16.msra.mxu0 %v1325
    %1948 = vmatmul.bf16.gmra.mxu0 %v538
    %v1949 = vpop.f32.mrf.mxu0
    %v1950 = vadd.f32 %v741, %v1949
    %v1951 = vpop.f32.mrf.mxu0
    %1952 = vdwg.mxu0
    %1953 = vmatpush.bf16.msra.mxu0 %v1385
    %1954 = vmatpush.bf16.msra.mxu0 %v1381
    %1955 = vmatpush.bf16.msra.mxu0 %v1377
    %1956 = vmatpush.bf16.msra.mxu0 %v1373
    %1957 = vmatpush.bf16.msra.mxu0 %v1369
    %1958 = vmatpush.bf16.msra.mxu0 %v1365
    %1959 = vmatpush.bf16.msra.mxu0 %v1361
    %1960 = vmatpush.bf16.msra.mxu0 %v1357
    %1961 = vmatmul.bf16.gmra.mxu0 %v539
    %v1962 = vpop.f32.mrf.mxu0
    %v1963 = vadd.f32 %v1950, %v1962
    %v1964 = vpop.f32.mrf.mxu0
    %1965 = vdwg.mxu0
    %1966 = vmatpush.bf16.msra.mxu0 %v1417
    %1967 = vmatpush.bf16.msra.mxu0 %v1413
    %1968 = vmatpush.bf16.msra.mxu0 %v1409
    %1969 = vmatpush.bf16.msra.mxu0 %v1405
    %1970 = vmatpush.bf16.msra.mxu0 %v1401
    %1971 = vmatpush.bf16.msra.mxu0 %v1397
    %1972 = vmatpush.bf16.msra.mxu0 %v1393
    %1973 = vmatpush.bf16.msra.mxu0 %v1389
    %1974 = vmatmul.bf16.gmra.mxu0 %v540
    %v1975 = vpop.f32.mrf.mxu0
    %v1976 = vadd.f32 %v1963, %v1975
    %v1977 = vpop.f32.mrf.mxu0
    %1978 = vdwg.mxu0
    %1979 = vmatpush.bf16.msra.mxu0 %v1449
    %1980 = vmatpush.bf16.msra.mxu0 %v1445
    %1981 = vmatpush.bf16.msra.mxu0 %v1441
    %1982 = vmatpush.bf16.msra.mxu0 %v1437
    %1983 = vmatpush.bf16.msra.mxu0 %v1433
    %1984 = vmatpush.bf16.msra.mxu0 %v1429
    %1985 = vmatpush.bf16.msra.mxu0 %v1425
    %1986 = vmatpush.bf16.msra.mxu0 %v1421
    %1987 = vmatmul.bf16.gmra.mxu0 %v541
    %v1988 = vpop.f32.mrf.mxu0
    %v1989 = vadd.f32 %v1976, %v1988
    %v1990 = vpop.f32.mrf.mxu0
    %1991 = vdwg.mxu0
    %1992 = vmatpush.bf16.msra.mxu0 %v1481
    %1993 = vmatpush.bf16.msra.mxu0 %v1477
    %1994 = vmatpush.bf16.msra.mxu0 %v1473
    %1995 = vmatpush.bf16.msra.mxu0 %v1469
    %1996 = vmatpush.bf16.msra.mxu0 %v1465
    %1997 = vmatpush.bf16.msra.mxu0 %v1461
    %1998 = vmatpush.bf16.msra.mxu0 %v1457
    %1999 = vmatpush.bf16.msra.mxu0 %v1453
    %2000 = vmatmul.bf16.gmra.mxu0 %v542
    %v2001 = vpop.f32.mrf.mxu0
    %v2002 = vadd.f32 %v1989, %v2001
    %v2003 = vpop.f32.mrf.mxu0
    %2004 = vdwg.mxu0
    %2005 = vmatpush.bf16.msra.mxu0 %v1513
    %2006 = vmatpush.bf16.msra.mxu0 %v1509
    %2007 = vmatpush.bf16.msra.mxu0 %v1505
    %2008 = vmatpush.bf16.msra.mxu0 %v1501
    %2009 = vmatpush.bf16.msra.mxu0 %v1497
    %2010 = vmatpush.bf16.msra.mxu0 %v1493
    %2011 = vmatpush.bf16.msra.mxu0 %v1489
    %2012 = vmatpush.bf16.msra.mxu0 %v1485
    %2013 = vmatmul.bf16.gmra.mxu0 %v543
    %v2014 = vpop.f32.mrf.mxu0
    %v2015 = vadd.f32 %v2002, %v2014
    %v2016 = vpop.f32.mrf.mxu0
    %2017 = vdwg.mxu0
    %v2018 = vmax.f32 %v1781, 0.0
    %v2019 = vmax.f32 %v1859, 0.0
    %v2020 = vmax.f32 %v1937, 0.0
    %v2021 = vmax.f32 %v2015, 0.0
    %v2022 = vpack.c.bf16 %v2018, %v2018
    %v2023 = vpack.c.bf16 %v2019, %v2019
    %v2024 = vpack.c.bf16 %v2020, %v2020
    %v2025 = vpack.c.bf16 %v2021, %v2021
    %v2026 = vld [vmem:[%s3] sm:$0xff]
    %v2027 = vld [vmem:[%s3 + $0x8] sm:$0xff]
    %v2028 = vld [vmem:[%s3 + $0x10] sm:$0xff]
    %v2029 = vld [vmem:[%s3 + $0x18] sm:$0xff]
    %v2030 = vld [vmem:[%s3 + $0x20] sm:$0xff]
    %v2031 = vld [vmem:[%s3 + $0x28] sm:$0xff]
    %v2032 = vld [vmem:[%s3 + $0x30] sm:$0xff]
    %v2033 = vld [vmem:[%s3 + $0x38] sm:$0xff]
    %v2034 = vld [vmem:[%s3 + $0x40] sm:$0xff]
    %v2035 = vld [vmem:[%s3 + $0x48] sm:$0xff]
    %v2036 = vld [vmem:[%s3 + $0x50] sm:$0xff]
    %v2037 = vld [vmem:[%s3 + $0x58] sm:$0xff]
    %v2038 = vld [vmem:[%s3 + $0x60] sm:$0xff]
    %v2039 = vld [vmem:[%s3 + $0x68] sm:$0xff]
    %v2040 = vld [vmem:[%s3 + $0x70] sm:$0xff]
    %v2041 = vld [vmem:[%s3 + $0x78] sm:$0xff]
    %v2042 = vld [vmem:[%s3 + $0x80] sm:$0xff]
    %v2043 = vld [vmem:[%s3 + $0x88] sm:$0xff]
    %v2044 = vld [vmem:[%s3 + $0x90] sm:$0xff]
    %v2045 = vld [vmem:[%s3 + $0x98] sm:$0xff]
    %v2046 = vld [vmem:[%s3 + $0xa0] sm:$0xff]
    %v2047 = vld [vmem:[%s3 + $0xa8] sm:$0xff]
    %v2048 = vld [vmem:[%s3 + $0xb0] sm:$0xff]
    %v2049 = vld [vmem:[%s3 + $0xb8] sm:$0xff]
    %v2050 = vld [vmem:[%s3 + $0xc0] sm:$0xff]
    %v2051 = vld [vmem:[%s3 + $0xc8] sm:$0xff]
    %v2052 = vld [vmem:[%s3 + $0xd0] sm:$0xff]
    %v2053 = vld [vmem:[%s3 + $0xd8] sm:$0xff]
    %v2054 = vld [vmem:[%s3 + $0xe0] sm:$0xff]
    %v2055 = vld [vmem:[%s3 + $0xe8] sm:$0xff]
    %v2056 = vld [vmem:[%s3 + $0xf0] sm:$0xff]
    %v2057 = vld [vmem:[%s3 + $0xf8] sm:$0xff]
    %v2058 = vld [vmem:[%s3 + $0x100] sm:$0xff]
    %v2059 = vld [vmem:[%s3 + $0x108] sm:$0xff]
    %v2060 = vld [vmem:[%s3 + $0x110] sm:$0xff]
    %v2061 = vld [vmem:[%s3 + $0x118] sm:$0xff]
    %v2062 = vld [vmem:[%s3 + $0x120] sm:$0xff]
    %v2063 = vld [vmem:[%s3 + $0x128] sm:$0xff]
    %v2064 = vld [vmem:[%s3 + $0x130] sm:$0xff]
    %v2065 = vld [vmem:[%s3 + $0x138] sm:$0xff]
    %v2066 = vld [vmem:[%s3 + $0x140] sm:$0xff]
    %v2067 = vld [vmem:[%s3 + $0x148] sm:$0xff]
    %v2068 = vld [vmem:[%s3 + $0x150] sm:$0xff]
    %v2069 = vld [vmem:[%s3 + $0x158] sm:$0xff]
    %v2070 = vld [vmem:[%s3 + $0x160] sm:$0xff]
    %v2071 = vld [vmem:[%s3 + $0x168] sm:$0xff]
    %v2072 = vld [vmem:[%s3 + $0x170] sm:$0xff]
    %v2073 = vld [vmem:[%s3 + $0x178] sm:$0xff]
    %v2074 = vld [vmem:[%s3 + $0x180] sm:$0xff]
    %v2075 = vld [vmem:[%s3 + $0x188] sm:$0xff]
    %v2076 = vld [vmem:[%s3 + $0x190] sm:$0xff]
    %v2077 = vld [vmem:[%s3 + $0x198] sm:$0xff]
    %v2078 = vld [vmem:[%s3 + $0x1a0] sm:$0xff]
    %v2079 = vld [vmem:[%s3 + $0x1a8] sm:$0xff]
    %v2080 = vld [vmem:[%s3 + $0x1b0] sm:$0xff]
    %v2081 = vld [vmem:[%s3 + $0x1b8] sm:$0xff]
    %v2082 = vld [vmem:[%s3 + $0x1c0] sm:$0xff]
    %v2083 = vld [vmem:[%s3 + $0x1c8] sm:$0xff]
    %v2084 = vld [vmem:[%s3 + $0x1d0] sm:$0xff]
    %v2085 = vld [vmem:[%s3 + $0x1d8] sm:$0xff]
    %v2086 = vld [vmem:[%s3 + $0x1e0] sm:$0xff]
    %v2087 = vld [vmem:[%s3 + $0x1e8] sm:$0xff]
    %v2088 = vld [vmem:[%s3 + $0x1f0] sm:$0xff]
    %v2089 = vld [vmem:[%s3 + $0x1f8] sm:$0xff]
    %v2090 = vld [vmem:[%s3 + $0x200] sm:$0xff]
    %v2091 = vld [vmem:[%s3 + $0x208] sm:$0xff]
    %v2092 = vld [vmem:[%s3 + $0x210] sm:$0xff]
    %v2093 = vld [vmem:[%s3 + $0x218] sm:$0xff]
    %v2094 = vld [vmem:[%s3 + $0x220] sm:$0xff]
    %v2095 = vld [vmem:[%s3 + $0x228] sm:$0xff]
    %v2096 = vld [vmem:[%s3 + $0x230] sm:$0xff]
    %v2097 = vld [vmem:[%s3 + $0x238] sm:$0xff]
    %v2098 = vld [vmem:[%s3 + $0x240] sm:$0xff]
    %v2099 = vld [vmem:[%s3 + $0x248] sm:$0xff]
    %v2100 = vld [vmem:[%s3 + $0x250] sm:$0xff]
    %v2101 = vld [vmem:[%s3 + $0x258] sm:$0xff]
    %v2102 = vld [vmem:[%s3 + $0x260] sm:$0xff]
    %v2103 = vld [vmem:[%s3 + $0x268] sm:$0xff]
    %v2104 = vld [vmem:[%s3 + $0x270] sm:$0xff]
    %v2105 = vld [vmem:[%s3 + $0x278] sm:$0xff]
    %v2106 = vld [vmem:[%s3 + $0x280] sm:$0xff]
    %v2107 = vld [vmem:[%s3 + $0x288] sm:$0xff]
    %v2108 = vld [vmem:[%s3 + $0x290] sm:$0xff]
    %v2109 = vld [vmem:[%s3 + $0x298] sm:$0xff]
    %v2110 = vld [vmem:[%s3 + $0x2a0] sm:$0xff]
    %v2111 = vld [vmem:[%s3 + $0x2a8] sm:$0xff]
    %v2112 = vld [vmem:[%s3 + $0x2b0] sm:$0xff]
    %v2113 = vld [vmem:[%s3 + $0x2b8] sm:$0xff]
    %v2114 = vld [vmem:[%s3 + $0x2c0] sm:$0xff]
    %v2115 = vld [vmem:[%s3 + $0x2c8] sm:$0xff]
    %v2116 = vld [vmem:[%s3 + $0x2d0] sm:$0xff]
    %v2117 = vld [vmem:[%s3 + $0x2d8] sm:$0xff]
    %v2118 = vld [vmem:[%s3 + $0x2e0] sm:$0xff]
    %v2119 = vld [vmem:[%s3 + $0x2e8] sm:$0xff]
    %v2120 = vld [vmem:[%s3 + $0x2f0] sm:$0xff]
    %v2121 = vld [vmem:[%s3 + $0x2f8] sm:$0xff]
    %v2122 = vld [vmem:[%s3 + $0x300] sm:$0xff]
    %v2123 = vld [vmem:[%s3 + $0x308] sm:$0xff]
    %v2124 = vld [vmem:[%s3 + $0x310] sm:$0xff]
    %v2125 = vld [vmem:[%s3 + $0x318] sm:$0xff]
    %v2126 = vld [vmem:[%s3 + $0x320] sm:$0xff]
    %v2127 = vld [vmem:[%s3 + $0x328] sm:$0xff]
    %v2128 = vld [vmem:[%s3 + $0x330] sm:$0xff]
    %v2129 = vld [vmem:[%s3 + $0x338] sm:$0xff]
    %v2130 = vld [vmem:[%s3 + $0x340] sm:$0xff]
    %v2131 = vld [vmem:[%s3 + $0x348] sm:$0xff]
    %v2132 = vld [vmem:[%s3 + $0x350] sm:$0xff]
    %v2133 = vld [vmem:[%s3 + $0x358] sm:$0xff]
    %v2134 = vld [vmem:[%s3 + $0x360] sm:$0xff]
    %v2135 = vld [vmem:[%s3 + $0x368] sm:$0xff]
    %v2136 = vld [vmem:[%s3 + $0x370] sm:$0xff]
    %v2137 = vld [vmem:[%s3 + $0x378] sm:$0xff]
    %v2138 = vld [vmem:[%s3 + $0x380] sm:$0xff]
    %v2139 = vld [vmem:[%s3 + $0x388] sm:$0xff]
    %v2140 = vld [vmem:[%s3 + $0x390] sm:$0xff]
    %v2141 = vld [vmem:[%s3 + $0x398] sm:$0xff]
    %v2142 = vld [vmem:[%s3 + $0x3a0] sm:$0xff]
    %v2143 = vld [vmem:[%s3 + $0x3a8] sm:$0xff]
    %v2144 = vld [vmem:[%s3 + $0x3b0] sm:$0xff]
    %v2145 = vld [vmem:[%s3 + $0x3b8] sm:$0xff]
    %v2146 = vld [vmem:[%s3 + $0x3c0] sm:$0xff]
    %v2147 = vld [vmem:[%s3 + $0x3c8] sm:$0xff]
    %v2148 = vld [vmem:[%s3 + $0x3d0] sm:$0xff]
    %v2149 = vld [vmem:[%s3 + $0x3d8] sm:$0xff]
    %v2150 = vld [vmem:[%s3 + $0x3e0] sm:$0xff]
    %v2151 = vld [vmem:[%s3 + $0x3e8] sm:$0xff]
    %v2152 = vld [vmem:[%s3 + $0x3f0] sm:$0xff]
    %v2153 = vld [vmem:[%s3 + $0x3f8] sm:$0xff]
    %v2154 = vld [vmem:[%s4] sm:$0xf]
    %v2156 = vperm.slane %v2154, 0
    %v2157 = vperm.slane %v2154, 1
    %v2158 = vperm.slane %v2154, 2
    %v2159 = vperm.slane %v2154, 3
    %v2292 = vunpack.c.l.b16 %v2026
    %v2293 = vunpack.c.h.b16 %v2026
    %v2294 = vunpack.c.l.b16 %v2027
    %v2295 = vunpack.c.h.b16 %v2027
    %v2296 = vunpack.c.l.b16 %v2028
    %v2297 = vunpack.c.h.b16 %v2028
    %v2298 = vunpack.c.l.b16 %v2029
    %v2299 = vunpack.c.h.b16 %v2029
    %v2300 = vunpack.c.l.b16 %v2030
    %v2301 = vunpack.c.h.b16 %v2030
    %v2302 = vunpack.c.l.b16 %v2031
    %v2303 = vunpack.c.h.b16 %v2031
    %v2304 = vunpack.c.l.b16 %v2032
    %v2305 = vunpack.c.h.b16 %v2032
    %v2306 = vunpack.c.l.b16 %v2033
    %v2307 = vunpack.c.h.b16 %v2033
    %v2308 = vunpack.c.l.b16 %v2034
    %v2309 = vunpack.c.h.b16 %v2034
    %v2310 = vunpack.c.l.b16 %v2035
    %v2311 = vunpack.c.h.b16 %v2035
    %v2312 = vunpack.c.l.b16 %v2036
    %v2313 = vunpack.c.h.b16 %v2036
    %v2314 = vunpack.c.l.b16 %v2037
    %v2315 = vunpack.c.h.b16 %v2037
    %v2316 = vunpack.c.l.b16 %v2038
    %v2317 = vunpack.c.h.b16 %v2038
    %v2318 = vunpack.c.l.b16 %v2039
    %v2319 = vunpack.c.h.b16 %v2039
    %v2320 = vunpack.c.l.b16 %v2040
    %v2321 = vunpack.c.h.b16 %v2040
    %v2322 = vunpack.c.l.b16 %v2041
    %v2323 = vunpack.c.h.b16 %v2041
    %v2324 = vunpack.c.l.b16 %v2042
    %v2325 = vunpack.c.h.b16 %v2042
    %v2326 = vunpack.c.l.b16 %v2043
    %v2327 = vunpack.c.h.b16 %v2043
    %v2328 = vunpack.c.l.b16 %v2044
    %v2329 = vunpack.c.h.b16 %v2044
    %v2330 = vunpack.c.l.b16 %v2045
    %v2331 = vunpack.c.h.b16 %v2045
    %v2332 = vunpack.c.l.b16 %v2046
    %v2333 = vunpack.c.h.b16 %v2046
    %v2334 = vunpack.c.l.b16 %v2047
    %v2335 = vunpack.c.h.b16 %v2047
    %v2336 = vunpack.c.l.b16 %v2048
    %v2337 = vunpack.c.h.b16 %v2048
    %v2338 = vunpack.c.l.b16 %v2049
    %v2339 = vunpack.c.h.b16 %v2049
    %v2340 = vunpack.c.l.b16 %v2050
    %v2341 = vunpack.c.h.b16 %v2050
    %v2342 = vunpack.c.l.b16 %v2051
    %v2343 = vunpack.c.h.b16 %v2051
    %v2344 = vunpack.c.l.b16 %v2052
    %v2345 = vunpack.c.h.b16 %v2052
    %v2346 = vunpack.c.l.b16 %v2053
    %v2347 = vunpack.c.h.b16 %v2053
    %v2348 = vunpack.c.l.b16 %v2054
    %v2349 = vunpack.c.h.b16 %v2054
    %v2350 = vunpack.c.l.b16 %v2055
    %v2351 = vunpack.c.h.b16 %v2055
    %v2352 = vunpack.c.l.b16 %v2056
    %v2353 = vunpack.c.h.b16 %v2056
    %v2354 = vunpack.c.l.b16 %v2057
    %v2355 = vunpack.c.h.b16 %v2057
    %v2356 = vunpack.c.l.b16 %v2058
    %v2357 = vunpack.c.h.b16 %v2058
    %v2358 = vunpack.c.l.b16 %v2059
    %v2359 = vunpack.c.h.b16 %v2059
    %v2360 = vunpack.c.l.b16 %v2060
    %v2361 = vunpack.c.h.b16 %v2060
    %v2362 = vunpack.c.l.b16 %v2061
    %v2363 = vunpack.c.h.b16 %v2061
    %v2364 = vunpack.c.l.b16 %v2062
    %v2365 = vunpack.c.h.b16 %v2062
    %v2366 = vunpack.c.l.b16 %v2063
    %v2367 = vunpack.c.h.b16 %v2063
    %v2368 = vunpack.c.l.b16 %v2064
    %v2369 = vunpack.c.h.b16 %v2064
    %v2370 = vunpack.c.l.b16 %v2065
    %v2371 = vunpack.c.h.b16 %v2065
    %v2372 = vunpack.c.l.b16 %v2066
    %v2373 = vunpack.c.h.b16 %v2066
    %v2374 = vunpack.c.l.b16 %v2067
    %v2375 = vunpack.c.h.b16 %v2067
    %v2376 = vunpack.c.l.b16 %v2068
    %v2377 = vunpack.c.h.b16 %v2068
    %v2378 = vunpack.c.l.b16 %v2069
    %v2379 = vunpack.c.h.b16 %v2069
    %v2380 = vunpack.c.l.b16 %v2070
    %v2381 = vunpack.c.h.b16 %v2070
    %v2382 = vunpack.c.l.b16 %v2071
    %v2383 = vunpack.c.h.b16 %v2071
    %v2384 = vunpack.c.l.b16 %v2072
    %v2385 = vunpack.c.h.b16 %v2072
    %v2386 = vunpack.c.l.b16 %v2073
    %v2387 = vunpack.c.h.b16 %v2073
    %v2388 = vunpack.c.l.b16 %v2074
    %v2389 = vunpack.c.h.b16 %v2074
    %v2390 = vunpack.c.l.b16 %v2075
    %v2391 = vunpack.c.h.b16 %v2075
    %v2392 = vunpack.c.l.b16 %v2076
    %v2393 = vunpack.c.h.b16 %v2076
    %v2394 = vunpack.c.l.b16 %v2077
    %v2395 = vunpack.c.h.b16 %v2077
    %v2396 = vunpack.c.l.b16 %v2078
    %v2397 = vunpack.c.h.b16 %v2078
    %v2398 = vunpack.c.l.b16 %v2079
    %v2399 = vunpack.c.h.b16 %v2079
    %v2400 = vunpack.c.l.b16 %v2080
    %v2401 = vunpack.c.h.b16 %v2080
    %v2402 = vunpack.c.l.b16 %v2081
    %v2403 = vunpack.c.h.b16 %v2081
    %v2404 = vunpack.c.l.b16 %v2082
    %v2405 = vunpack.c.h.b16 %v2082
    %v2406 = vunpack.c.l.b16 %v2083
    %v2407 = vunpack.c.h.b16 %v2083
    %v2408 = vunpack.c.l.b16 %v2084
    %v2409 = vunpack.c.h.b16 %v2084
    %v2410 = vunpack.c.l.b16 %v2085
    %v2411 = vunpack.c.h.b16 %v2085
    %v2412 = vunpack.c.l.b16 %v2086
    %v2413 = vunpack.c.h.b16 %v2086
    %v2414 = vunpack.c.l.b16 %v2087
    %v2415 = vunpack.c.h.b16 %v2087
    %v2416 = vunpack.c.l.b16 %v2088
    %v2417 = vunpack.c.h.b16 %v2088
    %v2418 = vunpack.c.l.b16 %v2089
    %v2419 = vunpack.c.h.b16 %v2089
    %v2420 = vunpack.c.l.b16 %v2090
    %v2421 = vunpack.c.h.b16 %v2090
    %v2422 = vunpack.c.l.b16 %v2091
    %v2423 = vunpack.c.h.b16 %v2091
    %v2424 = vunpack.c.l.b16 %v2092
    %v2425 = vunpack.c.h.b16 %v2092
    %v2426 = vunpack.c.l.b16 %v2093
    %v2427 = vunpack.c.h.b16 %v2093
    %v2428 = vunpack.c.l.b16 %v2094
    %v2429 = vunpack.c.h.b16 %v2094
    %v2430 = vunpack.c.l.b16 %v2095
    %v2431 = vunpack.c.h.b16 %v2095
    %v2432 = vunpack.c.l.b16 %v2096
    %v2433 = vunpack.c.h.b16 %v2096
    %v2434 = vunpack.c.l.b16 %v2097
    %v2435 = vunpack.c.h.b16 %v2097
    %v2436 = vunpack.c.l.b16 %v2098
    %v2437 = vunpack.c.h.b16 %v2098
    %v2438 = vunpack.c.l.b16 %v2099
    %v2439 = vunpack.c.h.b16 %v2099
    %v2440 = vunpack.c.l.b16 %v2100
    %v2441 = vunpack.c.h.b16 %v2100
    %v2442 = vunpack.c.l.b16 %v2101
    %v2443 = vunpack.c.h.b16 %v2101
    %v2444 = vunpack.c.l.b16 %v2102
    %v2445 = vunpack.c.h.b16 %v2102
    %v2446 = vunpack.c.l.b16 %v2103
    %v2447 = vunpack.c.h.b16 %v2103
    %v2448 = vunpack.c.l.b16 %v2104
    %v2449 = vunpack.c.h.b16 %v2104
    %v2450 = vunpack.c.l.b16 %v2105
    %v2451 = vunpack.c.h.b16 %v2105
    %v2452 = vunpack.c.l.b16 %v2106
    %v2453 = vunpack.c.h.b16 %v2106
    %v2454 = vunpack.c.l.b16 %v2107
    %v2455 = vunpack.c.h.b16 %v2107
    %v2456 = vunpack.c.l.b16 %v2108
    %v2457 = vunpack.c.h.b16 %v2108
    %v2458 = vunpack.c.l.b16 %v2109
    %v2459 = vunpack.c.h.b16 %v2109
    %v2460 = vunpack.c.l.b16 %v2110
    %v2461 = vunpack.c.h.b16 %v2110
    %v2462 = vunpack.c.l.b16 %v2111
    %v2463 = vunpack.c.h.b16 %v2111
    %v2464 = vunpack.c.l.b16 %v2112
    %v2465 = vunpack.c.h.b16 %v2112
    %v2466 = vunpack.c.l.b16 %v2113
    %v2467 = vunpack.c.h.b16 %v2113
    %v2468 = vunpack.c.l.b16 %v2114
    %v2469 = vunpack.c.h.b16 %v2114
    %v2470 = vunpack.c.l.b16 %v2115
    %v2471 = vunpack.c.h.b16 %v2115
    %v2472 = vunpack.c.l.b16 %v2116
    %v2473 = vunpack.c.h.b16 %v2116
    %v2474 = vunpack.c.l.b16 %v2117
    %v2475 = vunpack.c.h.b16 %v2117
    %v2476 = vunpack.c.l.b16 %v2118
    %v2477 = vunpack.c.h.b16 %v2118
    %v2478 = vunpack.c.l.b16 %v2119
    %v2479 = vunpack.c.h.b16 %v2119
    %v2480 = vunpack.c.l.b16 %v2120
    %v2481 = vunpack.c.h.b16 %v2120
    %v2482 = vunpack.c.l.b16 %v2121
    %v2483 = vunpack.c.h.b16 %v2121
    %v2484 = vunpack.c.l.b16 %v2122
    %v2485 = vunpack.c.h.b16 %v2122
    %v2486 = vunpack.c.l.b16 %v2123
    %v2487 = vunpack.c.h.b16 %v2123
    %v2488 = vunpack.c.l.b16 %v2124
    %v2489 = vunpack.c.h.b16 %v2124
    %v2490 = vunpack.c.l.b16 %v2125
    %v2491 = vunpack.c.h.b16 %v2125
    %v2492 = vunpack.c.l.b16 %v2126
    %v2493 = vunpack.c.h.b16 %v2126
    %v2494 = vunpack.c.l.b16 %v2127
    %v2495 = vunpack.c.h.b16 %v2127
    %v2496 = vunpack.c.l.b16 %v2128
    %v2497 = vunpack.c.h.b16 %v2128
    %v2498 = vunpack.c.l.b16 %v2129
    %v2499 = vunpack.c.h.b16 %v2129
    %v2500 = vunpack.c.l.b16 %v2130
    %v2501 = vunpack.c.h.b16 %v2130
    %v2502 = vunpack.c.l.b16 %v2131
    %v2503 = vunpack.c.h.b16 %v2131
    %v2504 = vunpack.c.l.b16 %v2132
    %v2505 = vunpack.c.h.b16 %v2132
    %v2506 = vunpack.c.l.b16 %v2133
    %v2507 = vunpack.c.h.b16 %v2133
    %v2508 = vunpack.c.l.b16 %v2134
    %v2509 = vunpack.c.h.b16 %v2134
    %v2510 = vunpack.c.l.b16 %v2135
    %v2511 = vunpack.c.h.b16 %v2135
    %v2512 = vunpack.c.l.b16 %v2136
    %v2513 = vunpack.c.h.b16 %v2136
    %v2514 = vunpack.c.l.b16 %v2137
    %v2515 = vunpack.c.h.b16 %v2137
    %v2516 = vunpack.c.l.b16 %v2138
    %v2517 = vunpack.c.h.b16 %v2138
    %v2518 = vunpack.c.l.b16 %v2139
    %v2519 = vunpack.c.h.b16 %v2139
    %v2520 = vunpack.c.l.b16 %v2140
    %v2521 = vunpack.c.h.b16 %v2140
    %v2522 = vunpack.c.l.b16 %v2141
    %v2523 = vunpack.c.h.b16 %v2141
    %v2524 = vunpack.c.l.b16 %v2142
    %v2525 = vunpack.c.h.b16 %v2142
    %v2526 = vunpack.c.l.b16 %v2143
    %v2527 = vunpack.c.h.b16 %v2143
    %v2528 = vunpack.c.l.b16 %v2144
    %v2529 = vunpack.c.h.b16 %v2144
    %v2530 = vunpack.c.l.b16 %v2145
    %v2531 = vunpack.c.h.b16 %v2145
    %v2532 = vunpack.c.l.b16 %v2146
    %v2533 = vunpack.c.h.b16 %v2146
    %v2534 = vunpack.c.l.b16 %v2147
    %v2535 = vunpack.c.h.b16 %v2147
    %v2536 = vunpack.c.l.b16 %v2148
    %v2537 = vunpack.c.h.b16 %v2148
    %v2538 = vunpack.c.l.b16 %v2149
    %v2539 = vunpack.c.h.b16 %v2149
    %v2540 = vunpack.c.l.b16 %v2150
    %v2541 = vunpack.c.h.b16 %v2150
    %v2542 = vunpack.c.l.b16 %v2151
    %v2543 = vunpack.c.h.b16 %v2151
    %v2544 = vunpack.c.l.b16 %v2152
    %v2545 = vunpack.c.h.b16 %v2152
    %v2546 = vunpack.c.l.b16 %v2153
    %v2547 = vunpack.c.h.b16 %v2153
    %v2548 = vpack.c.b16 %v2296, %v2292
    %v2549 = vpack.c.b16 %v2297, %v2293
    %v2550 = vpack.c.b16 %v2298, %v2294
    %v2551 = vpack.c.b16 %v2299, %v2295
    %v2552 = vpack.c.b16 %v2304, %v2300
    %v2553 = vpack.c.b16 %v2305, %v2301
    %v2554 = vpack.c.b16 %v2306, %v2302
    %v2555 = vpack.c.b16 %v2307, %v2303
    %v2556 = vpack.c.b16 %v2312, %v2308
    %v2557 = vpack.c.b16 %v2313, %v2309
    %v2558 = vpack.c.b16 %v2314, %v2310
    %v2559 = vpack.c.b16 %v2315, %v2311
    %v2560 = vpack.c.b16 %v2320, %v2316
    %v2561 = vpack.c.b16 %v2321, %v2317
    %v2562 = vpack.c.b16 %v2322, %v2318
    %v2563 = vpack.c.b16 %v2323, %v2319
    %v2564 = vpack.c.b16 %v2328, %v2324
    %v2565 = vpack.c.b16 %v2329, %v2325
    %v2566 = vpack.c.b16 %v2330, %v2326
    %v2567 = vpack.c.b16 %v2331, %v2327
    %v2568 = vpack.c.b16 %v2336, %v2332
    %v2569 = vpack.c.b16 %v2337, %v2333
    %v2570 = vpack.c.b16 %v2338, %v2334
    %v2571 = vpack.c.b16 %v2339, %v2335
    %v2572 = vpack.c.b16 %v2344, %v2340
    %v2573 = vpack.c.b16 %v2345, %v2341
    %v2574 = vpack.c.b16 %v2346, %v2342
    %v2575 = vpack.c.b16 %v2347, %v2343
    %v2576 = vpack.c.b16 %v2352, %v2348
    %v2577 = vpack.c.b16 %v2353, %v2349
    %v2578 = vpack.c.b16 %v2354, %v2350
    %v2579 = vpack.c.b16 %v2355, %v2351
    %v2580 = vpack.c.b16 %v2360, %v2356
    %v2581 = vpack.c.b16 %v2361, %v2357
    %v2582 = vpack.c.b16 %v2362, %v2358
    %v2583 = vpack.c.b16 %v2363, %v2359
    %v2584 = vpack.c.b16 %v2368, %v2364
    %v2585 = vpack.c.b16 %v2369, %v2365
    %v2586 = vpack.c.b16 %v2370, %v2366
    %v2587 = vpack.c.b16 %v2371, %v2367
    %v2588 = vpack.c.b16 %v2376, %v2372
    %v2589 = vpack.c.b16 %v2377, %v2373
    %v2590 = vpack.c.b16 %v2378, %v2374
    %v2591 = vpack.c.b16 %v2379, %v2375
    %v2592 = vpack.c.b16 %v2384, %v2380
    %v2593 = vpack.c.b16 %v2385, %v2381
    %v2594 = vpack.c.b16 %v2386, %v2382
    %v2595 = vpack.c.b16 %v2387, %v2383
    %v2596 = vpack.c.b16 %v2392, %v2388
    %v2597 = vpack.c.b16 %v2393, %v2389
    %v2598 = vpack.c.b16 %v2394, %v2390
    %v2599 = vpack.c.b16 %v2395, %v2391
    %v2600 = vpack.c.b16 %v2400, %v2396
    %v2601 = vpack.c.b16 %v2401, %v2397
    %v2602 = vpack.c.b16 %v2402, %v2398
    %v2603 = vpack.c.b16 %v2403, %v2399
    %v2604 = vpack.c.b16 %v2408, %v2404
    %v2605 = vpack.c.b16 %v2409, %v2405
    %v2606 = vpack.c.b16 %v2410, %v2406
    %v2607 = vpack.c.b16 %v2411, %v2407
    %v2608 = vpack.c.b16 %v2416, %v2412
    %v2609 = vpack.c.b16 %v2417, %v2413
    %v2610 = vpack.c.b16 %v2418, %v2414
    %v2611 = vpack.c.b16 %v2419, %v2415
    %v2612 = vpack.c.b16 %v2424, %v2420
    %v2613 = vpack.c.b16 %v2425, %v2421
    %v2614 = vpack.c.b16 %v2426, %v2422
    %v2615 = vpack.c.b16 %v2427, %v2423
    %v2616 = vpack.c.b16 %v2432, %v2428
    %v2617 = vpack.c.b16 %v2433, %v2429
    %v2618 = vpack.c.b16 %v2434, %v2430
    %v2619 = vpack.c.b16 %v2435, %v2431
    %v2620 = vpack.c.b16 %v2440, %v2436
    %v2621 = vpack.c.b16 %v2441, %v2437
    %v2622 = vpack.c.b16 %v2442, %v2438
    %v2623 = vpack.c.b16 %v2443, %v2439
    %v2624 = vpack.c.b16 %v2448, %v2444
    %v2625 = vpack.c.b16 %v2449, %v2445
    %v2626 = vpack.c.b16 %v2450, %v2446
    %v2627 = vpack.c.b16 %v2451, %v2447
    %v2628 = vpack.c.b16 %v2456, %v2452
    %v2629 = vpack.c.b16 %v2457, %v2453
    %v2630 = vpack.c.b16 %v2458, %v2454
    %v2631 = vpack.c.b16 %v2459, %v2455
    %v2632 = vpack.c.b16 %v2464, %v2460
    %v2633 = vpack.c.b16 %v2465, %v2461
    %v2634 = vpack.c.b16 %v2466, %v2462
    %v2635 = vpack.c.b16 %v2467, %v2463
    %v2636 = vpack.c.b16 %v2472, %v2468
    %v2637 = vpack.c.b16 %v2473, %v2469
    %v2638 = vpack.c.b16 %v2474, %v2470
    %v2639 = vpack.c.b16 %v2475, %v2471
    %v2640 = vpack.c.b16 %v2480, %v2476
    %v2641 = vpack.c.b16 %v2481, %v2477
    %v2642 = vpack.c.b16 %v2482, %v2478
    %v2643 = vpack.c.b16 %v2483, %v2479
    %v2644 = vpack.c.b16 %v2488, %v2484
    %v2645 = vpack.c.b16 %v2489, %v2485
    %v2646 = vpack.c.b16 %v2490, %v2486
    %v2647 = vpack.c.b16 %v2491, %v2487
    %v2648 = vpack.c.b16 %v2496, %v2492
    %v2649 = vpack.c.b16 %v2497, %v2493
    %v2650 = vpack.c.b16 %v2498, %v2494
    %v2651 = vpack.c.b16 %v2499, %v2495
    %v2652 = vpack.c.b16 %v2504, %v2500
    %v2653 = vpack.c.b16 %v2505, %v2501
    %v2654 = vpack.c.b16 %v2506, %v2502
    %v2655 = vpack.c.b16 %v2507, %v2503
    %v2656 = vpack.c.b16 %v2512, %v2508
    %v2657 = vpack.c.b16 %v2513, %v2509
    %v2658 = vpack.c.b16 %v2514, %v2510
    %v2659 = vpack.c.b16 %v2515, %v2511
    %v2660 = vpack.c.b16 %v2520, %v2516
    %v2661 = vpack.c.b16 %v2521, %v2517
    %v2662 = vpack.c.b16 %v2522, %v2518
    %v2663 = vpack.c.b16 %v2523, %v2519
    %v2664 = vpack.c.b16 %v2528, %v2524
    %v2665 = vpack.c.b16 %v2529, %v2525
    %v2666 = vpack.c.b16 %v2530, %v2526
    %v2667 = vpack.c.b16 %v2531, %v2527
    %v2668 = vpack.c.b16 %v2536, %v2532
    %v2669 = vpack.c.b16 %v2537, %v2533
    %v2670 = vpack.c.b16 %v2538, %v2534
    %v2671 = vpack.c.b16 %v2539, %v2535
    %v2672 = vpack.c.b16 %v2544, %v2540
    %v2673 = vpack.c.b16 %v2545, %v2541
    %v2674 = vpack.c.b16 %v2546, %v2542
    %v2675 = vpack.c.b16 %v2547, %v2543
    %2804 = vmatpush.bf16.msra.mxu0 %v2576
    %2805 = vmatpush.bf16.msra.mxu0 %v2572
    %2806 = vmatpush.bf16.msra.mxu0 %v2568
    %2807 = vmatpush.bf16.msra.mxu0 %v2564
    %2808 = vmatpush.bf16.msra.mxu0 %v2560
    %2809 = vmatpush.bf16.msra.mxu0 %v2556
    %2810 = vmatpush.bf16.msra.mxu0 %v2552
    %2811 = vmatpush.bf16.msra.mxu0 %v2548
    %2812 = vmatmul.bf16.gmra.mxu0 %v2022
    %v2813 = vpop.f32.mrf.mxu0
    %v2814 = vadd.f32 %v2156, %v2813
    %v2815 = vpop.f32.mrf.mxu0
    %2816 = vdwg.mxu0
    %2817 = vmatpush.bf16.msra.mxu0 %v2608
    %2818 = vmatpush.bf16.msra.mxu0 %v2604
    %2819 = vmatpush.bf16.msra.mxu0 %v2600
    %2820 = vmatpush.bf16.msra.mxu0 %v2596
    %2821 = vmatpush.bf16.msra.mxu0 %v2592
    %2822 = vmatpush.bf16.msra.mxu0 %v2588
    %2823 = vmatpush.bf16.msra.mxu0 %v2584
    %2824 = vmatpush.bf16.msra.mxu0 %v2580
    %2825 = vmatmul.bf16.gmra.mxu0 %v2023
    %v2826 = vpop.f32.mrf.mxu0
    %v2827 = vadd.f32 %v2814, %v2826
    %v2828 = vpop.f32.mrf.mxu0
    %2829 = vdwg.mxu0
    %2830 = vmatpush.bf16.msra.mxu0 %v2640
    %2831 = vmatpush.bf16.msra.mxu0 %v2636
    %2832 = vmatpush.bf16.msra.mxu0 %v2632
    %2833 = vmatpush.bf16.msra.mxu0 %v2628
    %2834 = vmatpush.bf16.msra.mxu0 %v2624
    %2835 = vmatpush.bf16.msra.mxu0 %v2620
    %2836 = vmatpush.bf16.msra.mxu0 %v2616
    %2837 = vmatpush.bf16.msra.mxu0 %v2612
    %2838 = vmatmul.bf16.gmra.mxu0 %v2024
    %v2839 = vpop.f32.mrf.mxu0
    %v2840 = vadd.f32 %v2827, %v2839
    %v2841 = vpop.f32.mrf.mxu0
    %2842 = vdwg.mxu0
    %2843 = vmatpush.bf16.msra.mxu0 %v2672
    %2844 = vmatpush.bf16.msra.mxu0 %v2668
    %2845 = vmatpush.bf16.msra.mxu0 %v2664
    %2846 = vmatpush.bf16.msra.mxu0 %v2660
    %2847 = vmatpush.bf16.msra.mxu0 %v2656
    %2848 = vmatpush.bf16.msra.mxu0 %v2652
    %2849 = vmatpush.bf16.msra.mxu0 %v2648
    %2850 = vmatpush.bf16.msra.mxu0 %v2644
    %2851 = vmatmul.bf16.gmra.mxu0 %v2025
    %v2852 = vpop.f32.mrf.mxu0
    %v2853 = vadd.f32 %v2840, %v2852
    %v2854 = vpop.f32.mrf.mxu0
    %2855 = vdwg.mxu0
    %2856 = vmatpush.bf16.msra.mxu0 %v2577
    %2857 = vmatpush.bf16.msra.mxu0 %v2573
    %2858 = vmatpush.bf16.msra.mxu0 %v2569
    %2859 = vmatpush.bf16.msra.mxu0 %v2565
    %2860 = vmatpush.bf16.msra.mxu0 %v2561
    %2861 = vmatpush.bf16.msra.mxu0 %v2557
    %2862 = vmatpush.bf16.msra.mxu0 %v2553
    %2863 = vmatpush.bf16.msra.mxu0 %v2549
    %2864 = vmatmul.bf16.gmra.mxu0 %v2022
    %v2865 = vpop.f32.mrf.mxu0
    %v2866 = vadd.f32 %v2157, %v2865
    %v2867 = vpop.f32.mrf.mxu0
    %2868 = vdwg.mxu0
    %2869 = vmatpush.bf16.msra.mxu0 %v2609
    %2870 = vmatpush.bf16.msra.mxu0 %v2605
    %2871 = vmatpush.bf16.msra.mxu0 %v2601
    %2872 = vmatpush.bf16.msra.mxu0 %v2597
    %2873 = vmatpush.bf16.msra.mxu0 %v2593
    %2874 = vmatpush.bf16.msra.mxu0 %v2589
    %2875 = vmatpush.bf16.msra.mxu0 %v2585
    %2876 = vmatpush.bf16.msra.mxu0 %v2581
    %2877 = vmatmul.bf16.gmra.mxu0 %v2023
    %v2878 = vpop.f32.mrf.mxu0
    %v2879 = vadd.f32 %v2866, %v2878
    %v2880 = vpop.f32.mrf.mxu0
    %2881 = vdwg.mxu0
    %2882 = vmatpush.bf16.msra.mxu0 %v2641
    %2883 = vmatpush.bf16.msra.mxu0 %v2637
    %2884 = vmatpush.bf16.msra.mxu0 %v2633
    %2885 = vmatpush.bf16.msra.mxu0 %v2629
    %2886 = vmatpush.bf16.msra.mxu0 %v2625
    %2887 = vmatpush.bf16.msra.mxu0 %v2621
    %2888 = vmatpush.bf16.msra.mxu0 %v2617
    %2889 = vmatpush.bf16.msra.mxu0 %v2613
    %2890 = vmatmul.bf16.gmra.mxu0 %v2024
    %v2891 = vpop.f32.mrf.mxu0
    %v2892 = vadd.f32 %v2879, %v2891
    %v2893 = vpop.f32.mrf.mxu0
    %2894 = vdwg.mxu0
    %2895 = vmatpush.bf16.msra.mxu0 %v2673
    %2896 = vmatpush.bf16.msra.mxu0 %v2669
    %2897 = vmatpush.bf16.msra.mxu0 %v2665
    %2898 = vmatpush.bf16.msra.mxu0 %v2661
    %2899 = vmatpush.bf16.msra.mxu0 %v2657
    %2900 = vmatpush.bf16.msra.mxu0 %v2653
    %2901 = vmatpush.bf16.msra.mxu0 %v2649
    %2902 = vmatpush.bf16.msra.mxu0 %v2645
    %2903 = vmatmul.bf16.gmra.mxu0 %v2025
    %v2904 = vpop.f32.mrf.mxu0
    %v2905 = vadd.f32 %v2892, %v2904
    %v2906 = vpop.f32.mrf.mxu0
    %2907 = vdwg.mxu0
    %2908 = vmatpush.bf16.msra.mxu0 %v2578
    %2909 = vmatpush.bf16.msra.mxu0 %v2574
    %2910 = vmatpush.bf16.msra.mxu0 %v2570
    %2911 = vmatpush.bf16.msra.mxu0 %v2566
    %2912 = vmatpush.bf16.msra.mxu0 %v2562
    %2913 = vmatpush.bf16.msra.mxu0 %v2558
    %2914 = vmatpush.bf16.msra.mxu0 %v2554
    %2915 = vmatpush.bf16.msra.mxu0 %v2550
    %2916 = vmatmul.bf16.gmra.mxu0 %v2022
    %v2917 = vpop.f32.mrf.mxu0
    %v2918 = vadd.f32 %v2158, %v2917
    %v2919 = vpop.f32.mrf.mxu0
    %2920 = vdwg.mxu0
    %2921 = vmatpush.bf16.msra.mxu0 %v2610
    %2922 = vmatpush.bf16.msra.mxu0 %v2606
    %2923 = vmatpush.bf16.msra.mxu0 %v2602
    %2924 = vmatpush.bf16.msra.mxu0 %v2598
    %2925 = vmatpush.bf16.msra.mxu0 %v2594
    %2926 = vmatpush.bf16.msra.mxu0 %v2590
    %2927 = vmatpush.bf16.msra.mxu0 %v2586
    %2928 = vmatpush.bf16.msra.mxu0 %v2582
    %2929 = vmatmul.bf16.gmra.mxu0 %v2023
    %v2930 = vpop.f32.mrf.mxu0
    %v2931 = vadd.f32 %v2918, %v2930
    %v2932 = vpop.f32.mrf.mxu0
    %2933 = vdwg.mxu0
    %2934 = vmatpush.bf16.msra.mxu0 %v2642
    %2935 = vmatpush.bf16.msra.mxu0 %v2638
    %2936 = vmatpush.bf16.msra.mxu0 %v2634
    %2937 = vmatpush.bf16.msra.mxu0 %v2630
    %2938 = vmatpush.bf16.msra.mxu0 %v2626
    %2939 = vmatpush.bf16.msra.mxu0 %v2622
    %2940 = vmatpush.bf16.msra.mxu0 %v2618
    %2941 = vmatpush.bf16.msra.mxu0 %v2614
    %2942 = vmatmul.bf16.gmra.mxu0 %v2024
    %v2943 = vpop.f32.mrf.mxu0
    %v2944 = vadd.f32 %v2931, %v2943
    %v2945 = vpop.f32.mrf.mxu0
    %2946 = vdwg.mxu0
    %2947 = vmatpush.bf16.msra.mxu0 %v2674
    %2948 = vmatpush.bf16.msra.mxu0 %v2670
    %2949 = vmatpush.bf16.msra.mxu0 %v2666
    %2950 = vmatpush.bf16.msra.mxu0 %v2662
    %2951 = vmatpush.bf16.msra.mxu0 %v2658
    %2952 = vmatpush.bf16.msra.mxu0 %v2654
    %2953 = vmatpush.bf16.msra.mxu0 %v2650
    %2954 = vmatpush.bf16.msra.mxu0 %v2646
    %2955 = vmatmul.bf16.gmra.mxu0 %v2025
    %v2956 = vpop.f32.mrf.mxu0
    %v2957 = vadd.f32 %v2944, %v2956
    %v2958 = vpop.f32.mrf.mxu0
    %2959 = vdwg.mxu0
    %2960 = vmatpush.bf16.msra.mxu0 %v2579
    %2961 = vmatpush.bf16.msra.mxu0 %v2575
    %2962 = vmatpush.bf16.msra.mxu0 %v2571
    %2963 = vmatpush.bf16.msra.mxu0 %v2567
    %2964 = vmatpush.bf16.msra.mxu0 %v2563
    %2965 = vmatpush.bf16.msra.mxu0 %v2559
    %2966 = vmatpush.bf16.msra.mxu0 %v2555
    %2967 = vmatpush.bf16.msra.mxu0 %v2551
    %2968 = vmatmul.bf16.gmra.mxu0 %v2022
    %v2969 = vpop.f32.mrf.mxu0
    %v2970 = vadd.f32 %v2159, %v2969
    %v2971 = vpop.f32.mrf.mxu0
    %2972 = vdwg.mxu0
    %2973 = vmatpush.bf16.msra.mxu0 %v2611
    %2974 = vmatpush.bf16.msra.mxu0 %v2607
    %2975 = vmatpush.bf16.msra.mxu0 %v2603
    %2976 = vmatpush.bf16.msra.mxu0 %v2599
    %2977 = vmatpush.bf16.msra.mxu0 %v2595
    %2978 = vmatpush.bf16.msra.mxu0 %v2591
    %2979 = vmatpush.bf16.msra.mxu0 %v2587
    %2980 = vmatpush.bf16.msra.mxu0 %v2583
    %2981 = vmatmul.bf16.gmra.mxu0 %v2023
    %v2982 = vpop.f32.mrf.mxu0
    %v2983 = vadd.f32 %v2970, %v2982
    %v2984 = vpop.f32.mrf.mxu0
    %2985 = vdwg.mxu0
    %2986 = vmatpush.bf16.msra.mxu0 %v2643
    %2987 = vmatpush.bf16.msra.mxu0 %v2639
    %2988 = vmatpush.bf16.msra.mxu0 %v2635
    %2989 = vmatpush.bf16.msra.mxu0 %v2631
    %2990 = vmatpush.bf16.msra.mxu0 %v2627
    %2991 = vmatpush.bf16.msra.mxu0 %v2623
    %2992 = vmatpush.bf16.msra.mxu0 %v2619
    %2993 = vmatpush.bf16.msra.mxu0 %v2615
    %2994 = vmatmul.bf16.gmra.mxu0 %v2024
    %v2995 = vpop.f32.mrf.mxu0
    %v2996 = vadd.f32 %v2983, %v2995
    %v2997 = vpop.f32.mrf.mxu0
    %2998 = vdwg.mxu0
    %2999 = vmatpush.bf16.msra.mxu0 %v2675
    %3000 = vmatpush.bf16.msra.mxu0 %v2671
    %3001 = vmatpush.bf16.msra.mxu0 %v2667
    %3002 = vmatpush.bf16.msra.mxu0 %v2663
    %3003 = vmatpush.bf16.msra.mxu0 %v2659
    %3004 = vmatpush.bf16.msra.mxu0 %v2655
    %3005 = vmatpush.bf16.msra.mxu0 %v2651
    %3006 = vmatpush.bf16.msra.mxu0 %v2647
    %3007 = vmatmul.bf16.gmra.mxu0 %v2025
    %v3008 = vpop.f32.mrf.mxu0
    %v3009 = vadd.f32 %v2996, %v3008
    %v3010 = vpop.f32.mrf.mxu0
    %3011 = vdwg.mxu0
    %v3012 = vmax.f32 %v2853, 0.0
    %v3013 = vmax.f32 %v2905, 0.0
    %v3014 = vmax.f32 %v2957, 0.0
    %v3015 = vmax.f32 %v3009, 0.0
    %v3016 = vpack.c.bf16 %v3012, %v3012
    %v3017 = vpack.c.bf16 %v3013, %v3013
    %v3018 = vpack.c.bf16 %v3014, %v3014
    %v3019 = vpack.c.bf16 %v3015, %v3015
    %v3020 = vld [vmem:[%s5] sm:$0xff]
    %v3021 = vld [vmem:[%s5 + $0x8] sm:$0xff]
    %v3022 = vld [vmem:[%s5 + $0x10] sm:$0xff]
    %v3023 = vld [vmem:[%s5 + $0x18] sm:$0xff]
    %v3024 = vld [vmem:[%s5 + $0x20] sm:$0xff]
    %v3025 = vld [vmem:[%s5 + $0x28] sm:$0xff]
    %v3026 = vld [vmem:[%s5 + $0x30] sm:$0xff]
    %v3027 = vld [vmem:[%s5 + $0x38] sm:$0xff]
    %v3028 = vld [vmem:[%s5 + $0x40] sm:$0xff]
    %v3029 = vld [vmem:[%s5 + $0x48] sm:$0xff]
    %v3030 = vld [vmem:[%s5 + $0x50] sm:$0xff]
    %v3031 = vld [vmem:[%s5 + $0x58] sm:$0xff]
    %v3032 = vld [vmem:[%s5 + $0x60] sm:$0xff]
    %v3033 = vld [vmem:[%s5 + $0x68] sm:$0xff]
    %v3034 = vld [vmem:[%s5 + $0x70] sm:$0xff]
    %v3035 = vld [vmem:[%s5 + $0x78] sm:$0xff]
    %v3036 = vld [vmem:[%s5 + $0x80] sm:$0xff]
    %v3037 = vld [vmem:[%s5 + $0x88] sm:$0xff]
    %v3038 = vld [vmem:[%s5 + $0x90] sm:$0xff]
    %v3039 = vld [vmem:[%s5 + $0x98] sm:$0xff]
    %v3040 = vld [vmem:[%s5 + $0xa0] sm:$0xff]
    %v3041 = vld [vmem:[%s5 + $0xa8] sm:$0xff]
    %v3042 = vld [vmem:[%s5 + $0xb0] sm:$0xff]
    %v3043 = vld [vmem:[%s5 + $0xb8] sm:$0xff]
    %v3044 = vld [vmem:[%s5 + $0xc0] sm:$0xff]
    %v3045 = vld [vmem:[%s5 + $0xc8] sm:$0xff]
    %v3046 = vld [vmem:[%s5 + $0xd0] sm:$0xff]
    %v3047 = vld [vmem:[%s5 + $0xd8] sm:$0xff]
    %v3048 = vld [vmem:[%s5 + $0xe0] sm:$0xff]
    %v3049 = vld [vmem:[%s5 + $0xe8] sm:$0xff]
    %v3050 = vld [vmem:[%s5 + $0xf0] sm:$0xff]
    %v3051 = vld [vmem:[%s5 + $0xf8] sm:$0xff]
    %v3052 = vld [vmem:[%s5 + $0x100] sm:$0xff]
    %v3053 = vld [vmem:[%s5 + $0x108] sm:$0xff]
    %v3054 = vld [vmem:[%s5 + $0x110] sm:$0xff]
    %v3055 = vld [vmem:[%s5 + $0x118] sm:$0xff]
    %v3056 = vld [vmem:[%s5 + $0x120] sm:$0xff]
    %v3057 = vld [vmem:[%s5 + $0x128] sm:$0xff]
    %v3058 = vld [vmem:[%s5 + $0x130] sm:$0xff]
    %v3059 = vld [vmem:[%s5 + $0x138] sm:$0xff]
    %v3060 = vld [vmem:[%s5 + $0x140] sm:$0xff]
    %v3061 = vld [vmem:[%s5 + $0x148] sm:$0xff]
    %v3062 = vld [vmem:[%s5 + $0x150] sm:$0xff]
    %v3063 = vld [vmem:[%s5 + $0x158] sm:$0xff]
    %v3064 = vld [vmem:[%s5 + $0x160] sm:$0xff]
    %v3065 = vld [vmem:[%s5 + $0x168] sm:$0xff]
    %v3066 = vld [vmem:[%s5 + $0x170] sm:$0xff]
    %v3067 = vld [vmem:[%s5 + $0x178] sm:$0xff]
    %v3068 = vld [vmem:[%s5 + $0x180] sm:$0xff]
    %v3069 = vld [vmem:[%s5 + $0x188] sm:$0xff]
    %v3070 = vld [vmem:[%s5 + $0x190] sm:$0xff]
    %v3071 = vld [vmem:[%s5 + $0x198] sm:$0xff]
    %v3072 = vld [vmem:[%s5 + $0x1a0] sm:$0xff]
    %v3073 = vld [vmem:[%s5 + $0x1a8] sm:$0xff]
    %v3074 = vld [vmem:[%s5 + $0x1b0] sm:$0xff]
    %v3075 = vld [vmem:[%s5 + $0x1b8] sm:$0xff]
    %v3076 = vld [vmem:[%s5 + $0x1c0] sm:$0xff]
    %v3077 = vld [vmem:[%s5 + $0x1c8] sm:$0xff]
    %v3078 = vld [vmem:[%s5 + $0x1d0] sm:$0xff]
    %v3079 = vld [vmem:[%s5 + $0x1d8] sm:$0xff]
    %v3080 = vld [vmem:[%s5 + $0x1e0] sm:$0xff]
    %v3081 = vld [vmem:[%s5 + $0x1e8] sm:$0xff]
    %v3082 = vld [vmem:[%s5 + $0x1f0] sm:$0xff]
    %v3083 = vld [vmem:[%s5 + $0x1f8] sm:$0xff]
    %v3084 = vld [vmem:[%s5 + $0x200] sm:$0xff]
    %v3085 = vld [vmem:[%s5 + $0x208] sm:$0xff]
    %v3086 = vld [vmem:[%s5 + $0x210] sm:$0xff]
    %v3087 = vld [vmem:[%s5 + $0x218] sm:$0xff]
    %v3088 = vld [vmem:[%s5 + $0x220] sm:$0xff]
    %v3089 = vld [vmem:[%s5 + $0x228] sm:$0xff]
    %v3090 = vld [vmem:[%s5 + $0x230] sm:$0xff]
    %v3091 = vld [vmem:[%s5 + $0x238] sm:$0xff]
    %v3092 = vld [vmem:[%s5 + $0x240] sm:$0xff]
    %v3093 = vld [vmem:[%s5 + $0x248] sm:$0xff]
    %v3094 = vld [vmem:[%s5 + $0x250] sm:$0xff]
    %v3095 = vld [vmem:[%s5 + $0x258] sm:$0xff]
    %v3096 = vld [vmem:[%s5 + $0x260] sm:$0xff]
    %v3097 = vld [vmem:[%s5 + $0x268] sm:$0xff]
    %v3098 = vld [vmem:[%s5 + $0x270] sm:$0xff]
    %v3099 = vld [vmem:[%s5 + $0x278] sm:$0xff]
    %v3100 = vld [vmem:[%s5 + $0x280] sm:$0xff]
    %v3101 = vld [vmem:[%s5 + $0x288] sm:$0xff]
    %v3102 = vld [vmem:[%s5 + $0x290] sm:$0xff]
    %v3103 = vld [vmem:[%s5 + $0x298] sm:$0xff]
    %v3104 = vld [vmem:[%s5 + $0x2a0] sm:$0xff]
    %v3105 = vld [vmem:[%s5 + $0x2a8] sm:$0xff]
    %v3106 = vld [vmem:[%s5 + $0x2b0] sm:$0xff]
    %v3107 = vld [vmem:[%s5 + $0x2b8] sm:$0xff]
    %v3108 = vld [vmem:[%s5 + $0x2c0] sm:$0xff]
    %v3109 = vld [vmem:[%s5 + $0x2c8] sm:$0xff]
    %v3110 = vld [vmem:[%s5 + $0x2d0] sm:$0xff]
    %v3111 = vld [vmem:[%s5 + $0x2d8] sm:$0xff]
    %v3112 = vld [vmem:[%s5 + $0x2e0] sm:$0xff]
    %v3113 = vld [vmem:[%s5 + $0x2e8] sm:$0xff]
    %v3114 = vld [vmem:[%s5 + $0x2f0] sm:$0xff]
    %v3115 = vld [vmem:[%s5 + $0x2f8] sm:$0xff]
    %v3116 = vld [vmem:[%s5 + $0x300] sm:$0xff]
    %v3117 = vld [vmem:[%s5 + $0x308] sm:$0xff]
    %v3118 = vld [vmem:[%s5 + $0x310] sm:$0xff]
    %v3119 = vld [vmem:[%s5 + $0x318] sm:$0xff]
    %v3120 = vld [vmem:[%s5 + $0x320] sm:$0xff]
    %v3121 = vld [vmem:[%s5 + $0x328] sm:$0xff]
    %v3122 = vld [vmem:[%s5 + $0x330] sm:$0xff]
    %v3123 = vld [vmem:[%s5 + $0x338] sm:$0xff]
    %v3124 = vld [vmem:[%s5 + $0x340] sm:$0xff]
    %v3125 = vld [vmem:[%s5 + $0x348] sm:$0xff]
    %v3126 = vld [vmem:[%s5 + $0x350] sm:$0xff]
    %v3127 = vld [vmem:[%s5 + $0x358] sm:$0xff]
    %v3128 = vld [vmem:[%s5 + $0x360] sm:$0xff]
    %v3129 = vld [vmem:[%s5 + $0x368] sm:$0xff]
    %v3130 = vld [vmem:[%s5 + $0x370] sm:$0xff]
    %v3131 = vld [vmem:[%s5 + $0x378] sm:$0xff]
    %v3132 = vld [vmem:[%s5 + $0x380] sm:$0xff]
    %v3133 = vld [vmem:[%s5 + $0x388] sm:$0xff]
    %v3134 = vld [vmem:[%s5 + $0x390] sm:$0xff]
    %v3135 = vld [vmem:[%s5 + $0x398] sm:$0xff]
    %v3136 = vld [vmem:[%s5 + $0x3a0] sm:$0xff]
    %v3137 = vld [vmem:[%s5 + $0x3a8] sm:$0xff]
    %v3138 = vld [vmem:[%s5 + $0x3b0] sm:$0xff]
    %v3139 = vld [vmem:[%s5 + $0x3b8] sm:$0xff]
    %v3140 = vld [vmem:[%s5 + $0x3c0] sm:$0xff]
    %v3141 = vld [vmem:[%s5 + $0x3c8] sm:$0xff]
    %v3142 = vld [vmem:[%s5 + $0x3d0] sm:$0xff]
    %v3143 = vld [vmem:[%s5 + $0x3d8] sm:$0xff]
    %v3144 = vld [vmem:[%s5 + $0x3e0] sm:$0xff]
    %v3145 = vld [vmem:[%s5 + $0x3e8] sm:$0xff]
    %v3146 = vld [vmem:[%s5 + $0x3f0] sm:$0xff]
    %v3147 = vld [vmem:[%s5 + $0x3f8] sm:$0xff]
    %v3148 = vld [vmem:[%s6] sm:$0xf]
    %v3150 = vperm.slane %v3148, 0
    %v3151 = vperm.slane %v3148, 1
    %v3152 = vperm.slane %v3148, 2
    %v3153 = vperm.slane %v3148, 3
    %v3286 = vunpack.c.l.b16 %v3020
    %v3287 = vunpack.c.h.b16 %v3020
    %v3288 = vunpack.c.l.b16 %v3021
    %v3289 = vunpack.c.h.b16 %v3021
    %v3290 = vunpack.c.l.b16 %v3022
    %v3291 = vunpack.c.h.b16 %v3022
    %v3292 = vunpack.c.l.b16 %v3023
    %v3293 = vunpack.c.h.b16 %v3023
    %v3294 = vunpack.c.l.b16 %v3024
    %v3295 = vunpack.c.h.b16 %v3024
    %v3296 = vunpack.c.l.b16 %v3025
    %v3297 = vunpack.c.h.b16 %v3025
    %v3298 = vunpack.c.l.b16 %v3026
    %v3299 = vunpack.c.h.b16 %v3026
    %v3300 = vunpack.c.l.b16 %v3027
    %v3301 = vunpack.c.h.b16 %v3027
    %v3302 = vunpack.c.l.b16 %v3028
    %v3303 = vunpack.c.h.b16 %v3028
    %v3304 = vunpack.c.l.b16 %v3029
    %v3305 = vunpack.c.h.b16 %v3029
    %v3306 = vunpack.c.l.b16 %v3030
    %v3307 = vunpack.c.h.b16 %v3030
    %v3308 = vunpack.c.l.b16 %v3031
    %v3309 = vunpack.c.h.b16 %v3031
    %v3310 = vunpack.c.l.b16 %v3032
    %v3311 = vunpack.c.h.b16 %v3032
    %v3312 = vunpack.c.l.b16 %v3033
    %v3313 = vunpack.c.h.b16 %v3033
    %v3314 = vunpack.c.l.b16 %v3034
    %v3315 = vunpack.c.h.b16 %v3034
    %v3316 = vunpack.c.l.b16 %v3035
    %v3317 = vunpack.c.h.b16 %v3035
    %v3318 = vunpack.c.l.b16 %v3036
    %v3319 = vunpack.c.h.b16 %v3036
    %v3320 = vunpack.c.l.b16 %v3037
    %v3321 = vunpack.c.h.b16 %v3037
    %v3322 = vunpack.c.l.b16 %v3038
    %v3323 = vunpack.c.h.b16 %v3038
    %v3324 = vunpack.c.l.b16 %v3039
    %v3325 = vunpack.c.h.b16 %v3039
    %v3326 = vunpack.c.l.b16 %v3040
    %v3327 = vunpack.c.h.b16 %v3040
    %v3328 = vunpack.c.l.b16 %v3041
    %v3329 = vunpack.c.h.b16 %v3041
    %v3330 = vunpack.c.l.b16 %v3042
    %v3331 = vunpack.c.h.b16 %v3042
    %v3332 = vunpack.c.l.b16 %v3043
    %v3333 = vunpack.c.h.b16 %v3043
    %v3334 = vunpack.c.l.b16 %v3044
    %v3335 = vunpack.c.h.b16 %v3044
    %v3336 = vunpack.c.l.b16 %v3045
    %v3337 = vunpack.c.h.b16 %v3045
    %v3338 = vunpack.c.l.b16 %v3046
    %v3339 = vunpack.c.h.b16 %v3046
    %v3340 = vunpack.c.l.b16 %v3047
    %v3341 = vunpack.c.h.b16 %v3047
    %v3342 = vunpack.c.l.b16 %v3048
    %v3343 = vunpack.c.h.b16 %v3048
    %v3344 = vunpack.c.l.b16 %v3049
    %v3345 = vunpack.c.h.b16 %v3049
    %v3346 = vunpack.c.l.b16 %v3050
    %v3347 = vunpack.c.h.b16 %v3050
    %v3348 = vunpack.c.l.b16 %v3051
    %v3349 = vunpack.c.h.b16 %v3051
    %v3350 = vunpack.c.l.b16 %v3052
    %v3351 = vunpack.c.h.b16 %v3052
    %v3352 = vunpack.c.l.b16 %v3053
    %v3353 = vunpack.c.h.b16 %v3053
    %v3354 = vunpack.c.l.b16 %v3054
    %v3355 = vunpack.c.h.b16 %v3054
    %v3356 = vunpack.c.l.b16 %v3055
    %v3357 = vunpack.c.h.b16 %v3055
    %v3358 = vunpack.c.l.b16 %v3056
    %v3359 = vunpack.c.h.b16 %v3056
    %v3360 = vunpack.c.l.b16 %v3057
    %v3361 = vunpack.c.h.b16 %v3057
    %v3362 = vunpack.c.l.b16 %v3058
    %v3363 = vunpack.c.h.b16 %v3058
    %v3364 = vunpack.c.l.b16 %v3059
    %v3365 = vunpack.c.h.b16 %v3059
    %v3366 = vunpack.c.l.b16 %v3060
    %v3367 = vunpack.c.h.b16 %v3060
    %v3368 = vunpack.c.l.b16 %v3061
    %v3369 = vunpack.c.h.b16 %v3061
    %v3370 = vunpack.c.l.b16 %v3062
    %v3371 = vunpack.c.h.b16 %v3062
    %v3372 = vunpack.c.l.b16 %v3063
    %v3373 = vunpack.c.h.b16 %v3063
    %v3374 = vunpack.c.l.b16 %v3064
    %v3375 = vunpack.c.h.b16 %v3064
    %v3376 = vunpack.c.l.b16 %v3065
    %v3377 = vunpack.c.h.b16 %v3065
    %v3378 = vunpack.c.l.b16 %v3066
    %v3379 = vunpack.c.h.b16 %v3066
    %v3380 = vunpack.c.l.b16 %v3067
    %v3381 = vunpack.c.h.b16 %v3067
    %v3382 = vunpack.c.l.b16 %v3068
    %v3383 = vunpack.c.h.b16 %v3068
    %v3384 = vunpack.c.l.b16 %v3069
    %v3385 = vunpack.c.h.b16 %v3069
    %v3386 = vunpack.c.l.b16 %v3070
    %v3387 = vunpack.c.h.b16 %v3070
    %v3388 = vunpack.c.l.b16 %v3071
    %v3389 = vunpack.c.h.b16 %v3071
    %v3390 = vunpack.c.l.b16 %v3072
    %v3391 = vunpack.c.h.b16 %v3072
    %v3392 = vunpack.c.l.b16 %v3073
    %v3393 = vunpack.c.h.b16 %v3073
    %v3394 = vunpack.c.l.b16 %v3074
    %v3395 = vunpack.c.h.b16 %v3074
    %v3396 = vunpack.c.l.b16 %v3075
    %v3397 = vunpack.c.h.b16 %v3075
    %v3398 = vunpack.c.l.b16 %v3076
    %v3399 = vunpack.c.h.b16 %v3076
    %v3400 = vunpack.c.l.b16 %v3077
    %v3401 = vunpack.c.h.b16 %v3077
    %v3402 = vunpack.c.l.b16 %v3078
    %v3403 = vunpack.c.h.b16 %v3078
    %v3404 = vunpack.c.l.b16 %v3079
    %v3405 = vunpack.c.h.b16 %v3079
    %v3406 = vunpack.c.l.b16 %v3080
    %v3407 = vunpack.c.h.b16 %v3080
    %v3408 = vunpack.c.l.b16 %v3081
    %v3409 = vunpack.c.h.b16 %v3081
    %v3410 = vunpack.c.l.b16 %v3082
    %v3411 = vunpack.c.h.b16 %v3082
    %v3412 = vunpack.c.l.b16 %v3083
    %v3413 = vunpack.c.h.b16 %v3083
    %v3414 = vunpack.c.l.b16 %v3084
    %v3415 = vunpack.c.h.b16 %v3084
    %v3416 = vunpack.c.l.b16 %v3085
    %v3417 = vunpack.c.h.b16 %v3085
    %v3418 = vunpack.c.l.b16 %v3086
    %v3419 = vunpack.c.h.b16 %v3086
    %v3420 = vunpack.c.l.b16 %v3087
    %v3421 = vunpack.c.h.b16 %v3087
    %v3422 = vunpack.c.l.b16 %v3088
    %v3423 = vunpack.c.h.b16 %v3088
    %v3424 = vunpack.c.l.b16 %v3089
    %v3425 = vunpack.c.h.b16 %v3089
    %v3426 = vunpack.c.l.b16 %v3090
    %v3427 = vunpack.c.h.b16 %v3090
    %v3428 = vunpack.c.l.b16 %v3091
    %v3429 = vunpack.c.h.b16 %v3091
    %v3430 = vunpack.c.l.b16 %v3092
    %v3431 = vunpack.c.h.b16 %v3092
    %v3432 = vunpack.c.l.b16 %v3093
    %v3433 = vunpack.c.h.b16 %v3093
    %v3434 = vunpack.c.l.b16 %v3094
    %v3435 = vunpack.c.h.b16 %v3094
    %v3436 = vunpack.c.l.b16 %v3095
    %v3437 = vunpack.c.h.b16 %v3095
    %v3438 = vunpack.c.l.b16 %v3096
    %v3439 = vunpack.c.h.b16 %v3096
    %v3440 = vunpack.c.l.b16 %v3097
    %v3441 = vunpack.c.h.b16 %v3097
    %v3442 = vunpack.c.l.b16 %v3098
    %v3443 = vunpack.c.h.b16 %v3098
    %v3444 = vunpack.c.l.b16 %v3099
    %v3445 = vunpack.c.h.b16 %v3099
    %v3446 = vunpack.c.l.b16 %v3100
    %v3447 = vunpack.c.h.b16 %v3100
    %v3448 = vunpack.c.l.b16 %v3101
    %v3449 = vunpack.c.h.b16 %v3101
    %v3450 = vunpack.c.l.b16 %v3102
    %v3451 = vunpack.c.h.b16 %v3102
    %v3452 = vunpack.c.l.b16 %v3103
    %v3453 = vunpack.c.h.b16 %v3103
    %v3454 = vunpack.c.l.b16 %v3104
    %v3455 = vunpack.c.h.b16 %v3104
    %v3456 = vunpack.c.l.b16 %v3105
    %v3457 = vunpack.c.h.b16 %v3105
    %v3458 = vunpack.c.l.b16 %v3106
    %v3459 = vunpack.c.h.b16 %v3106
    %v3460 = vunpack.c.l.b16 %v3107
    %v3461 = vunpack.c.h.b16 %v3107
    %v3462 = vunpack.c.l.b16 %v3108
    %v3463 = vunpack.c.h.b16 %v3108
    %v3464 = vunpack.c.l.b16 %v3109
    %v3465 = vunpack.c.h.b16 %v3109
    %v3466 = vunpack.c.l.b16 %v3110
    %v3467 = vunpack.c.h.b16 %v3110
    %v3468 = vunpack.c.l.b16 %v3111
    %v3469 = vunpack.c.h.b16 %v3111
    %v3470 = vunpack.c.l.b16 %v3112
    %v3471 = vunpack.c.h.b16 %v3112
    %v3472 = vunpack.c.l.b16 %v3113
    %v3473 = vunpack.c.h.b16 %v3113
    %v3474 = vunpack.c.l.b16 %v3114
    %v3475 = vunpack.c.h.b16 %v3114
    %v3476 = vunpack.c.l.b16 %v3115
    %v3477 = vunpack.c.h.b16 %v3115
    %v3478 = vunpack.c.l.b16 %v3116
    %v3479 = vunpack.c.h.b16 %v3116
    %v3480 = vunpack.c.l.b16 %v3117
    %v3481 = vunpack.c.h.b16 %v3117
    %v3482 = vunpack.c.l.b16 %v3118
    %v3483 = vunpack.c.h.b16 %v3118
    %v3484 = vunpack.c.l.b16 %v3119
    %v3485 = vunpack.c.h.b16 %v3119
    %v3486 = vunpack.c.l.b16 %v3120
    %v3487 = vunpack.c.h.b16 %v3120
    %v3488 = vunpack.c.l.b16 %v3121
    %v3489 = vunpack.c.h.b16 %v3121
    %v3490 = vunpack.c.l.b16 %v3122
    %v3491 = vunpack.c.h.b16 %v3122
    %v3492 = vunpack.c.l.b16 %v3123
    %v3493 = vunpack.c.h.b16 %v3123
    %v3494 = vunpack.c.l.b16 %v3124
    %v3495 = vunpack.c.h.b16 %v3124
    %v3496 = vunpack.c.l.b16 %v3125
    %v3497 = vunpack.c.h.b16 %v3125
    %v3498 = vunpack.c.l.b16 %v3126
    %v3499 = vunpack.c.h.b16 %v3126
    %v3500 = vunpack.c.l.b16 %v3127
    %v3501 = vunpack.c.h.b16 %v3127
    %v3502 = vunpack.c.l.b16 %v3128
    %v3503 = vunpack.c.h.b16 %v3128
    %v3504 = vunpack.c.l.b16 %v3129
    %v3505 = vunpack.c.h.b16 %v3129
    %v3506 = vunpack.c.l.b16 %v3130
    %v3507 = vunpack.c.h.b16 %v3130
    %v3508 = vunpack.c.l.b16 %v3131
    %v3509 = vunpack.c.h.b16 %v3131
    %v3510 = vunpack.c.l.b16 %v3132
    %v3511 = vunpack.c.h.b16 %v3132
    %v3512 = vunpack.c.l.b16 %v3133
    %v3513 = vunpack.c.h.b16 %v3133
    %v3514 = vunpack.c.l.b16 %v3134
    %v3515 = vunpack.c.h.b16 %v3134
    %v3516 = vunpack.c.l.b16 %v3135
    %v3517 = vunpack.c.h.b16 %v3135
    %v3518 = vunpack.c.l.b16 %v3136
    %v3519 = vunpack.c.h.b16 %v3136
    %v3520 = vunpack.c.l.b16 %v3137
    %v3521 = vunpack.c.h.b16 %v3137
    %v3522 = vunpack.c.l.b16 %v3138
    %v3523 = vunpack.c.h.b16 %v3138
    %v3524 = vunpack.c.l.b16 %v3139
    %v3525 = vunpack.c.h.b16 %v3139
    %v3526 = vunpack.c.l.b16 %v3140
    %v3527 = vunpack.c.h.b16 %v3140
    %v3528 = vunpack.c.l.b16 %v3141
    %v3529 = vunpack.c.h.b16 %v3141
    %v3530 = vunpack.c.l.b16 %v3142
    %v3531 = vunpack.c.h.b16 %v3142
    %v3532 = vunpack.c.l.b16 %v3143
    %v3533 = vunpack.c.h.b16 %v3143
    %v3534 = vunpack.c.l.b16 %v3144
    %v3535 = vunpack.c.h.b16 %v3144
    %v3536 = vunpack.c.l.b16 %v3145
    %v3537 = vunpack.c.h.b16 %v3145
    %v3538 = vunpack.c.l.b16 %v3146
    %v3539 = vunpack.c.h.b16 %v3146
    %v3540 = vunpack.c.l.b16 %v3147
    %v3541 = vunpack.c.h.b16 %v3147
    %v3542 = vpack.c.b16 %v3290, %v3286
    %v3543 = vpack.c.b16 %v3291, %v3287
    %v3544 = vpack.c.b16 %v3292, %v3288
    %v3545 = vpack.c.b16 %v3293, %v3289
    %v3546 = vpack.c.b16 %v3298, %v3294
    %v3547 = vpack.c.b16 %v3299, %v3295
    %v3548 = vpack.c.b16 %v3300, %v3296
    %v3549 = vpack.c.b16 %v3301, %v3297
    %v3550 = vpack.c.b16 %v3306, %v3302
    %v3551 = vpack.c.b16 %v3307, %v3303
    %v3552 = vpack.c.b16 %v3308, %v3304
    %v3553 = vpack.c.b16 %v3309, %v3305
    %v3554 = vpack.c.b16 %v3314, %v3310
    %v3555 = vpack.c.b16 %v3315, %v3311
    %v3556 = vpack.c.b16 %v3316, %v3312
    %v3557 = vpack.c.b16 %v3317, %v3313
    %v3558 = vpack.c.b16 %v3322, %v3318
    %v3559 = vpack.c.b16 %v3323, %v3319
    %v3560 = vpack.c.b16 %v3324, %v3320
    %v3561 = vpack.c.b16 %v3325, %v3321
    %v3562 = vpack.c.b16 %v3330, %v3326
    %v3563 = vpack.c.b16 %v3331, %v3327
    %v3564 = vpack.c.b16 %v3332, %v3328
    %v3565 = vpack.c.b16 %v3333, %v3329
    %v3566 = vpack.c.b16 %v3338, %v3334
    %v3567 = vpack.c.b16 %v3339, %v3335
    %v3568 = vpack.c.b16 %v3340, %v3336
    %v3569 = vpack.c.b16 %v3341, %v3337
    %v3570 = vpack.c.b16 %v3346, %v3342
    %v3571 = vpack.c.b16 %v3347, %v3343
    %v3572 = vpack.c.b16 %v3348, %v3344
    %v3573 = vpack.c.b16 %v3349, %v3345
    %v3574 = vpack.c.b16 %v3354, %v3350
    %v3575 = vpack.c.b16 %v3355, %v3351
    %v3576 = vpack.c.b16 %v3356, %v3352
    %v3577 = vpack.c.b16 %v3357, %v3353
    %v3578 = vpack.c.b16 %v3362, %v3358
    %v3579 = vpack.c.b16 %v3363, %v3359
    %v3580 = vpack.c.b16 %v3364, %v3360
    %v3581 = vpack.c.b16 %v3365, %v3361
    %v3582 = vpack.c.b16 %v3370, %v3366
    %v3583 = vpack.c.b16 %v3371, %v3367
    %v3584 = vpack.c.b16 %v3372, %v3368
    %v3585 = vpack.c.b16 %v3373, %v3369
    %v3586 = vpack.c.b16 %v3378, %v3374
    %v3587 = vpack.c.b16 %v3379, %v3375
    %v3588 = vpack.c.b16 %v3380, %v3376
    %v3589 = vpack.c.b16 %v3381, %v3377
    %v3590 = vpack.c.b16 %v3386, %v3382
    %v3591 = vpack.c.b16 %v3387, %v3383
    %v3592 = vpack.c.b16 %v3388, %v3384
    %v3593 = vpack.c.b16 %v3389, %v3385
    %v3594 = vpack.c.b16 %v3394, %v3390
    %v3595 = vpack.c.b16 %v3395, %v3391
    %v3596 = vpack.c.b16 %v3396, %v3392
    %v3597 = vpack.c.b16 %v3397, %v3393
    %v3598 = vpack.c.b16 %v3402, %v3398
    %v3599 = vpack.c.b16 %v3403, %v3399
    %v3600 = vpack.c.b16 %v3404, %v3400
    %v3601 = vpack.c.b16 %v3405, %v3401
    %v3602 = vpack.c.b16 %v3410, %v3406
    %v3603 = vpack.c.b16 %v3411, %v3407
    %v3604 = vpack.c.b16 %v3412, %v3408
    %v3605 = vpack.c.b16 %v3413, %v3409
    %v3606 = vpack.c.b16 %v3418, %v3414
    %v3607 = vpack.c.b16 %v3419, %v3415
    %v3608 = vpack.c.b16 %v3420, %v3416
    %v3609 = vpack.c.b16 %v3421, %v3417
    %v3610 = vpack.c.b16 %v3426, %v3422
    %v3611 = vpack.c.b16 %v3427, %v3423
    %v3612 = vpack.c.b16 %v3428, %v3424
    %v3613 = vpack.c.b16 %v3429, %v3425
    %v3614 = vpack.c.b16 %v3434, %v3430
    %v3615 = vpack.c.b16 %v3435, %v3431
    %v3616 = vpack.c.b16 %v3436, %v3432
    %v3617 = vpack.c.b16 %v3437, %v3433
    %v3618 = vpack.c.b16 %v3442, %v3438
    %v3619 = vpack.c.b16 %v3443, %v3439
    %v3620 = vpack.c.b16 %v3444, %v3440
    %v3621 = vpack.c.b16 %v3445, %v3441
    %v3622 = vpack.c.b16 %v3450, %v3446
    %v3623 = vpack.c.b16 %v3451, %v3447
    %v3624 = vpack.c.b16 %v3452, %v3448
    %v3625 = vpack.c.b16 %v3453, %v3449
    %v3626 = vpack.c.b16 %v3458, %v3454
    %v3627 = vpack.c.b16 %v3459, %v3455
    %v3628 = vpack.c.b16 %v3460, %v3456
    %v3629 = vpack.c.b16 %v3461, %v3457
    %v3630 = vpack.c.b16 %v3466, %v3462
    %v3631 = vpack.c.b16 %v3467, %v3463
    %v3632 = vpack.c.b16 %v3468, %v3464
    %v3633 = vpack.c.b16 %v3469, %v3465
    %v3634 = vpack.c.b16 %v3474, %v3470
    %v3635 = vpack.c.b16 %v3475, %v3471
    %v3636 = vpack.c.b16 %v3476, %v3472
    %v3637 = vpack.c.b16 %v3477, %v3473
    %v3638 = vpack.c.b16 %v3482, %v3478
    %v3639 = vpack.c.b16 %v3483, %v3479
    %v3640 = vpack.c.b16 %v3484, %v3480
    %v3641 = vpack.c.b16 %v3485, %v3481
    %v3642 = vpack.c.b16 %v3490, %v3486
    %v3643 = vpack.c.b16 %v3491, %v3487
    %v3644 = vpack.c.b16 %v3492, %v3488
    %v3645 = vpack.c.b16 %v3493, %v3489
    %v3646 = vpack.c.b16 %v3498, %v3494
    %v3647 = vpack.c.b16 %v3499, %v3495
    %v3648 = vpack.c.b16 %v3500, %v3496
    %v3649 = vpack.c.b16 %v3501, %v3497
    %v3650 = vpack.c.b16 %v3506, %v3502
    %v3651 = vpack.c.b16 %v3507, %v3503
    %v3652 = vpack.c.b16 %v3508, %v3504
    %v3653 = vpack.c.b16 %v3509, %v3505
    %v3654 = vpack.c.b16 %v3514, %v3510
    %v3655 = vpack.c.b16 %v3515, %v3511
    %v3656 = vpack.c.b16 %v3516, %v3512
    %v3657 = vpack.c.b16 %v3517, %v3513
    %v3658 = vpack.c.b16 %v3522, %v3518
    %v3659 = vpack.c.b16 %v3523, %v3519
    %v3660 = vpack.c.b16 %v3524, %v3520
    %v3661 = vpack.c.b16 %v3525, %v3521
    %v3662 = vpack.c.b16 %v3530, %v3526
    %v3663 = vpack.c.b16 %v3531, %v3527
    %v3664 = vpack.c.b16 %v3532, %v3528
    %v3665 = vpack.c.b16 %v3533, %v3529
    %v3666 = vpack.c.b16 %v3538, %v3534
    %v3667 = vpack.c.b16 %v3539, %v3535
    %v3668 = vpack.c.b16 %v3540, %v3536
    %v3669 = vpack.c.b16 %v3541, %v3537
    %3798 = vmatpush.bf16.msra.mxu0 %v3570
    %3799 = vmatpush.bf16.msra.mxu0 %v3566
    %3800 = vmatpush.bf16.msra.mxu0 %v3562
    %3801 = vmatpush.bf16.msra.mxu0 %v3558
    %3802 = vmatpush.bf16.msra.mxu0 %v3554
    %3803 = vmatpush.bf16.msra.mxu0 %v3550
    %3804 = vmatpush.bf16.msra.mxu0 %v3546
    %3805 = vmatpush.bf16.msra.mxu0 %v3542
    %3806 = vmatmul.bf16.gmra.mxu0 %v3016
    %v3807 = vpop.f32.mrf.mxu0
    %v3808 = vadd.f32 %v3150, %v3807
    %v3809 = vpop.f32.mrf.mxu0
    %3810 = vdwg.mxu0
    %3811 = vmatpush.bf16.msra.mxu0 %v3602
    %3812 = vmatpush.bf16.msra.mxu0 %v3598
    %3813 = vmatpush.bf16.msra.mxu0 %v3594
    %3814 = vmatpush.bf16.msra.mxu0 %v3590
    %3815 = vmatpush.bf16.msra.mxu0 %v3586
    %3816 = vmatpush.bf16.msra.mxu0 %v3582
    %3817 = vmatpush.bf16.msra.mxu0 %v3578
    %3818 = vmatpush.bf16.msra.mxu0 %v3574
    %3819 = vmatmul.bf16.gmra.mxu0 %v3017
    %v3820 = vpop.f32.mrf.mxu0
    %v3821 = vadd.f32 %v3808, %v3820
    %v3822 = vpop.f32.mrf.mxu0
    %3823 = vdwg.mxu0
    %3824 = vmatpush.bf16.msra.mxu0 %v3634
    %3825 = vmatpush.bf16.msra.mxu0 %v3630
    %3826 = vmatpush.bf16.msra.mxu0 %v3626
    %3827 = vmatpush.bf16.msra.mxu0 %v3622
    %3828 = vmatpush.bf16.msra.mxu0 %v3618
    %3829 = vmatpush.bf16.msra.mxu0 %v3614
    %3830 = vmatpush.bf16.msra.mxu0 %v3610
    %3831 = vmatpush.bf16.msra.mxu0 %v3606
    %3832 = vmatmul.bf16.gmra.mxu0 %v3018
    %v3833 = vpop.f32.mrf.mxu0
    %v3834 = vadd.f32 %v3821, %v3833
    %v3835 = vpop.f32.mrf.mxu0
    %3836 = vdwg.mxu0
    %3837 = vmatpush.bf16.msra.mxu0 %v3666
    %3838 = vmatpush.bf16.msra.mxu0 %v3662
    %3839 = vmatpush.bf16.msra.mxu0 %v3658
    %3840 = vmatpush.bf16.msra.mxu0 %v3654
    %3841 = vmatpush.bf16.msra.mxu0 %v3650
    %3842 = vmatpush.bf16.msra.mxu0 %v3646
    %3843 = vmatpush.bf16.msra.mxu0 %v3642
    %3844 = vmatpush.bf16.msra.mxu0 %v3638
    %3845 = vmatmul.bf16.gmra.mxu0 %v3019
    %v3846 = vpop.f32.mrf.mxu0
    %v3847 = vadd.f32 %v3834, %v3846
    %v3848 = vpop.f32.mrf.mxu0
    %3849 = vdwg.mxu0
    %3850 = vmatpush.bf16.msra.mxu0 %v3571
    %3851 = vmatpush.bf16.msra.mxu0 %v3567
    %3852 = vmatpush.bf16.msra.mxu0 %v3563
    %3853 = vmatpush.bf16.msra.mxu0 %v3559
    %3854 = vmatpush.bf16.msra.mxu0 %v3555
    %3855 = vmatpush.bf16.msra.mxu0 %v3551
    %3856 = vmatpush.bf16.msra.mxu0 %v3547
    %3857 = vmatpush.bf16.msra.mxu0 %v3543
    %3858 = vmatmul.bf16.gmra.mxu0 %v3016
    %v3859 = vpop.f32.mrf.mxu0
    %v3860 = vadd.f32 %v3151, %v3859
    %v3861 = vpop.f32.mrf.mxu0
    %3862 = vdwg.mxu0
    %3863 = vmatpush.bf16.msra.mxu0 %v3603
    %3864 = vmatpush.bf16.msra.mxu0 %v3599
    %3865 = vmatpush.bf16.msra.mxu0 %v3595
    %3866 = vmatpush.bf16.msra.mxu0 %v3591
    %3867 = vmatpush.bf16.msra.mxu0 %v3587
    %3868 = vmatpush.bf16.msra.mxu0 %v3583
    %3869 = vmatpush.bf16.msra.mxu0 %v3579
    %3870 = vmatpush.bf16.msra.mxu0 %v3575
    %3871 = vmatmul.bf16.gmra.mxu0 %v3017
    %v3872 = vpop.f32.mrf.mxu0
    %v3873 = vadd.f32 %v3860, %v3872
    %v3874 = vpop.f32.mrf.mxu0
    %3875 = vdwg.mxu0
    %3876 = vmatpush.bf16.msra.mxu0 %v3635
    %3877 = vmatpush.bf16.msra.mxu0 %v3631
    %3878 = vmatpush.bf16.msra.mxu0 %v3627
    %3879 = vmatpush.bf16.msra.mxu0 %v3623
    %3880 = vmatpush.bf16.msra.mxu0 %v3619
    %3881 = vmatpush.bf16.msra.mxu0 %v3615
    %3882 = vmatpush.bf16.msra.mxu0 %v3611
    %3883 = vmatpush.bf16.msra.mxu0 %v3607
    %3884 = vmatmul.bf16.gmra.mxu0 %v3018
    %v3885 = vpop.f32.mrf.mxu0
    %v3886 = vadd.f32 %v3873, %v3885
    %v3887 = vpop.f32.mrf.mxu0
    %3888 = vdwg.mxu0
    %3889 = vmatpush.bf16.msra.mxu0 %v3667
    %3890 = vmatpush.bf16.msra.mxu0 %v3663
    %3891 = vmatpush.bf16.msra.mxu0 %v3659
    %3892 = vmatpush.bf16.msra.mxu0 %v3655
    %3893 = vmatpush.bf16.msra.mxu0 %v3651
    %3894 = vmatpush.bf16.msra.mxu0 %v3647
    %3895 = vmatpush.bf16.msra.mxu0 %v3643
    %3896 = vmatpush.bf16.msra.mxu0 %v3639
    %3897 = vmatmul.bf16.gmra.mxu0 %v3019
    %v3898 = vpop.f32.mrf.mxu0
    %v3899 = vadd.f32 %v3886, %v3898
    %v3900 = vpop.f32.mrf.mxu0
    %3901 = vdwg.mxu0
    %3902 = vmatpush.bf16.msra.mxu0 %v3572
    %3903 = vmatpush.bf16.msra.mxu0 %v3568
    %3904 = vmatpush.bf16.msra.mxu0 %v3564
    %3905 = vmatpush.bf16.msra.mxu0 %v3560
    %3906 = vmatpush.bf16.msra.mxu0 %v3556
    %3907 = vmatpush.bf16.msra.mxu0 %v3552
    %3908 = vmatpush.bf16.msra.mxu0 %v3548
    %3909 = vmatpush.bf16.msra.mxu0 %v3544
    %3910 = vmatmul.bf16.gmra.mxu0 %v3016
    %v3911 = vpop.f32.mrf.mxu0
    %v3912 = vadd.f32 %v3152, %v3911
    %v3913 = vpop.f32.mrf.mxu0
    %3914 = vdwg.mxu0
    %3915 = vmatpush.bf16.msra.mxu0 %v3604
    %3916 = vmatpush.bf16.msra.mxu0 %v3600
    %3917 = vmatpush.bf16.msra.mxu0 %v3596
    %3918 = vmatpush.bf16.msra.mxu0 %v3592
    %3919 = vmatpush.bf16.msra.mxu0 %v3588
    %3920 = vmatpush.bf16.msra.mxu0 %v3584
    %3921 = vmatpush.bf16.msra.mxu0 %v3580
    %3922 = vmatpush.bf16.msra.mxu0 %v3576
    %3923 = vmatmul.bf16.gmra.mxu0 %v3017
    %v3924 = vpop.f32.mrf.mxu0
    %v3925 = vadd.f32 %v3912, %v3924
    %v3926 = vpop.f32.mrf.mxu0
    %3927 = vdwg.mxu0
    %3928 = vmatpush.bf16.msra.mxu0 %v3636
    %3929 = vmatpush.bf16.msra.mxu0 %v3632
    %3930 = vmatpush.bf16.msra.mxu0 %v3628
    %3931 = vmatpush.bf16.msra.mxu0 %v3624
    %3932 = vmatpush.bf16.msra.mxu0 %v3620
    %3933 = vmatpush.bf16.msra.mxu0 %v3616
    %3934 = vmatpush.bf16.msra.mxu0 %v3612
    %3935 = vmatpush.bf16.msra.mxu0 %v3608
    %3936 = vmatmul.bf16.gmra.mxu0 %v3018
    %v3937 = vpop.f32.mrf.mxu0
    %v3938 = vadd.f32 %v3925, %v3937
    %v3939 = vpop.f32.mrf.mxu0
    %3940 = vdwg.mxu0
    %3941 = vmatpush.bf16.msra.mxu0 %v3668
    %3942 = vmatpush.bf16.msra.mxu0 %v3664
    %3943 = vmatpush.bf16.msra.mxu0 %v3660
    %3944 = vmatpush.bf16.msra.mxu0 %v3656
    %3945 = vmatpush.bf16.msra.mxu0 %v3652
    %3946 = vmatpush.bf16.msra.mxu0 %v3648
    %3947 = vmatpush.bf16.msra.mxu0 %v3644
    %3948 = vmatpush.bf16.msra.mxu0 %v3640
    %3949 = vmatmul.bf16.gmra.mxu0 %v3019
    %v3950 = vpop.f32.mrf.mxu0
    %v3951 = vadd.f32 %v3938, %v3950
    %v3952 = vpop.f32.mrf.mxu0
    %3953 = vdwg.mxu0
    %3954 = vmatpush.bf16.msra.mxu0 %v3573
    %3955 = vmatpush.bf16.msra.mxu0 %v3569
    %3956 = vmatpush.bf16.msra.mxu0 %v3565
    %3957 = vmatpush.bf16.msra.mxu0 %v3561
    %3958 = vmatpush.bf16.msra.mxu0 %v3557
    %3959 = vmatpush.bf16.msra.mxu0 %v3553
    %3960 = vmatpush.bf16.msra.mxu0 %v3549
    %3961 = vmatpush.bf16.msra.mxu0 %v3545
    %3962 = vmatmul.bf16.gmra.mxu0 %v3016
    %v3963 = vpop.f32.mrf.mxu0
    %v3964 = vadd.f32 %v3153, %v3963
    %v3965 = vpop.f32.mrf.mxu0
    %3966 = vdwg.mxu0
    %3967 = vmatpush.bf16.msra.mxu0 %v3605
    %3968 = vmatpush.bf16.msra.mxu0 %v3601
    %3969 = vmatpush.bf16.msra.mxu0 %v3597
    %3970 = vmatpush.bf16.msra.mxu0 %v3593
    %3971 = vmatpush.bf16.msra.mxu0 %v3589
    %3972 = vmatpush.bf16.msra.mxu0 %v3585
    %3973 = vmatpush.bf16.msra.mxu0 %v3581
    %3974 = vmatpush.bf16.msra.mxu0 %v3577
    %3975 = vmatmul.bf16.gmra.mxu0 %v3017
    %v3976 = vpop.f32.mrf.mxu0
    %v3977 = vadd.f32 %v3964, %v3976
    %v3978 = vpop.f32.mrf.mxu0
    %3979 = vdwg.mxu0
    %3980 = vmatpush.bf16.msra.mxu0 %v3637
    %3981 = vmatpush.bf16.msra.mxu0 %v3633
    %3982 = vmatpush.bf16.msra.mxu0 %v3629
    %3983 = vmatpush.bf16.msra.mxu0 %v3625
    %3984 = vmatpush.bf16.msra.mxu0 %v3621
    %3985 = vmatpush.bf16.msra.mxu0 %v3617
    %3986 = vmatpush.bf16.msra.mxu0 %v3613
    %3987 = vmatpush.bf16.msra.mxu0 %v3609
    %3988 = vmatmul.bf16.gmra.mxu0 %v3018
    %v3989 = vpop.f32.mrf.mxu0
    %v3990 = vadd.f32 %v3977, %v3989
    %v3991 = vpop.f32.mrf.mxu0
    %3992 = vdwg.mxu0
    %3993 = vmatpush.bf16.msra.mxu0 %v3669
    %3994 = vmatpush.bf16.msra.mxu0 %v3665
    %3995 = vmatpush.bf16.msra.mxu0 %v3661
    %3996 = vmatpush.bf16.msra.mxu0 %v3657
    %3997 = vmatpush.bf16.msra.mxu0 %v3653
    %3998 = vmatpush.bf16.msra.mxu0 %v3649
    %3999 = vmatpush.bf16.msra.mxu0 %v3645
    %4000 = vmatpush.bf16.msra.mxu0 %v3641
    %4001 = vmatmul.bf16.gmra.mxu0 %v3019
    %v4002 = vpop.f32.mrf.mxu0
    %v4003 = vadd.f32 %v3990, %v4002
    %v4004 = vpop.f32.mrf.mxu0
    %4005 = vdwg.mxu0
    %v4006 = vmax.f32 %v3847, 0.0
    %v4007 = vmax.f32 %v3899, 0.0
    %v4008 = vmax.f32 %v3951, 0.0
    %v4009 = vmax.f32 %v4003, 0.0
    %v4010 = vpack.c.bf16 %v4006, %v4006
    %v4011 = vpack.c.bf16 %v4007, %v4007
    %v4012 = vpack.c.bf16 %v4008, %v4008
    %v4013 = vpack.c.bf16 %v4009, %v4009
    %v4014 = vld [vmem:[%s7] sm:$0xff]
    %v4015 = vld [vmem:[%s7 + $0x8] sm:$0xff]
    %v4016 = vld [vmem:[%s7 + $0x10] sm:$0xff]
    %v4017 = vld [vmem:[%s7 + $0x18] sm:$0xff]
    %v4018 = vld [vmem:[%s7 + $0x20] sm:$0xff]
    %v4019 = vld [vmem:[%s7 + $0x28] sm:$0xff]
    %v4020 = vld [vmem:[%s7 + $0x30] sm:$0xff]
    %v4021 = vld [vmem:[%s7 + $0x38] sm:$0xff]
    %v4022 = vld [vmem:[%s7 + $0x40] sm:$0xff]
    %v4023 = vld [vmem:[%s7 + $0x48] sm:$0xff]
    %v4024 = vld [vmem:[%s7 + $0x50] sm:$0xff]
    %v4025 = vld [vmem:[%s7 + $0x58] sm:$0xff]
    %v4026 = vld [vmem:[%s7 + $0x60] sm:$0xff]
    %v4027 = vld [vmem:[%s7 + $0x68] sm:$0xff]
    %v4028 = vld [vmem:[%s7 + $0x70] sm:$0xff]
    %v4029 = vld [vmem:[%s7 + $0x78] sm:$0xff]
    %v4030 = vld [vmem:[%s7 + $0x80] sm:$0xff]
    %v4031 = vld [vmem:[%s7 + $0x88] sm:$0xff]
    %v4032 = vld [vmem:[%s7 + $0x90] sm:$0xff]
    %v4033 = vld [vmem:[%s7 + $0x98] sm:$0xff]
    %v4034 = vld [vmem:[%s7 + $0xa0] sm:$0xff]
    %v4035 = vld [vmem:[%s7 + $0xa8] sm:$0xff]
    %v4036 = vld [vmem:[%s7 + $0xb0] sm:$0xff]
    %v4037 = vld [vmem:[%s7 + $0xb8] sm:$0xff]
    %v4038 = vld [vmem:[%s7 + $0xc0] sm:$0xff]
    %v4039 = vld [vmem:[%s7 + $0xc8] sm:$0xff]
    %v4040 = vld [vmem:[%s7 + $0xd0] sm:$0xff]
    %v4041 = vld [vmem:[%s7 + $0xd8] sm:$0xff]
    %v4042 = vld [vmem:[%s7 + $0xe0] sm:$0xff]
    %v4043 = vld [vmem:[%s7 + $0xe8] sm:$0xff]
    %v4044 = vld [vmem:[%s7 + $0xf0] sm:$0xff]
    %v4045 = vld [vmem:[%s7 + $0xf8] sm:$0xff]
    %v4046 = vld [vmem:[%s7 + $0x100] sm:$0xff]
    %v4047 = vld [vmem:[%s7 + $0x108] sm:$0xff]
    %v4048 = vld [vmem:[%s7 + $0x110] sm:$0xff]
    %v4049 = vld [vmem:[%s7 + $0x118] sm:$0xff]
    %v4050 = vld [vmem:[%s7 + $0x120] sm:$0xff]
    %v4051 = vld [vmem:[%s7 + $0x128] sm:$0xff]
    %v4052 = vld [vmem:[%s7 + $0x130] sm:$0xff]
    %v4053 = vld [vmem:[%s7 + $0x138] sm:$0xff]
    %v4054 = vld [vmem:[%s7 + $0x140] sm:$0xff]
    %v4055 = vld [vmem:[%s7 + $0x148] sm:$0xff]
    %v4056 = vld [vmem:[%s7 + $0x150] sm:$0xff]
    %v4057 = vld [vmem:[%s7 + $0x158] sm:$0xff]
    %v4058 = vld [vmem:[%s7 + $0x160] sm:$0xff]
    %v4059 = vld [vmem:[%s7 + $0x168] sm:$0xff]
    %v4060 = vld [vmem:[%s7 + $0x170] sm:$0xff]
    %v4061 = vld [vmem:[%s7 + $0x178] sm:$0xff]
    %v4062 = vld [vmem:[%s7 + $0x180] sm:$0xff]
    %v4063 = vld [vmem:[%s7 + $0x188] sm:$0xff]
    %v4064 = vld [vmem:[%s7 + $0x190] sm:$0xff]
    %v4065 = vld [vmem:[%s7 + $0x198] sm:$0xff]
    %v4066 = vld [vmem:[%s7 + $0x1a0] sm:$0xff]
    %v4067 = vld [vmem:[%s7 + $0x1a8] sm:$0xff]
    %v4068 = vld [vmem:[%s7 + $0x1b0] sm:$0xff]
    %v4069 = vld [vmem:[%s7 + $0x1b8] sm:$0xff]
    %v4070 = vld [vmem:[%s7 + $0x1c0] sm:$0xff]
    %v4071 = vld [vmem:[%s7 + $0x1c8] sm:$0xff]
    %v4072 = vld [vmem:[%s7 + $0x1d0] sm:$0xff]
    %v4073 = vld [vmem:[%s7 + $0x1d8] sm:$0xff]
    %v4074 = vld [vmem:[%s7 + $0x1e0] sm:$0xff]
    %v4075 = vld [vmem:[%s7 + $0x1e8] sm:$0xff]
    %v4076 = vld [vmem:[%s7 + $0x1f0] sm:$0xff]
    %v4077 = vld [vmem:[%s7 + $0x1f8] sm:$0xff]
    %v4078 = vld [vmem:[%s7 + $0x200] sm:$0xff]
    %v4079 = vld [vmem:[%s7 + $0x208] sm:$0xff]
    %v4080 = vld [vmem:[%s7 + $0x210] sm:$0xff]
    %v4081 = vld [vmem:[%s7 + $0x218] sm:$0xff]
    %v4082 = vld [vmem:[%s7 + $0x220] sm:$0xff]
    %v4083 = vld [vmem:[%s7 + $0x228] sm:$0xff]
    %v4084 = vld [vmem:[%s7 + $0x230] sm:$0xff]
    %v4085 = vld [vmem:[%s7 + $0x238] sm:$0xff]
    %v4086 = vld [vmem:[%s7 + $0x240] sm:$0xff]
    %v4087 = vld [vmem:[%s7 + $0x248] sm:$0xff]
    %v4088 = vld [vmem:[%s7 + $0x250] sm:$0xff]
    %v4089 = vld [vmem:[%s7 + $0x258] sm:$0xff]
    %v4090 = vld [vmem:[%s7 + $0x260] sm:$0xff]
    %v4091 = vld [vmem:[%s7 + $0x268] sm:$0xff]
    %v4092 = vld [vmem:[%s7 + $0x270] sm:$0xff]
    %v4093 = vld [vmem:[%s7 + $0x278] sm:$0xff]
    %v4094 = vld [vmem:[%s7 + $0x280] sm:$0xff]
    %v4095 = vld [vmem:[%s7 + $0x288] sm:$0xff]
    %v4096 = vld [vmem:[%s7 + $0x290] sm:$0xff]
    %v4097 = vld [vmem:[%s7 + $0x298] sm:$0xff]
    %v4098 = vld [vmem:[%s7 + $0x2a0] sm:$0xff]
    %v4099 = vld [vmem:[%s7 + $0x2a8] sm:$0xff]
    %v4100 = vld [vmem:[%s7 + $0x2b0] sm:$0xff]
    %v4101 = vld [vmem:[%s7 + $0x2b8] sm:$0xff]
    %v4102 = vld [vmem:[%s7 + $0x2c0] sm:$0xff]
    %v4103 = vld [vmem:[%s7 + $0x2c8] sm:$0xff]
    %v4104 = vld [vmem:[%s7 + $0x2d0] sm:$0xff]
    %v4105 = vld [vmem:[%s7 + $0x2d8] sm:$0xff]
    %v4106 = vld [vmem:[%s7 + $0x2e0] sm:$0xff]
    %v4107 = vld [vmem:[%s7 + $0x2e8] sm:$0xff]
    %v4108 = vld [vmem:[%s7 + $0x2f0] sm:$0xff]
    %v4109 = vld [vmem:[%s7 + $0x2f8] sm:$0xff]
    %v4110 = vld [vmem:[%s7 + $0x300] sm:$0xff]
    %v4111 = vld [vmem:[%s7 + $0x308] sm:$0xff]
    %v4112 = vld [vmem:[%s7 + $0x310] sm:$0xff]
    %v4113 = vld [vmem:[%s7 + $0x318] sm:$0xff]
    %v4114 = vld [vmem:[%s7 + $0x320] sm:$0xff]
    %v4115 = vld [vmem:[%s7 + $0x328] sm:$0xff]
    %v4116 = vld [vmem:[%s7 + $0x330] sm:$0xff]
    %v4117 = vld [vmem:[%s7 + $0x338] sm:$0xff]
    %v4118 = vld [vmem:[%s7 + $0x340] sm:$0xff]
    %v4119 = vld [vmem:[%s7 + $0x348] sm:$0xff]
    %v4120 = vld [vmem:[%s7 + $0x350] sm:$0xff]
    %v4121 = vld [vmem:[%s7 + $0x358] sm:$0xff]
    %v4122 = vld [vmem:[%s7 + $0x360] sm:$0xff]
    %v4123 = vld [vmem:[%s7 + $0x368] sm:$0xff]
    %v4124 = vld [vmem:[%s7 + $0x370] sm:$0xff]
    %v4125 = vld [vmem:[%s7 + $0x378] sm:$0xff]
    %v4126 = vld [vmem:[%s7 + $0x380] sm:$0xff]
    %v4127 = vld [vmem:[%s7 + $0x388] sm:$0xff]
    %v4128 = vld [vmem:[%s7 + $0x390] sm:$0xff]
    %v4129 = vld [vmem:[%s7 + $0x398] sm:$0xff]
    %v4130 = vld [vmem:[%s7 + $0x3a0] sm:$0xff]
    %v4131 = vld [vmem:[%s7 + $0x3a8] sm:$0xff]
    %v4132 = vld [vmem:[%s7 + $0x3b0] sm:$0xff]
    %v4133 = vld [vmem:[%s7 + $0x3b8] sm:$0xff]
    %v4134 = vld [vmem:[%s7 + $0x3c0] sm:$0xff]
    %v4135 = vld [vmem:[%s7 + $0x3c8] sm:$0xff]
    %v4136 = vld [vmem:[%s7 + $0x3d0] sm:$0xff]
    %v4137 = vld [vmem:[%s7 + $0x3d8] sm:$0xff]
    %v4138 = vld [vmem:[%s7 + $0x3e0] sm:$0xff]
    %v4139 = vld [vmem:[%s7 + $0x3e8] sm:$0xff]
    %v4140 = vld [vmem:[%s7 + $0x3f0] sm:$0xff]
    %v4141 = vld [vmem:[%s7 + $0x3f8] sm:$0xff]
    %v4142 = vld [vmem:[%s7 + $0x400] sm:$0xff]
    %v4143 = vld [vmem:[%s7 + $0x408] sm:$0xff]
    %v4144 = vld [vmem:[%s7 + $0x410] sm:$0xff]
    %v4145 = vld [vmem:[%s7 + $0x418] sm:$0xff]
    %v4146 = vld [vmem:[%s7 + $0x420] sm:$0xff]
    %v4147 = vld [vmem:[%s7 + $0x428] sm:$0xff]
    %v4148 = vld [vmem:[%s7 + $0x430] sm:$0xff]
    %v4149 = vld [vmem:[%s7 + $0x438] sm:$0xff]
    %v4150 = vld [vmem:[%s7 + $0x440] sm:$0xff]
    %v4151 = vld [vmem:[%s7 + $0x448] sm:$0xff]
    %v4152 = vld [vmem:[%s7 + $0x450] sm:$0xff]
    %v4153 = vld [vmem:[%s7 + $0x458] sm:$0xff]
    %v4154 = vld [vmem:[%s7 + $0x460] sm:$0xff]
    %v4155 = vld [vmem:[%s7 + $0x468] sm:$0xff]
    %v4156 = vld [vmem:[%s7 + $0x470] sm:$0xff]
    %v4157 = vld [vmem:[%s7 + $0x478] sm:$0xff]
    %v4158 = vld [vmem:[%s7 + $0x480] sm:$0xff]
    %v4159 = vld [vmem:[%s7 + $0x488] sm:$0xff]
    %v4160 = vld [vmem:[%s7 + $0x490] sm:$0xff]
    %v4161 = vld [vmem:[%s7 + $0x498] sm:$0xff]
    %v4162 = vld [vmem:[%s7 + $0x4a0] sm:$0xff]
    %v4163 = vld [vmem:[%s7 + $0x4a8] sm:$0xff]
    %v4164 = vld [vmem:[%s7 + $0x4b0] sm:$0xff]
    %v4165 = vld [vmem:[%s7 + $0x4b8] sm:$0xff]
    %v4166 = vld [vmem:[%s7 + $0x4c0] sm:$0xff]
    %v4167 = vld [vmem:[%s7 + $0x4c8] sm:$0xff]
    %v4168 = vld [vmem:[%s7 + $0x4d0] sm:$0xff]
    %v4169 = vld [vmem:[%s7 + $0x4d8] sm:$0xff]
    %v4170 = vld [vmem:[%s7 + $0x4e0] sm:$0xff]
    %v4171 = vld [vmem:[%s7 + $0x4e8] sm:$0xff]
    %v4172 = vld [vmem:[%s7 + $0x4f0] sm:$0xff]
    %v4173 = vld [vmem:[%s7 + $0x4f8] sm:$0xff]
    %v4174 = vld [vmem:[%s7 + $0x500] sm:$0xff]
    %v4175 = vld [vmem:[%s7 + $0x508] sm:$0xff]
    %v4176 = vld [vmem:[%s7 + $0x510] sm:$0xff]
    %v4177 = vld [vmem:[%s7 + $0x518] sm:$0xff]
    %v4178 = vld [vmem:[%s7 + $0x520] sm:$0xff]
    %v4179 = vld [vmem:[%s7 + $0x528] sm:$0xff]
    %v4180 = vld [vmem:[%s7 + $0x530] sm:$0xff]
    %v4181 = vld [vmem:[%s7 + $0x538] sm:$0xff]
    %v4182 = vld [vmem:[%s7 + $0x540] sm:$0xff]
    %v4183 = vld [vmem:[%s7 + $0x548] sm:$0xff]
    %v4184 = vld [vmem:[%s7 + $0x550] sm:$0xff]
    %v4185 = vld [vmem:[%s7 + $0x558] sm:$0xff]
    %v4186 = vld [vmem:[%s7 + $0x560] sm:$0xff]
    %v4187 = vld [vmem:[%s7 + $0x568] sm:$0xff]
    %v4188 = vld [vmem:[%s7 + $0x570] sm:$0xff]
    %v4189 = vld [vmem:[%s7 + $0x578] sm:$0xff]
    %v4190 = vld [vmem:[%s7 + $0x580] sm:$0xff]
    %v4191 = vld [vmem:[%s7 + $0x588] sm:$0xff]
    %v4192 = vld [vmem:[%s7 + $0x590] sm:$0xff]
    %v4193 = vld [vmem:[%s7 + $0x598] sm:$0xff]
    %v4194 = vld [vmem:[%s7 + $0x5a0] sm:$0xff]
    %v4195 = vld [vmem:[%s7 + $0x5a8] sm:$0xff]
    %v4196 = vld [vmem:[%s7 + $0x5b0] sm:$0xff]
    %v4197 = vld [vmem:[%s7 + $0x5b8] sm:$0xff]
    %v4198 = vld [vmem:[%s7 + $0x5c0] sm:$0xff]
    %v4199 = vld [vmem:[%s7 + $0x5c8] sm:$0xff]
    %v4200 = vld [vmem:[%s7 + $0x5d0] sm:$0xff]
    %v4201 = vld [vmem:[%s7 + $0x5d8] sm:$0xff]
    %v4202 = vld [vmem:[%s7 + $0x5e0] sm:$0xff]
    %v4203 = vld [vmem:[%s7 + $0x5e8] sm:$0xff]
    %v4204 = vld [vmem:[%s7 + $0x5f0] sm:$0xff]
    %v4205 = vld [vmem:[%s7 + $0x5f8] sm:$0xff]
    %v4206 = vld [vmem:[%s8] sm:$0x3f]
    %v4208 = vperm.slane %v4206, 0
    %v4209 = vperm.slane %v4206, 1
    %v4210 = vperm.slane %v4206, 2
    %v4211 = vperm.slane %v4206, 3
    %v4212 = vperm.slane %v4206, 4
    %v4213 = vperm.slane %v4206, 5
    %v4412 = vunpack.c.l.b16 %v4014
    %v4413 = vunpack.c.h.b16 %v4014
    %v4414 = vunpack.c.l.b16 %v4015
    %v4415 = vunpack.c.h.b16 %v4015
    %v4416 = vunpack.c.l.b16 %v4016
    %v4417 = vunpack.c.h.b16 %v4016
    %v4418 = vunpack.c.l.b16 %v4017
    %v4419 = vunpack.c.h.b16 %v4017
    %v4420 = vunpack.c.l.b16 %v4018
    %v4421 = vunpack.c.h.b16 %v4018
    %v4422 = vunpack.c.l.b16 %v4019
    %v4423 = vunpack.c.h.b16 %v4019
    %v4424 = vunpack.c.l.b16 %v4020
    %v4425 = vunpack.c.h.b16 %v4020
    %v4426 = vunpack.c.l.b16 %v4021
    %v4427 = vunpack.c.h.b16 %v4021
    %v4428 = vunpack.c.l.b16 %v4022
    %v4429 = vunpack.c.h.b16 %v4022
    %v4430 = vunpack.c.l.b16 %v4023
    %v4431 = vunpack.c.h.b16 %v4023
    %v4432 = vunpack.c.l.b16 %v4024
    %v4433 = vunpack.c.h.b16 %v4024
    %v4434 = vunpack.c.l.b16 %v4025
    %v4435 = vunpack.c.h.b16 %v4025
    %v4436 = vunpack.c.l.b16 %v4026
    %v4437 = vunpack.c.h.b16 %v4026
    %v4438 = vunpack.c.l.b16 %v4027
    %v4439 = vunpack.c.h.b16 %v4027
    %v4440 = vunpack.c.l.b16 %v4028
    %v4441 = vunpack.c.h.b16 %v4028
    %v4442 = vunpack.c.l.b16 %v4029
    %v4443 = vunpack.c.h.b16 %v4029
    %v4444 = vunpack.c.l.b16 %v4030
    %v4445 = vunpack.c.h.b16 %v4030
    %v4446 = vunpack.c.l.b16 %v4031
    %v4447 = vunpack.c.h.b16 %v4031
    %v4448 = vunpack.c.l.b16 %v4032
    %v4449 = vunpack.c.h.b16 %v4032
    %v4450 = vunpack.c.l.b16 %v4033
    %v4451 = vunpack.c.h.b16 %v4033
    %v4452 = vunpack.c.l.b16 %v4034
    %v4453 = vunpack.c.h.b16 %v4034
    %v4454 = vunpack.c.l.b16 %v4035
    %v4455 = vunpack.c.h.b16 %v4035
    %v4456 = vunpack.c.l.b16 %v4036
    %v4457 = vunpack.c.h.b16 %v4036
    %v4458 = vunpack.c.l.b16 %v4037
    %v4459 = vunpack.c.h.b16 %v4037
    %v4460 = vunpack.c.l.b16 %v4038
    %v4461 = vunpack.c.h.b16 %v4038
    %v4462 = vunpack.c.l.b16 %v4039
    %v4463 = vunpack.c.h.b16 %v4039
    %v4464 = vunpack.c.l.b16 %v4040
    %v4465 = vunpack.c.h.b16 %v4040
    %v4466 = vunpack.c.l.b16 %v4041
    %v4467 = vunpack.c.h.b16 %v4041
    %v4468 = vunpack.c.l.b16 %v4042
    %v4469 = vunpack.c.h.b16 %v4042
    %v4470 = vunpack.c.l.b16 %v4043
    %v4471 = vunpack.c.h.b16 %v4043
    %v4472 = vunpack.c.l.b16 %v4044
    %v4473 = vunpack.c.h.b16 %v4044
    %v4474 = vunpack.c.l.b16 %v4045
    %v4475 = vunpack.c.h.b16 %v4045
    %v4476 = vunpack.c.l.b16 %v4046
    %v4477 = vunpack.c.h.b16 %v4046
    %v4478 = vunpack.c.l.b16 %v4047
    %v4479 = vunpack.c.h.b16 %v4047
    %v4480 = vunpack.c.l.b16 %v4048
    %v4481 = vunpack.c.h.b16 %v4048
    %v4482 = vunpack.c.l.b16 %v4049
    %v4483 = vunpack.c.h.b16 %v4049
    %v4484 = vunpack.c.l.b16 %v4050
    %v4485 = vunpack.c.h.b16 %v4050
    %v4486 = vunpack.c.l.b16 %v4051
    %v4487 = vunpack.c.h.b16 %v4051
    %v4488 = vunpack.c.l.b16 %v4052
    %v4489 = vunpack.c.h.b16 %v4052
    %v4490 = vunpack.c.l.b16 %v4053
    %v4491 = vunpack.c.h.b16 %v4053
    %v4492 = vunpack.c.l.b16 %v4054
    %v4493 = vunpack.c.h.b16 %v4054
    %v4494 = vunpack.c.l.b16 %v4055
    %v4495 = vunpack.c.h.b16 %v4055
    %v4496 = vunpack.c.l.b16 %v4056
    %v4497 = vunpack.c.h.b16 %v4056
    %v4498 = vunpack.c.l.b16 %v4057
    %v4499 = vunpack.c.h.b16 %v4057
    %v4500 = vunpack.c.l.b16 %v4058
    %v4501 = vunpack.c.h.b16 %v4058
    %v4502 = vunpack.c.l.b16 %v4059
    %v4503 = vunpack.c.h.b16 %v4059
    %v4504 = vunpack.c.l.b16 %v4060
    %v4505 = vunpack.c.h.b16 %v4060
    %v4506 = vunpack.c.l.b16 %v4061
    %v4507 = vunpack.c.h.b16 %v4061
    %v4508 = vunpack.c.l.b16 %v4062
    %v4509 = vunpack.c.h.b16 %v4062
    %v4510 = vunpack.c.l.b16 %v4063
    %v4511 = vunpack.c.h.b16 %v4063
    %v4512 = vunpack.c.l.b16 %v4064
    %v4513 = vunpack.c.h.b16 %v4064
    %v4514 = vunpack.c.l.b16 %v4065
    %v4515 = vunpack.c.h.b16 %v4065
    %v4516 = vunpack.c.l.b16 %v4066
    %v4517 = vunpack.c.h.b16 %v4066
    %v4518 = vunpack.c.l.b16 %v4067
    %v4519 = vunpack.c.h.b16 %v4067
    %v4520 = vunpack.c.l.b16 %v4068
    %v4521 = vunpack.c.h.b16 %v4068
    %v4522 = vunpack.c.l.b16 %v4069
    %v4523 = vunpack.c.h.b16 %v4069
    %v4524 = vunpack.c.l.b16 %v4070
    %v4525 = vunpack.c.h.b16 %v4070
    %v4526 = vunpack.c.l.b16 %v4071
    %v4527 = vunpack.c.h.b16 %v4071
    %v4528 = vunpack.c.l.b16 %v4072
    %v4529 = vunpack.c.h.b16 %v4072
    %v4530 = vunpack.c.l.b16 %v4073
    %v4531 = vunpack.c.h.b16 %v4073
    %v4532 = vunpack.c.l.b16 %v4074
    %v4533 = vunpack.c.h.b16 %v4074
    %v4534 = vunpack.c.l.b16 %v4075
    %v4535 = vunpack.c.h.b16 %v4075
    %v4536 = vunpack.c.l.b16 %v4076
    %v4537 = vunpack.c.h.b16 %v4076
    %v4538 = vunpack.c.l.b16 %v4077
    %v4539 = vunpack.c.h.b16 %v4077
    %v4540 = vunpack.c.l.b16 %v4078
    %v4541 = vunpack.c.h.b16 %v4078
    %v4542 = vunpack.c.l.b16 %v4079
    %v4543 = vunpack.c.h.b16 %v4079
    %v4544 = vunpack.c.l.b16 %v4080
    %v4545 = vunpack.c.h.b16 %v4080
    %v4546 = vunpack.c.l.b16 %v4081
    %v4547 = vunpack.c.h.b16 %v4081
    %v4548 = vunpack.c.l.b16 %v4082
    %v4549 = vunpack.c.h.b16 %v4082
    %v4550 = vunpack.c.l.b16 %v4083
    %v4551 = vunpack.c.h.b16 %v4083
    %v4552 = vunpack.c.l.b16 %v4084
    %v4553 = vunpack.c.h.b16 %v4084
    %v4554 = vunpack.c.l.b16 %v4085
    %v4555 = vunpack.c.h.b16 %v4085
    %v4556 = vunpack.c.l.b16 %v4086
    %v4557 = vunpack.c.h.b16 %v4086
    %v4558 = vunpack.c.l.b16 %v4087
    %v4559 = vunpack.c.h.b16 %v4087
    %v4560 = vunpack.c.l.b16 %v4088
    %v4561 = vunpack.c.h.b16 %v4088
    %v4562 = vunpack.c.l.b16 %v4089
    %v4563 = vunpack.c.h.b16 %v4089
    %v4564 = vunpack.c.l.b16 %v4090
    %v4565 = vunpack.c.h.b16 %v4090
    %v4566 = vunpack.c.l.b16 %v4091
    %v4567 = vunpack.c.h.b16 %v4091
    %v4568 = vunpack.c.l.b16 %v4092
    %v4569 = vunpack.c.h.b16 %v4092
    %v4570 = vunpack.c.l.b16 %v4093
    %v4571 = vunpack.c.h.b16 %v4093
    %v4572 = vunpack.c.l.b16 %v4094
    %v4573 = vunpack.c.h.b16 %v4094
    %v4574 = vunpack.c.l.b16 %v4095
    %v4575 = vunpack.c.h.b16 %v4095
    %v4576 = vunpack.c.l.b16 %v4096
    %v4577 = vunpack.c.h.b16 %v4096
    %v4578 = vunpack.c.l.b16 %v4097
    %v4579 = vunpack.c.h.b16 %v4097
    %v4580 = vunpack.c.l.b16 %v4098
    %v4581 = vunpack.c.h.b16 %v4098
    %v4582 = vunpack.c.l.b16 %v4099
    %v4583 = vunpack.c.h.b16 %v4099
    %v4584 = vunpack.c.l.b16 %v4100
    %v4585 = vunpack.c.h.b16 %v4100
    %v4586 = vunpack.c.l.b16 %v4101
    %v4587 = vunpack.c.h.b16 %v4101
    %v4588 = vunpack.c.l.b16 %v4102
    %v4589 = vunpack.c.h.b16 %v4102
    %v4590 = vunpack.c.l.b16 %v4103
    %v4591 = vunpack.c.h.b16 %v4103
    %v4592 = vunpack.c.l.b16 %v4104
    %v4593 = vunpack.c.h.b16 %v4104
    %v4594 = vunpack.c.l.b16 %v4105
    %v4595 = vunpack.c.h.b16 %v4105
    %v4596 = vunpack.c.l.b16 %v4106
    %v4597 = vunpack.c.h.b16 %v4106
    %v4598 = vunpack.c.l.b16 %v4107
    %v4599 = vunpack.c.h.b16 %v4107
    %v4600 = vunpack.c.l.b16 %v4108
    %v4601 = vunpack.c.h.b16 %v4108
    %v4602 = vunpack.c.l.b16 %v4109
    %v4603 = vunpack.c.h.b16 %v4109
    %v4604 = vunpack.c.l.b16 %v4110
    %v4605 = vunpack.c.h.b16 %v4110
    %v4606 = vunpack.c.l.b16 %v4111
    %v4607 = vunpack.c.h.b16 %v4111
    %v4608 = vunpack.c.l.b16 %v4112
    %v4609 = vunpack.c.h.b16 %v4112
    %v4610 = vunpack.c.l.b16 %v4113
    %v4611 = vunpack.c.h.b16 %v4113
    %v4612 = vunpack.c.l.b16 %v4114
    %v4613 = vunpack.c.h.b16 %v4114
    %v4614 = vunpack.c.l.b16 %v4115
    %v4615 = vunpack.c.h.b16 %v4115
    %v4616 = vunpack.c.l.b16 %v4116
    %v4617 = vunpack.c.h.b16 %v4116
    %v4618 = vunpack.c.l.b16 %v4117
    %v4619 = vunpack.c.h.b16 %v4117
    %v4620 = vunpack.c.l.b16 %v4118
    %v4621 = vunpack.c.h.b16 %v4118
    %v4622 = vunpack.c.l.b16 %v4119
    %v4623 = vunpack.c.h.b16 %v4119
    %v4624 = vunpack.c.l.b16 %v4120
    %v4625 = vunpack.c.h.b16 %v4120
    %v4626 = vunpack.c.l.b16 %v4121
    %v4627 = vunpack.c.h.b16 %v4121
    %v4628 = vunpack.c.l.b16 %v4122
    %v4629 = vunpack.c.h.b16 %v4122
    %v4630 = vunpack.c.l.b16 %v4123
    %v4631 = vunpack.c.h.b16 %v4123
    %v4632 = vunpack.c.l.b16 %v4124
    %v4633 = vunpack.c.h.b16 %v4124
    %v4634 = vunpack.c.l.b16 %v4125
    %v4635 = vunpack.c.h.b16 %v4125
    %v4636 = vunpack.c.l.b16 %v4126
    %v4637 = vunpack.c.h.b16 %v4126
    %v4638 = vunpack.c.l.b16 %v4127
    %v4639 = vunpack.c.h.b16 %v4127
    %v4640 = vunpack.c.l.b16 %v4128
    %v4641 = vunpack.c.h.b16 %v4128
    %v4642 = vunpack.c.l.b16 %v4129
    %v4643 = vunpack.c.h.b16 %v4129
    %v4644 = vunpack.c.l.b16 %v4130
    %v4645 = vunpack.c.h.b16 %v4130
    %v4646 = vunpack.c.l.b16 %v4131
    %v4647 = vunpack.c.h.b16 %v4131
    %v4648 = vunpack.c.l.b16 %v4132
    %v4649 = vunpack.c.h.b16 %v4132
    %v4650 = vunpack.c.l.b16 %v4133
    %v4651 = vunpack.c.h.b16 %v4133
    %v4652 = vunpack.c.l.b16 %v4134
    %v4653 = vunpack.c.h.b16 %v4134
    %v4654 = vunpack.c.l.b16 %v4135
    %v4655 = vunpack.c.h.b16 %v4135
    %v4656 = vunpack.c.l.b16 %v4136
    %v4657 = vunpack.c.h.b16 %v4136
    %v4658 = vunpack.c.l.b16 %v4137
    %v4659 = vunpack.c.h.b16 %v4137
    %v4660 = vunpack.c.l.b16 %v4138
    %v4661 = vunpack.c.h.b16 %v4138
    %v4662 = vunpack.c.l.b16 %v4139
    %v4663 = vunpack.c.h.b16 %v4139
    %v4664 = vunpack.c.l.b16 %v4140
    %v4665 = vunpack.c.h.b16 %v4140
    %v4666 = vunpack.c.l.b16 %v4141
    %v4667 = vunpack.c.h.b16 %v4141
    %v4668 = vunpack.c.l.b16 %v4142
    %v4669 = vunpack.c.h.b16 %v4142
    %v4670 = vunpack.c.l.b16 %v4143
    %v4671 = vunpack.c.h.b16 %v4143
    %v4672 = vunpack.c.l.b16 %v4144
    %v4673 = vunpack.c.h.b16 %v4144
    %v4674 = vunpack.c.l.b16 %v4145
    %v4675 = vunpack.c.h.b16 %v4145
    %v4676 = vunpack.c.l.b16 %v4146
    %v4677 = vunpack.c.h.b16 %v4146
    %v4678 = vunpack.c.l.b16 %v4147
    %v4679 = vunpack.c.h.b16 %v4147
    %v4680 = vunpack.c.l.b16 %v4148
    %v4681 = vunpack.c.h.b16 %v4148
    %v4682 = vunpack.c.l.b16 %v4149
    %v4683 = vunpack.c.h.b16 %v4149
    %v4684 = vunpack.c.l.b16 %v4150
    %v4685 = vunpack.c.h.b16 %v4150
    %v4686 = vunpack.c.l.b16 %v4151
    %v4687 = vunpack.c.h.b16 %v4151
    %v4688 = vunpack.c.l.b16 %v4152
    %v4689 = vunpack.c.h.b16 %v4152
    %v4690 = vunpack.c.l.b16 %v4153
    %v4691 = vunpack.c.h.b16 %v4153
    %v4692 = vunpack.c.l.b16 %v4154
    %v4693 = vunpack.c.h.b16 %v4154
    %v4694 = vunpack.c.l.b16 %v4155
    %v4695 = vunpack.c.h.b16 %v4155
    %v4696 = vunpack.c.l.b16 %v4156
    %v4697 = vunpack.c.h.b16 %v4156
    %v4698 = vunpack.c.l.b16 %v4157
    %v4699 = vunpack.c.h.b16 %v4157
    %v4700 = vunpack.c.l.b16 %v4158
    %v4701 = vunpack.c.h.b16 %v4158
    %v4702 = vunpack.c.l.b16 %v4159
    %v4703 = vunpack.c.h.b16 %v4159
    %v4704 = vunpack.c.l.b16 %v4160
    %v4705 = vunpack.c.h.b16 %v4160
    %v4706 = vunpack.c.l.b16 %v4161
    %v4707 = vunpack.c.h.b16 %v4161
    %v4708 = vunpack.c.l.b16 %v4162
    %v4709 = vunpack.c.h.b16 %v4162
    %v4710 = vunpack.c.l.b16 %v4163
    %v4711 = vunpack.c.h.b16 %v4163
    %v4712 = vunpack.c.l.b16 %v4164
    %v4713 = vunpack.c.h.b16 %v4164
    %v4714 = vunpack.c.l.b16 %v4165
    %v4715 = vunpack.c.h.b16 %v4165
    %v4716 = vunpack.c.l.b16 %v4166
    %v4717 = vunpack.c.h.b16 %v4166
    %v4718 = vunpack.c.l.b16 %v4167
    %v4719 = vunpack.c.h.b16 %v4167
    %v4720 = vunpack.c.l.b16 %v4168
    %v4721 = vunpack.c.h.b16 %v4168
    %v4722 = vunpack.c.l.b16 %v4169
    %v4723 = vunpack.c.h.b16 %v4169
    %v4724 = vunpack.c.l.b16 %v4170
    %v4725 = vunpack.c.h.b16 %v4170
    %v4726 = vunpack.c.l.b16 %v4171
    %v4727 = vunpack.c.h.b16 %v4171
    %v4728 = vunpack.c.l.b16 %v4172
    %v4729 = vunpack.c.h.b16 %v4172
    %v4730 = vunpack.c.l.b16 %v4173
    %v4731 = vunpack.c.h.b16 %v4173
    %v4732 = vunpack.c.l.b16 %v4174
    %v4733 = vunpack.c.h.b16 %v4174
    %v4734 = vunpack.c.l.b16 %v4175
    %v4735 = vunpack.c.h.b16 %v4175
    %v4736 = vunpack.c.l.b16 %v4176
    %v4737 = vunpack.c.h.b16 %v4176
    %v4738 = vunpack.c.l.b16 %v4177
    %v4739 = vunpack.c.h.b16 %v4177
    %v4740 = vunpack.c.l.b16 %v4178
    %v4741 = vunpack.c.h.b16 %v4178
    %v4742 = vunpack.c.l.b16 %v4179
    %v4743 = vunpack.c.h.b16 %v4179
    %v4744 = vunpack.c.l.b16 %v4180
    %v4745 = vunpack.c.h.b16 %v4180
    %v4746 = vunpack.c.l.b16 %v4181
    %v4747 = vunpack.c.h.b16 %v4181
    %v4748 = vunpack.c.l.b16 %v4182
    %v4749 = vunpack.c.h.b16 %v4182
    %v4750 = vunpack.c.l.b16 %v4183
    %v4751 = vunpack.c.h.b16 %v4183
    %v4752 = vunpack.c.l.b16 %v4184
    %v4753 = vunpack.c.h.b16 %v4184
    %v4754 = vunpack.c.l.b16 %v4185
    %v4755 = vunpack.c.h.b16 %v4185
    %v4756 = vunpack.c.l.b16 %v4186
    %v4757 = vunpack.c.h.b16 %v4186
    %v4758 = vunpack.c.l.b16 %v4187
    %v4759 = vunpack.c.h.b16 %v4187
    %v4760 = vunpack.c.l.b16 %v4188
    %v4761 = vunpack.c.h.b16 %v4188
    %v4762 = vunpack.c.l.b16 %v4189
    %v4763 = vunpack.c.h.b16 %v4189
    %v4764 = vunpack.c.l.b16 %v4190
    %v4765 = vunpack.c.h.b16 %v4190
    %v4766 = vunpack.c.l.b16 %v4191
    %v4767 = vunpack.c.h.b16 %v4191
    %v4768 = vunpack.c.l.b16 %v4192
    %v4769 = vunpack.c.h.b16 %v4192
    %v4770 = vunpack.c.l.b16 %v4193
    %v4771 = vunpack.c.h.b16 %v4193
    %v4772 = vunpack.c.l.b16 %v4194
    %v4773 = vunpack.c.h.b16 %v4194
    %v4774 = vunpack.c.l.b16 %v4195
    %v4775 = vunpack.c.h.b16 %v4195
    %v4776 = vunpack.c.l.b16 %v4196
    %v4777 = vunpack.c.h.b16 %v4196
    %v4778 = vunpack.c.l.b16 %v4197
    %v4779 = vunpack.c.h.b16 %v4197
    %v4780 = vunpack.c.l.b16 %v4198
    %v4781 = vunpack.c.h.b16 %v4198
    %v4782 = vunpack.c.l.b16 %v4199
    %v4783 = vunpack.c.h.b16 %v4199
    %v4784 = vunpack.c.l.b16 %v4200
    %v4785 = vunpack.c.h.b16 %v4200
    %v4786 = vunpack.c.l.b16 %v4201
    %v4787 = vunpack.c.h.b16 %v4201
    %v4788 = vunpack.c.l.b16 %v4202
    %v4789 = vunpack.c.h.b16 %v4202
    %v4790 = vunpack.c.l.b16 %v4203
    %v4791 = vunpack.c.h.b16 %v4203
    %v4792 = vunpack.c.l.b16 %v4204
    %v4793 = vunpack.c.h.b16 %v4204
    %v4794 = vunpack.c.l.b16 %v4205
    %v4795 = vunpack.c.h.b16 %v4205
    %v4796 = vpack.c.b16 %v4418, %v4412
    %v4797 = vpack.c.b16 %v4419, %v4413
    %v4798 = vpack.c.b16 %v4420, %v4414
    %v4799 = vpack.c.b16 %v4421, %v4415
    %v4800 = vpack.c.b16 %v4422, %v4416
    %v4801 = vpack.c.b16 %v4423, %v4417
    %v4802 = vpack.c.b16 %v4430, %v4424
    %v4803 = vpack.c.b16 %v4431, %v4425
    %v4804 = vpack.c.b16 %v4432, %v4426
    %v4805 = vpack.c.b16 %v4433, %v4427
    %v4806 = vpack.c.b16 %v4434, %v4428
    %v4807 = vpack.c.b16 %v4435, %v4429
    %v4808 = vpack.c.b16 %v4442, %v4436
    %v4809 = vpack.c.b16 %v4443, %v4437
    %v4810 = vpack.c.b16 %v4444, %v4438
    %v4811 = vpack.c.b16 %v4445, %v4439
    %v4812 = vpack.c.b16 %v4446, %v4440
    %v4813 = vpack.c.b16 %v4447, %v4441
    %v4814 = vpack.c.b16 %v4454, %v4448
    %v4815 = vpack.c.b16 %v4455, %v4449
    %v4816 = vpack.c.b16 %v4456, %v4450
    %v4817 = vpack.c.b16 %v4457, %v4451
    %v4818 = vpack.c.b16 %v4458, %v4452
    %v4819 = vpack.c.b16 %v4459, %v4453
    %v4820 = vpack.c.b16 %v4466, %v4460
    %v4821 = vpack.c.b16 %v4467, %v4461
    %v4822 = vpack.c.b16 %v4468, %v4462
    %v4823 = vpack.c.b16 %v4469, %v4463
    %v4824 = vpack.c.b16 %v4470, %v4464
    %v4825 = vpack.c.b16 %v4471, %v4465
    %v4826 = vpack.c.b16 %v4478, %v4472
    %v4827 = vpack.c.b16 %v4479, %v4473
    %v4828 = vpack.c.b16 %v4480, %v4474
    %v4829 = vpack.c.b16 %v4481, %v4475
    %v4830 = vpack.c.b16 %v4482, %v4476
    %v4831 = vpack.c.b16 %v4483, %v4477
    %v4832 = vpack.c.b16 %v4490, %v4484
    %v4833 = vpack.c.b16 %v4491, %v4485
    %v4834 = vpack.c.b16 %v4492, %v4486
    %v4835 = vpack.c.b16 %v4493, %v4487
    %v4836 = vpack.c.b16 %v4494, %v4488
    %v4837 = vpack.c.b16 %v4495, %v4489
    %v4838 = vpack.c.b16 %v4502, %v4496
    %v4839 = vpack.c.b16 %v4503, %v4497
    %v4840 = vpack.c.b16 %v4504, %v4498
    %v4841 = vpack.c.b16 %v4505, %v4499
    %v4842 = vpack.c.b16 %v4506, %v4500
    %v4843 = vpack.c.b16 %v4507, %v4501
    %v4844 = vpack.c.b16 %v4514, %v4508
    %v4845 = vpack.c.b16 %v4515, %v4509
    %v4846 = vpack.c.b16 %v4516, %v4510
    %v4847 = vpack.c.b16 %v4517, %v4511
    %v4848 = vpack.c.b16 %v4518, %v4512
    %v4849 = vpack.c.b16 %v4519, %v4513
    %v4850 = vpack.c.b16 %v4526, %v4520
    %v4851 = vpack.c.b16 %v4527, %v4521
    %v4852 = vpack.c.b16 %v4528, %v4522
    %v4853 = vpack.c.b16 %v4529, %v4523
    %v4854 = vpack.c.b16 %v4530, %v4524
    %v4855 = vpack.c.b16 %v4531, %v4525
    %v4856 = vpack.c.b16 %v4538, %v4532
    %v4857 = vpack.c.b16 %v4539, %v4533
    %v4858 = vpack.c.b16 %v4540, %v4534
    %v4859 = vpack.c.b16 %v4541, %v4535
    %v4860 = vpack.c.b16 %v4542, %v4536
    %v4861 = vpack.c.b16 %v4543, %v4537
    %v4862 = vpack.c.b16 %v4550, %v4544
    %v4863 = vpack.c.b16 %v4551, %v4545
    %v4864 = vpack.c.b16 %v4552, %v4546
    %v4865 = vpack.c.b16 %v4553, %v4547
    %v4866 = vpack.c.b16 %v4554, %v4548
    %v4867 = vpack.c.b16 %v4555, %v4549
    %v4868 = vpack.c.b16 %v4562, %v4556
    %v4869 = vpack.c.b16 %v4563, %v4557
    %v4870 = vpack.c.b16 %v4564, %v4558
    %v4871 = vpack.c.b16 %v4565, %v4559
    %v4872 = vpack.c.b16 %v4566, %v4560
    %v4873 = vpack.c.b16 %v4567, %v4561
    %v4874 = vpack.c.b16 %v4574, %v4568
    %v4875 = vpack.c.b16 %v4575, %v4569
    %v4876 = vpack.c.b16 %v4576, %v4570
    %v4877 = vpack.c.b16 %v4577, %v4571
    %v4878 = vpack.c.b16 %v4578, %v4572
    %v4879 = vpack.c.b16 %v4579, %v4573
    %v4880 = vpack.c.b16 %v4586, %v4580
    %v4881 = vpack.c.b16 %v4587, %v4581
    %v4882 = vpack.c.b16 %v4588, %v4582
    %v4883 = vpack.c.b16 %v4589, %v4583
    %v4884 = vpack.c.b16 %v4590, %v4584
    %v4885 = vpack.c.b16 %v4591, %v4585
    %v4886 = vpack.c.b16 %v4598, %v4592
    %v4887 = vpack.c.b16 %v4599, %v4593
    %v4888 = vpack.c.b16 %v4600, %v4594
    %v4889 = vpack.c.b16 %v4601, %v4595
    %v4890 = vpack.c.b16 %v4602, %v4596
    %v4891 = vpack.c.b16 %v4603, %v4597
    %v4892 = vpack.c.b16 %v4610, %v4604
    %v4893 = vpack.c.b16 %v4611, %v4605
    %v4894 = vpack.c.b16 %v4612, %v4606
    %v4895 = vpack.c.b16 %v4613, %v4607
    %v4896 = vpack.c.b16 %v4614, %v4608
    %v4897 = vpack.c.b16 %v4615, %v4609
    %v4898 = vpack.c.b16 %v4622, %v4616
    %v4899 = vpack.c.b16 %v4623, %v4617
    %v4900 = vpack.c.b16 %v4624, %v4618
    %v4901 = vpack.c.b16 %v4625, %v4619
    %v4902 = vpack.c.b16 %v4626, %v4620
    %v4903 = vpack.c.b16 %v4627, %v4621
    %v4904 = vpack.c.b16 %v4634, %v4628
    %v4905 = vpack.c.b16 %v4635, %v4629
    %v4906 = vpack.c.b16 %v4636, %v4630
    %v4907 = vpack.c.b16 %v4637, %v4631
    %v4908 = vpack.c.b16 %v4638, %v4632
    %v4909 = vpack.c.b16 %v4639, %v4633
    %v4910 = vpack.c.b16 %v4646, %v4640
    %v4911 = vpack.c.b16 %v4647, %v4641
    %v4912 = vpack.c.b16 %v4648, %v4642
    %v4913 = vpack.c.b16 %v4649, %v4643
    %v4914 = vpack.c.b16 %v4650, %v4644
    %v4915 = vpack.c.b16 %v4651, %v4645
    %v4916 = vpack.c.b16 %v4658, %v4652
    %v4917 = vpack.c.b16 %v4659, %v4653
    %v4918 = vpack.c.b16 %v4660, %v4654
    %v4919 = vpack.c.b16 %v4661, %v4655
    %v4920 = vpack.c.b16 %v4662, %v4656
    %v4921 = vpack.c.b16 %v4663, %v4657
    %v4922 = vpack.c.b16 %v4670, %v4664
    %v4923 = vpack.c.b16 %v4671, %v4665
    %v4924 = vpack.c.b16 %v4672, %v4666
    %v4925 = vpack.c.b16 %v4673, %v4667
    %v4926 = vpack.c.b16 %v4674, %v4668
    %v4927 = vpack.c.b16 %v4675, %v4669
    %v4928 = vpack.c.b16 %v4682, %v4676
    %v4929 = vpack.c.b16 %v4683, %v4677
    %v4930 = vpack.c.b16 %v4684, %v4678
    %v4931 = vpack.c.b16 %v4685, %v4679
    %v4932 = vpack.c.b16 %v4686, %v4680
    %v4933 = vpack.c.b16 %v4687, %v4681
    %v4934 = vpack.c.b16 %v4694, %v4688
    %v4935 = vpack.c.b16 %v4695, %v4689
    %v4936 = vpack.c.b16 %v4696, %v4690
    %v4937 = vpack.c.b16 %v4697, %v4691
    %v4938 = vpack.c.b16 %v4698, %v4692
    %v4939 = vpack.c.b16 %v4699, %v4693
    %v4940 = vpack.c.b16 %v4706, %v4700
    %v4941 = vpack.c.b16 %v4707, %v4701
    %v4942 = vpack.c.b16 %v4708, %v4702
    %v4943 = vpack.c.b16 %v4709, %v4703
    %v4944 = vpack.c.b16 %v4710, %v4704
    %v4945 = vpack.c.b16 %v4711, %v4705
    %v4946 = vpack.c.b16 %v4718, %v4712
    %v4947 = vpack.c.b16 %v4719, %v4713
    %v4948 = vpack.c.b16 %v4720, %v4714
    %v4949 = vpack.c.b16 %v4721, %v4715
    %v4950 = vpack.c.b16 %v4722, %v4716
    %v4951 = vpack.c.b16 %v4723, %v4717
    %v4952 = vpack.c.b16 %v4730, %v4724
    %v4953 = vpack.c.b16 %v4731, %v4725
    %v4954 = vpack.c.b16 %v4732, %v4726
    %v4955 = vpack.c.b16 %v4733, %v4727
    %v4956 = vpack.c.b16 %v4734, %v4728
    %v4957 = vpack.c.b16 %v4735, %v4729
    %v4958 = vpack.c.b16 %v4742, %v4736
    %v4959 = vpack.c.b16 %v4743, %v4737
    %v4960 = vpack.c.b16 %v4744, %v4738
    %v4961 = vpack.c.b16 %v4745, %v4739
    %v4962 = vpack.c.b16 %v4746, %v4740
    %v4963 = vpack.c.b16 %v4747, %v4741
    %v4964 = vpack.c.b16 %v4754, %v4748
    %v4965 = vpack.c.b16 %v4755, %v4749
    %v4966 = vpack.c.b16 %v4756, %v4750
    %v4967 = vpack.c.b16 %v4757, %v4751
    %v4968 = vpack.c.b16 %v4758, %v4752
    %v4969 = vpack.c.b16 %v4759, %v4753
    %v4970 = vpack.c.b16 %v4766, %v4760
    %v4971 = vpack.c.b16 %v4767, %v4761
    %v4972 = vpack.c.b16 %v4768, %v4762
    %v4973 = vpack.c.b16 %v4769, %v4763
    %v4974 = vpack.c.b16 %v4770, %v4764
    %v4975 = vpack.c.b16 %v4771, %v4765
    %v4976 = vpack.c.b16 %v4778, %v4772
    %v4977 = vpack.c.b16 %v4779, %v4773
    %v4978 = vpack.c.b16 %v4780, %v4774
    %v4979 = vpack.c.b16 %v4781, %v4775
    %v4980 = vpack.c.b16 %v4782, %v4776
    %v4981 = vpack.c.b16 %v4783, %v4777
    %v4982 = vpack.c.b16 %v4790, %v4784
    %v4983 = vpack.c.b16 %v4791, %v4785
    %v4984 = vpack.c.b16 %v4792, %v4786
    %v4985 = vpack.c.b16 %v4793, %v4787
    %v4986 = vpack.c.b16 %v4794, %v4788
    %v4987 = vpack.c.b16 %v4795, %v4789
    %5180 = vmatpush.bf16.msra.mxu0 %v4838
    %5181 = vmatpush.bf16.msra.mxu0 %v4832
    %5182 = vmatpush.bf16.msra.mxu0 %v4826
    %5183 = vmatpush.bf16.msra.mxu0 %v4820
    %5184 = vmatpush.bf16.msra.mxu0 %v4814
    %5185 = vmatpush.bf16.msra.mxu0 %v4808
    %5186 = vmatpush.bf16.msra.mxu0 %v4802
    %5187 = vmatpush.bf16.msra.mxu0 %v4796
    %5188 = vmatmul.bf16.gmra.mxu0 %v4010
    %v5189 = vpop.f32.mrf.mxu0
    %v5190 = vadd.f32 %v4208, %v5189
    %v5191 = vpop.f32.mrf.mxu0
    %5192 = vdwg.mxu0
    %5193 = vmatpush.bf16.msra.mxu0 %v4886
    %5194 = vmatpush.bf16.msra.mxu0 %v4880
    %5195 = vmatpush.bf16.msra.mxu0 %v4874
    %5196 = vmatpush.bf16.msra.mxu0 %v4868
    %5197 = vmatpush.bf16.msra.mxu0 %v4862
    %5198 = vmatpush.bf16.msra.mxu0 %v4856
    %5199 = vmatpush.bf16.msra.mxu0 %v4850
    %5200 = vmatpush.bf16.msra.mxu0 %v4844
    %5201 = vmatmul.bf16.gmra.mxu0 %v4011
    %v5202 = vpop.f32.mrf.mxu0
    %v5203 = vadd.f32 %v5190, %v5202
    %v5204 = vpop.f32.mrf.mxu0
    %5205 = vdwg.mxu0
    %5206 = vmatpush.bf16.msra.mxu0 %v4934
    %5207 = vmatpush.bf16.msra.mxu0 %v4928
    %5208 = vmatpush.bf16.msra.mxu0 %v4922
    %5209 = vmatpush.bf16.msra.mxu0 %v4916
    %5210 = vmatpush.bf16.msra.mxu0 %v4910
    %5211 = vmatpush.bf16.msra.mxu0 %v4904
    %5212 = vmatpush.bf16.msra.mxu0 %v4898
    %5213 = vmatpush.bf16.msra.mxu0 %v4892
    %5214 = vmatmul.bf16.gmra.mxu0 %v4012
    %v5215 = vpop.f32.mrf.mxu0
    %v5216 = vadd.f32 %v5203, %v5215
    %v5217 = vpop.f32.mrf.mxu0
    %5218 = vdwg.mxu0
    %5219 = vmatpush.bf16.msra.mxu0 %v4982
    %5220 = vmatpush.bf16.msra.mxu0 %v4976
    %5221 = vmatpush.bf16.msra.mxu0 %v4970
    %5222 = vmatpush.bf16.msra.mxu0 %v4964
    %5223 = vmatpush.bf16.msra.mxu0 %v4958
    %5224 = vmatpush.bf16.msra.mxu0 %v4952
    %5225 = vmatpush.bf16.msra.mxu0 %v4946
    %5226 = vmatpush.bf16.msra.mxu0 %v4940
    %5227 = vmatmul.bf16.gmra.mxu0 %v4013
    %v5228 = vpop.f32.mrf.mxu0
    %v5229 = vadd.f32 %v5216, %v5228
    %v5230 = vpop.f32.mrf.mxu0
    %5231 = vdwg.mxu0
    %5232 = vmatpush.bf16.msra.mxu0 %v4839
    %5233 = vmatpush.bf16.msra.mxu0 %v4833
    %5234 = vmatpush.bf16.msra.mxu0 %v4827
    %5235 = vmatpush.bf16.msra.mxu0 %v4821
    %5236 = vmatpush.bf16.msra.mxu0 %v4815
    %5237 = vmatpush.bf16.msra.mxu0 %v4809
    %5238 = vmatpush.bf16.msra.mxu0 %v4803
    %5239 = vmatpush.bf16.msra.mxu0 %v4797
    %5240 = vmatmul.bf16.gmra.mxu0 %v4010
    %v5241 = vpop.f32.mrf.mxu0
    %v5242 = vadd.f32 %v4209, %v5241
    %v5243 = vpop.f32.mrf.mxu0
    %5244 = vdwg.mxu0
    %5245 = vmatpush.bf16.msra.mxu0 %v4887
    %5246 = vmatpush.bf16.msra.mxu0 %v4881
    %5247 = vmatpush.bf16.msra.mxu0 %v4875
    %5248 = vmatpush.bf16.msra.mxu0 %v4869
    %5249 = vmatpush.bf16.msra.mxu0 %v4863
    %5250 = vmatpush.bf16.msra.mxu0 %v4857
    %5251 = vmatpush.bf16.msra.mxu0 %v4851
    %5252 = vmatpush.bf16.msra.mxu0 %v4845
    %5253 = vmatmul.bf16.gmra.mxu0 %v4011
    %v5254 = vpop.f32.mrf.mxu0
    %v5255 = vadd.f32 %v5242, %v5254
    %v5256 = vpop.f32.mrf.mxu0
    %5257 = vdwg.mxu0
    %5258 = vmatpush.bf16.msra.mxu0 %v4935
    %5259 = vmatpush.bf16.msra.mxu0 %v4929
    %5260 = vmatpush.bf16.msra.mxu0 %v4923
    %5261 = vmatpush.bf16.msra.mxu0 %v4917
    %5262 = vmatpush.bf16.msra.mxu0 %v4911
    %5263 = vmatpush.bf16.msra.mxu0 %v4905
    %5264 = vmatpush.bf16.msra.mxu0 %v4899
    %5265 = vmatpush.bf16.msra.mxu0 %v4893
    %5266 = vmatmul.bf16.gmra.mxu0 %v4012
    %v5267 = vpop.f32.mrf.mxu0
    %v5268 = vadd.f32 %v5255, %v5267
    %v5269 = vpop.f32.mrf.mxu0
    %5270 = vdwg.mxu0
    %5271 = vmatpush.bf16.msra.mxu0 %v4983
    %5272 = vmatpush.bf16.msra.mxu0 %v4977
    %5273 = vmatpush.bf16.msra.mxu0 %v4971
    %5274 = vmatpush.bf16.msra.mxu0 %v4965
    %5275 = vmatpush.bf16.msra.mxu0 %v4959
    %5276 = vmatpush.bf16.msra.mxu0 %v4953
    %5277 = vmatpush.bf16.msra.mxu0 %v4947
    %5278 = vmatpush.bf16.msra.mxu0 %v4941
    %5279 = vmatmul.bf16.gmra.mxu0 %v4013
    %v5280 = vpop.f32.mrf.mxu0
    %v5281 = vadd.f32 %v5268, %v5280
    %v5282 = vpop.f32.mrf.mxu0
    %5283 = vdwg.mxu0
    %5284 = vmatpush.bf16.msra.mxu0 %v4840
    %5285 = vmatpush.bf16.msra.mxu0 %v4834
    %5286 = vmatpush.bf16.msra.mxu0 %v4828
    %5287 = vmatpush.bf16.msra.mxu0 %v4822
    %5288 = vmatpush.bf16.msra.mxu0 %v4816
    %5289 = vmatpush.bf16.msra.mxu0 %v4810
    %5290 = vmatpush.bf16.msra.mxu0 %v4804
    %5291 = vmatpush.bf16.msra.mxu0 %v4798
    %5292 = vmatmul.bf16.gmra.mxu0 %v4010
    %v5293 = vpop.f32.mrf.mxu0
    %v5294 = vadd.f32 %v4210, %v5293
    %v5295 = vpop.f32.mrf.mxu0
    %5296 = vdwg.mxu0
    %5297 = vmatpush.bf16.msra.mxu0 %v4888
    %5298 = vmatpush.bf16.msra.mxu0 %v4882
    %5299 = vmatpush.bf16.msra.mxu0 %v4876
    %5300 = vmatpush.bf16.msra.mxu0 %v4870
    %5301 = vmatpush.bf16.msra.mxu0 %v4864
    %5302 = vmatpush.bf16.msra.mxu0 %v4858
    %5303 = vmatpush.bf16.msra.mxu0 %v4852
    %5304 = vmatpush.bf16.msra.mxu0 %v4846
    %5305 = vmatmul.bf16.gmra.mxu0 %v4011
    %v5306 = vpop.f32.mrf.mxu0
    %v5307 = vadd.f32 %v5294, %v5306
    %v5308 = vpop.f32.mrf.mxu0
    %5309 = vdwg.mxu0
    %5310 = vmatpush.bf16.msra.mxu0 %v4936
    %5311 = vmatpush.bf16.msra.mxu0 %v4930
    %5312 = vmatpush.bf16.msra.mxu0 %v4924
    %5313 = vmatpush.bf16.msra.mxu0 %v4918
    %5314 = vmatpush.bf16.msra.mxu0 %v4912
    %5315 = vmatpush.bf16.msra.mxu0 %v4906
    %5316 = vmatpush.bf16.msra.mxu0 %v4900
    %5317 = vmatpush.bf16.msra.mxu0 %v4894
    %5318 = vmatmul.bf16.gmra.mxu0 %v4012
    %v5319 = vpop.f32.mrf.mxu0
    %v5320 = vadd.f32 %v5307, %v5319
    %v5321 = vpop.f32.mrf.mxu0
    %5322 = vdwg.mxu0
    %5323 = vmatpush.bf16.msra.mxu0 %v4984
    %5324 = vmatpush.bf16.msra.mxu0 %v4978
    %5325 = vmatpush.bf16.msra.mxu0 %v4972
    %5326 = vmatpush.bf16.msra.mxu0 %v4966
    %5327 = vmatpush.bf16.msra.mxu0 %v4960
    %5328 = vmatpush.bf16.msra.mxu0 %v4954
    %5329 = vmatpush.bf16.msra.mxu0 %v4948
    %5330 = vmatpush.bf16.msra.mxu0 %v4942
    %5331 = vmatmul.bf16.gmra.mxu0 %v4013
    %v5332 = vpop.f32.mrf.mxu0
    %v5333 = vadd.f32 %v5320, %v5332
    %v5334 = vpop.f32.mrf.mxu0
    %5335 = vdwg.mxu0
    %5336 = vmatpush.bf16.msra.mxu0 %v4841
    %5337 = vmatpush.bf16.msra.mxu0 %v4835
    %5338 = vmatpush.bf16.msra.mxu0 %v4829
    %5339 = vmatpush.bf16.msra.mxu0 %v4823
    %5340 = vmatpush.bf16.msra.mxu0 %v4817
    %5341 = vmatpush.bf16.msra.mxu0 %v4811
    %5342 = vmatpush.bf16.msra.mxu0 %v4805
    %5343 = vmatpush.bf16.msra.mxu0 %v4799
    %5344 = vmatmul.bf16.gmra.mxu0 %v4010
    %v5345 = vpop.f32.mrf.mxu0
    %v5346 = vadd.f32 %v4211, %v5345
    %v5347 = vpop.f32.mrf.mxu0
    %5348 = vdwg.mxu0
    %5349 = vmatpush.bf16.msra.mxu0 %v4889
    %5350 = vmatpush.bf16.msra.mxu0 %v4883
    %5351 = vmatpush.bf16.msra.mxu0 %v4877
    %5352 = vmatpush.bf16.msra.mxu0 %v4871
    %5353 = vmatpush.bf16.msra.mxu0 %v4865
    %5354 = vmatpush.bf16.msra.mxu0 %v4859
    %5355 = vmatpush.bf16.msra.mxu0 %v4853
    %5356 = vmatpush.bf16.msra.mxu0 %v4847
    %5357 = vmatmul.bf16.gmra.mxu0 %v4011
    %v5358 = vpop.f32.mrf.mxu0
    %v5359 = vadd.f32 %v5346, %v5358
    %v5360 = vpop.f32.mrf.mxu0
    %5361 = vdwg.mxu0
    %5362 = vmatpush.bf16.msra.mxu0 %v4937
    %5363 = vmatpush.bf16.msra.mxu0 %v4931
    %5364 = vmatpush.bf16.msra.mxu0 %v4925
    %5365 = vmatpush.bf16.msra.mxu0 %v4919
    %5366 = vmatpush.bf16.msra.mxu0 %v4913
    %5367 = vmatpush.bf16.msra.mxu0 %v4907
    %5368 = vmatpush.bf16.msra.mxu0 %v4901
    %5369 = vmatpush.bf16.msra.mxu0 %v4895
    %5370 = vmatmul.bf16.gmra.mxu0 %v4012
    %v5371 = vpop.f32.mrf.mxu0
    %v5372 = vadd.f32 %v5359, %v5371
    %v5373 = vpop.f32.mrf.mxu0
    %5374 = vdwg.mxu0
    %5375 = vmatpush.bf16.msra.mxu0 %v4985
    %5376 = vmatpush.bf16.msra.mxu0 %v4979
    %5377 = vmatpush.bf16.msra.mxu0 %v4973
    %5378 = vmatpush.bf16.msra.mxu0 %v4967
    %5379 = vmatpush.bf16.msra.mxu0 %v4961
    %5380 = vmatpush.bf16.msra.mxu0 %v4955
    %5381 = vmatpush.bf16.msra.mxu0 %v4949
    %5382 = vmatpush.bf16.msra.mxu0 %v4943
    %5383 = vmatmul.bf16.gmra.mxu0 %v4013
    %v5384 = vpop.f32.mrf.mxu0
    %v5385 = vadd.f32 %v5372, %v5384
    %v5386 = vpop.f32.mrf.mxu0
    %5387 = vdwg.mxu0
    %5388 = vmatpush.bf16.msra.mxu0 %v4842
    %5389 = vmatpush.bf16.msra.mxu0 %v4836
    %5390 = vmatpush.bf16.msra.mxu0 %v4830
    %5391 = vmatpush.bf16.msra.mxu0 %v4824
    %5392 = vmatpush.bf16.msra.mxu0 %v4818
    %5393 = vmatpush.bf16.msra.mxu0 %v4812
    %5394 = vmatpush.bf16.msra.mxu0 %v4806
    %5395 = vmatpush.bf16.msra.mxu0 %v4800
    %5396 = vmatmul.bf16.gmra.mxu0 %v4010
    %v5397 = vpop.f32.mrf.mxu0
    %v5398 = vadd.f32 %v4212, %v5397
    %v5399 = vpop.f32.mrf.mxu0
    %5400 = vdwg.mxu0
    %5401 = vmatpush.bf16.msra.mxu0 %v4890
    %5402 = vmatpush.bf16.msra.mxu0 %v4884
    %5403 = vmatpush.bf16.msra.mxu0 %v4878
    %5404 = vmatpush.bf16.msra.mxu0 %v4872
    %5405 = vmatpush.bf16.msra.mxu0 %v4866
    %5406 = vmatpush.bf16.msra.mxu0 %v4860
    %5407 = vmatpush.bf16.msra.mxu0 %v4854
    %5408 = vmatpush.bf16.msra.mxu0 %v4848
    %5409 = vmatmul.bf16.gmra.mxu0 %v4011
    %v5410 = vpop.f32.mrf.mxu0
    %v5411 = vadd.f32 %v5398, %v5410
    %v5412 = vpop.f32.mrf.mxu0
    %5413 = vdwg.mxu0
    %5414 = vmatpush.bf16.msra.mxu0 %v4938
    %5415 = vmatpush.bf16.msra.mxu0 %v4932
    %5416 = vmatpush.bf16.msra.mxu0 %v4926
    %5417 = vmatpush.bf16.msra.mxu0 %v4920
    %5418 = vmatpush.bf16.msra.mxu0 %v4914
    %5419 = vmatpush.bf16.msra.mxu0 %v4908
    %5420 = vmatpush.bf16.msra.mxu0 %v4902
    %5421 = vmatpush.bf16.msra.mxu0 %v4896
    %5422 = vmatmul.bf16.gmra.mxu0 %v4012
    %v5423 = vpop.f32.mrf.mxu0
    %v5424 = vadd.f32 %v5411, %v5423
    %v5425 = vpop.f32.mrf.mxu0
    %5426 = vdwg.mxu0
    %5427 = vmatpush.bf16.msra.mxu0 %v4986
    %5428 = vmatpush.bf16.msra.mxu0 %v4980
    %5429 = vmatpush.bf16.msra.mxu0 %v4974
    %5430 = vmatpush.bf16.msra.mxu0 %v4968
    %5431 = vmatpush.bf16.msra.mxu0 %v4962
    %5432 = vmatpush.bf16.msra.mxu0 %v4956
    %5433 = vmatpush.bf16.msra.mxu0 %v4950
    %5434 = vmatpush.bf16.msra.mxu0 %v4944
    %5435 = vmatmul.bf16.gmra.mxu0 %v4013
    %v5436 = vpop.f32.mrf.mxu0
    %v5437 = vadd.f32 %v5424, %v5436
    %v5438 = vpop.f32.mrf.mxu0
    %5439 = vdwg.mxu0
    %5440 = vmatpush.bf16.msra.mxu0 %v4843
    %5441 = vmatpush.bf16.msra.mxu0 %v4837
    %5442 = vmatpush.bf16.msra.mxu0 %v4831
    %5443 = vmatpush.bf16.msra.mxu0 %v4825
    %5444 = vmatpush.bf16.msra.mxu0 %v4819
    %5445 = vmatpush.bf16.msra.mxu0 %v4813
    %5446 = vmatpush.bf16.msra.mxu0 %v4807
    %5447 = vmatpush.bf16.msra.mxu0 %v4801
    %5448 = vmatmul.bf16.gmra.mxu0 %v4010
    %v5449 = vpop.f32.mrf.mxu0
    %v5450 = vadd.f32 %v4213, %v5449
    %v5451 = vpop.f32.mrf.mxu0
    %5452 = vdwg.mxu0
    %5453 = vmatpush.bf16.msra.mxu0 %v4891
    %5454 = vmatpush.bf16.msra.mxu0 %v4885
    %5455 = vmatpush.bf16.msra.mxu0 %v4879
    %5456 = vmatpush.bf16.msra.mxu0 %v4873
    %5457 = vmatpush.bf16.msra.mxu0 %v4867
    %5458 = vmatpush.bf16.msra.mxu0 %v4861
    %5459 = vmatpush.bf16.msra.mxu0 %v4855
    %5460 = vmatpush.bf16.msra.mxu0 %v4849
    %5461 = vmatmul.bf16.gmra.mxu0 %v4011
    %v5462 = vpop.f32.mrf.mxu0
    %v5463 = vadd.f32 %v5450, %v5462
    %v5464 = vpop.f32.mrf.mxu0
    %5465 = vdwg.mxu0
    %5466 = vmatpush.bf16.msra.mxu0 %v4939
    %5467 = vmatpush.bf16.msra.mxu0 %v4933
    %5468 = vmatpush.bf16.msra.mxu0 %v4927
    %5469 = vmatpush.bf16.msra.mxu0 %v4921
    %5470 = vmatpush.bf16.msra.mxu0 %v4915
    %5471 = vmatpush.bf16.msra.mxu0 %v4909
    %5472 = vmatpush.bf16.msra.mxu0 %v4903
    %5473 = vmatpush.bf16.msra.mxu0 %v4897
    %5474 = vmatmul.bf16.gmra.mxu0 %v4012
    %v5475 = vpop.f32.mrf.mxu0
    %v5476 = vadd.f32 %v5463, %v5475
    %v5477 = vpop.f32.mrf.mxu0
    %5478 = vdwg.mxu0
    %5479 = vmatpush.bf16.msra.mxu0 %v4987
    %5480 = vmatpush.bf16.msra.mxu0 %v4981
    %5481 = vmatpush.bf16.msra.mxu0 %v4975
    %5482 = vmatpush.bf16.msra.mxu0 %v4969
    %5483 = vmatpush.bf16.msra.mxu0 %v4963
    %5484 = vmatpush.bf16.msra.mxu0 %v4957
    %5485 = vmatpush.bf16.msra.mxu0 %v4951
    %5486 = vmatpush.bf16.msra.mxu0 %v4945
    %5487 = vmatmul.bf16.gmra.mxu0 %v4013
    %v5488 = vpop.f32.mrf.mxu0
    %v5489 = vadd.f32 %v5476, %v5488
    %v5490 = vpop.f32.mrf.mxu0
    %5491 = vdwg.mxu0
    %5492 = vst [vmem:[%s9] sm:$0xff] %v5229
    %5493 = vst [vmem:[%s9 + $0x8] sm:$0xff] %v5281
    %5494 = vst [vmem:[%s9 + $0x10] sm:$0xff] %v5333
    %5495 = vst [vmem:[%s9 + $0x18] sm:$0xff] %v5385
    %5496 = vst [vmem:[%s9 + $0x20] sm:$0xff] %v5437
    %5497 = vst [vmem:[%s9 + $0x28] sm:$0xff] %v5489
  $region45: #{simple_embedding_net.1} parent=0 // pred_fallthru
    _
  // Predicated region
  $region46: #{simple_embedding_net.1} parent=0 // pred_check
    _
  $region47: #{simple_embedding_net.1} parent=0 // pred_check_branch
    %5499 = sbr.rel (0) target = $region49
  $region48: #{simple_embedding_net.1} parent=0 // pred_region
    _
  $region49: #{simple_embedding_net.1} parent=0 // pred_fallthru
    _
  // Predicated region
  $region50: #{simple_embedding_net.1} parent=0 // pred_check
    _
  $region51: #{simple_embedding_net.1} parent=0 // pred_check_branch
    %5501 = sbr.rel (0) target = $region53
  $region52: #{simple_embedding_net.1} parent=0 // pred_region
    _
  $region53: #{simple_embedding_net.1} parent=0 // pred_fallthru
    _

</llo_original>
